<compile_context>
chip_gen: v7x
topology: tpu7x:2x2x1
jax: 0.10.0
libtpu: 0.0.40
codegen_flags: <defaults>
</compile_context>

<pallas_src>
import jax
import jax.numpy as jnp
from jax.experimental import pallas as pl
from jax.experimental.pallas import tpu as pltpu

# ---------------- config (small, forward-compatible shapes) ----------------
BATCH = 2
SEQ = 8
HIDDEN = 32
INTER = 64
INTER_PAD = 128          # intermediate padded to a full 128-lane group (exact)
NUM_HEADS = 2
HEAD_DIM = HIDDEN // NUM_HEADS
NUM_LAYERS = 2
MOE_POSITION = (1,)      # encoder layers whose intermediate.dense is a SharedExpertMOE
NUM_ROUTED_EXPERTS = 2   # speech + image routed experts (one shared "text" expert)
NUM_LABELS = 2
OUT_PAD = 128            # lane-dense logits slab, sliced to NUM_LABELS in the wrapper
LN_EPS = 1e-12
ATTN_SCALE = 1.0 / float(HEAD_DIM) ** 0.5


# ---------------- in-kernel helpers (traced inside the Pallas kernel) ------
def _mm(x, w, b):
    """f32 activations [M,K] @ bf16 weights [K,N] (+ f32 bias [1,N]) -> f32."""
    return jnp.dot(x.astype(jnp.bfloat16), w,
                   preferred_element_type=jnp.float32) + b


def _layer_norm(x, g, b):
    mu = jnp.mean(x, axis=-1, keepdims=True)
    d = x - mu
    var = jnp.mean(d * d, axis=-1, keepdims=True)
    return d * jax.lax.rsqrt(var + LN_EPS) * g + b


def _softmax(x):
    m = jnp.max(x, axis=-1, keepdims=True)
    e = jnp.exp(x - m)
    return e * pl.reciprocal(jnp.sum(e, axis=-1, keepdims=True), approx=True)


def _gelu(x):
    # TODO(synk): BERT uses exact erf-GELU; tanh approximation used for robust
    # Mosaic lowering (GELU(0) == 0, so the INTER zero-padding stays exact).
    c = 0.7978845608028654  # sqrt(2/pi)
    return 0.5 * x * (1.0 + jnp.tanh(c * (x + 0.044715 * x * x * x)))


def _attention(x, wqkv, bqkv, wo, bo):
    """Self-attention with fused QKV projection and a single output matmul."""
    qkv = _mm(x, wqkv, bqkv)                               # [S, 3H] f32
    ctx_heads = []
    for h in range(NUM_HEADS):                             # static unroll (2 heads)
        lo = h * HEAD_DIM
        q = (qkv[:, lo:lo + HEAD_DIM] * ATTN_SCALE).astype(jnp.bfloat16)
        k = qkv[:, HIDDEN + lo:HIDDEN + lo + HEAD_DIM].astype(jnp.bfloat16)
        v = qkv[:, 2 * HIDDEN + lo:2 * HIDDEN + lo + HEAD_DIM].astype(jnp.bfloat16)
        s = jnp.einsum('sd,td->st', q, k, preferred_element_type=jnp.float32)
        p = _softmax(s)
        ctx_heads.append(jnp.dot(p.astype(jnp.bfloat16), v,
                                 preferred_element_type=jnp.float32))
    ctx = jnp.concatenate(ctx_heads, axis=-1)              # [S, H]
    return _mm(ctx, wo, bo)                                # single output projection


# ---------------- fused forward kernel --------------------------------------
def _build_kernel(layer_is_moe):
    """Kernel processing one batch element through all layers + pooler + classifier."""

    def kernel(*refs):
        x_ref, out_ref = refs[0], refs[-1]
        params = refs[1:-1]
        pos = [0]

        def nxt():
            v = params[pos[0]][...]
            pos[0] += 1
            return v

        x = x_ref[...].reshape(SEQ, HIDDEN)                # one batch element, f32

        for is_moe in layer_is_moe:                        # static Python unroll
            wqkv, bqkv, wo, bo, g1, b1 = nxt(), nxt(), nxt(), nxt(), nxt(), nxt()
            x = _layer_norm(x + _attention(x, wqkv, bqkv, wo, bo), g1, b1)

            if is_moe:
                # SharedExpertMOE: shared expert + softmax(gate)-weighted routed experts,
                # all experts fused into one lane-dense matmul (slabs of width INTER_PAD).
                wg, bg, wex, bex = nxt(), nxt(), nxt(), nxt()
                gate = _softmax(_mm(x, wg, bg))            # [S, E]
                eo = _mm(x, wex, bex)                      # [S, (1+E)*INTER_PAD]
                mix = eo[:, :INTER_PAD]                    # shared (text) expert
                for e in range(NUM_ROUTED_EXPERTS):        # static unroll
                    off = (e + 1) * INTER_PAD
                    mix = mix + gate[:, e:e + 1] * eo[:, off:off + INTER_PAD]
                inter = _gelu(mix)
            else:
                wi, bi = nxt(), nxt()
                inter = _gelu(_mm(x, wi, bi))              # BertIntermediate

            wff, bff, g2, b2 = nxt(), nxt(), nxt(), nxt()
            x = _layer_norm(x + _mm(inter, wff, bff), g2, b2)   # BertOutput

        wp, bp, wc, bc = nxt(), nxt(), nxt(), nxt()
        pooled = jnp.tanh(_mm(x[0:1, :], wp, bp))          # BertPooler on CLS token
        logits = _mm(pooled, wc, bc)                       # [1, OUT_PAD] (padded, lane-dense)
        out_ref[...] = logits.reshape(1, 1, OUT_PAD)       # dropout = identity (eval)

    return kernel


# ---------------- wrapper ----------------------------------------------------
def _estimate_flops():
    f = 0
    for li in range(NUM_LAYERS):
        f += 2 * SEQ * HIDDEN * 3 * HIDDEN                       # fused QKV
        f += 2 * NUM_HEADS * SEQ * SEQ * HEAD_DIM * 2            # scores + context
        f += 2 * SEQ * HIDDEN * HIDDEN                           # attention out proj
        if li in MOE_POSITION:
            f += 2 * SEQ * HIDDEN * NUM_ROUTED_EXPERTS           # router gate
            f += 2 * SEQ * HIDDEN * (1 + NUM_ROUTED_EXPERTS) * INTER_PAD
        else:
            f += 2 * SEQ * HIDDEN * INTER_PAD
        f += 2 * SEQ * INTER_PAD * HIDDEN                        # FFN output dense
    f += 2 * HIDDEN * HIDDEN + 2 * HIDDEN * OUT_PAD              # pooler + classifier
    return BATCH * f


_FLOPS = _estimate_flops()
_TRANSCENDENTALS = BATCH * (NUM_LAYERS * SEQ * (NUM_HEADS * SEQ + INTER_PAD) + HIDDEN)


def moebert_forward(x, layers, head):
    layer_is_moe = tuple(li in MOE_POSITION for li in range(NUM_LAYERS))

    flat = [x]
    for li, p in enumerate(layers):
        flat += [p['wqkv'], p['bqkv'], p['wo'], p['bo'], p['ln1_g'], p['ln1_b']]
        if layer_is_moe[li]:
            flat += [p['wg'], p['bg'], p['wex'], p['bex']]
        else:
            flat += [p['wi'], p['bi']]
        flat += [p['wff'], p['bff'], p['ln2_g'], p['ln2_b']]
    flat += [head['wp'], head['bp'], head['wc'], head['bc']]

    def _full_spec(a):
        ndim = a.ndim

        def imap(b):
            return (0,) * ndim

        return pl.BlockSpec(a.shape, imap)

    in_specs = [pl.BlockSpec((1, SEQ, HIDDEN), lambda b: (b, 0, 0))]
    in_specs += [_full_spec(a) for a in flat[1:]]
    out_spec = pl.BlockSpec((1, 1, OUT_PAD), lambda b: (b, 0, 0))

    bytes_accessed = int(sum(a.size * a.dtype.itemsize for a in flat)
                         + BATCH * OUT_PAD * 4)
    cost = pl.CostEstimate(flops=int(_FLOPS),
                           transcendentals=int(_TRANSCENDENTALS),
                           bytes_accessed=bytes_accessed)

    padded = pl.pallas_call(
        _build_kernel(layer_is_moe),
        out_shape=jax.ShapeDtypeStruct((BATCH, 1, OUT_PAD), jnp.float32),
        grid=(BATCH,),
        in_specs=in_specs,
        out_specs=out_spec,
        compiler_params=pltpu.CompilerParams(dimension_semantics=("parallel",)),
        cost_estimate=cost,
    )(*flat)
    return padded[:, 0, :NUM_LABELS]


# ---------------- deterministic parameter init ------------------------------
def _linear(key, fan_in, fan_out):
    kw, kb = jax.random.split(key)
    w = jax.random.normal(kw, (fan_in, fan_out), jnp.float32) * 0.02
    b = jax.random.normal(kb, (fan_out,), jnp.float32) * 0.02
    return w, b


def _pad_cols(w, width):
    return jnp.pad(w, ((0, 0), (0, width - w.shape[1])))


def _pad_rows(w, height):
    return jnp.pad(w, ((0, height - w.shape[0]), (0, 0)))


def init_model(key):
    # NOTE: the original module loads pretrained BERT + expert .pt checkpoints;
    # here weights are synthetic/deterministic (same shapes, same math).
    keys = jax.random.split(key, NUM_LAYERS + 1)
    layers = []
    for li in range(NUM_LAYERS):
        k = jax.random.split(keys[li], 7 + NUM_ROUTED_EXPERTS)
        p = {}
        wq, bq = _linear(k[0], HIDDEN, HIDDEN)
        wk, bk = _linear(k[1], HIDDEN, HIDDEN)
        wv, bv = _linear(k[2], HIDDEN, HIDDEN)
        p['wqkv'] = jnp.concatenate([wq, wk, wv], axis=1).astype(jnp.bfloat16)
        p['bqkv'] = jnp.concatenate([bq, bk, bv]).reshape(1, 3 * HIDDEN)
        wo, bo = _linear(k[3], HIDDEN, HIDDEN)
        p['wo'], p['bo'] = wo.astype(jnp.bfloat16), bo.reshape(1, HIDDEN)
        p['ln1_g'] = jnp.ones((1, HIDDEN), jnp.float32)
        p['ln1_b'] = jnp.zeros((1, HIDDEN), jnp.float32)
        wff, bff = _linear(k[4], INTER, HIDDEN)
        p['wff'] = _pad_rows(wff, INTER_PAD).astype(jnp.bfloat16)   # padded rows are zero
        p['bff'] = bff.reshape(1, HIDDEN)
        p['ln2_g'] = jnp.ones((1, HIDDEN), jnp.float32)
        p['ln2_b'] = jnp.zeros((1, HIDDEN), jnp.float32)
        if li in MOE_POSITION:
            wg, bg = _linear(k[5], HIDDEN, NUM_ROUTED_EXPERTS)      # router gate
            p['wg'], p['bg'] = wg.astype(jnp.bfloat16), bg.reshape(1, NUM_ROUTED_EXPERTS)
            ws, bs = _linear(k[6], HIDDEN, INTER)                   # shared (text) expert fc
            slab_w = [_pad_cols(ws, INTER_PAD)]
            slab_b = [jnp.pad(bs, (0, INTER_PAD - INTER))]
            for e in range(NUM_ROUTED_EXPERTS):                     # speech / image routed experts
                we, be = _linear(k[7 + e], HIDDEN, INTER)
                slab_w.append(_pad_cols(we, INTER_PAD))
                slab_b.append(jnp.pad(be, (0, INTER_PAD - INTER)))
            p['wex'] = jnp.concatenate(slab_w, axis=1).astype(jnp.bfloat16)   # [H, (1+E)*IP]
            p['bex'] = jnp.concatenate(slab_b).reshape(1, (1 + NUM_ROUTED_EXPERTS) * INTER_PAD)
        else:
            wi, bi = _linear(k[5], HIDDEN, INTER)                   # BertIntermediate.dense
            p['wi'] = _pad_cols(wi, INTER_PAD).astype(jnp.bfloat16)
            p['bi'] = jnp.pad(bi, (0, INTER_PAD - INTER)).reshape(1, INTER_PAD)
        layers.append(p)

    kh = jax.random.split(keys[-1], 2)
    wp, bp = _linear(kh[0], HIDDEN, HIDDEN)
    wc, bc = _linear(kh[1], HIDDEN, NUM_LABELS)
    head = {
        'wp': wp.astype(jnp.bfloat16), 'bp': bp.reshape(1, HIDDEN),
        'wc': _pad_cols(wc, OUT_PAD).astype(jnp.bfloat16),          # zero-padded labels
        'bc': jnp.pad(bc, (0, OUT_PAD - NUM_LABELS)).reshape(1, OUT_PAD),
    }
    return layers, head


if __name__ == "__main__":
    key = jax.random.PRNGKey(0)
    k_x, k_p = jax.random.split(key)
    # input: encoder hidden states [B, S, H] (MoEBert.forward feeds x straight to the encoder)
    x = jax.random.normal(k_x, (BATCH, SEQ, HIDDEN), jnp.float32)
    layers, head = init_model(k_p)

    forward = jax.jit(moebert_forward)
    logits = forward(x, layers, head)
    jax.block_until_ready(logits)
    assert logits.shape == (BATCH, NUM_LABELS)
    assert jnp.all(jnp.isfinite(logits))
    print("KERNEL_OK")
</pallas_src>

<mosaic_0001>
module attributes {stable_mosaic.version = 11 : i64} {
  func.func @kernel(%arg0: i32, %arg1: memref<1x8x32xf32, #tpu.memory_space<vmem>>, %arg2: memref<32x96xbf16, #tpu.memory_space<vmem>>, %arg3: memref<1x96xf32, #tpu.memory_space<vmem>>, %arg4: memref<32x32xbf16, #tpu.memory_space<vmem>>, %arg5: memref<1x32xf32, #tpu.memory_space<vmem>>, %arg6: memref<1x32xf32, #tpu.memory_space<vmem>>, %arg7: memref<1x32xf32, #tpu.memory_space<vmem>>, %arg8: memref<32x128xbf16, #tpu.memory_space<vmem>>, %arg9: memref<1x128xf32, #tpu.memory_space<vmem>>, %arg10: memref<128x32xbf16, #tpu.memory_space<vmem>>, %arg11: memref<1x32xf32, #tpu.memory_space<vmem>>, %arg12: memref<1x32xf32, #tpu.memory_space<vmem>>, %arg13: memref<1x32xf32, #tpu.memory_space<vmem>>, %arg14: memref<32x96xbf16, #tpu.memory_space<vmem>>, %arg15: memref<1x96xf32, #tpu.memory_space<vmem>>, %arg16: memref<32x32xbf16, #tpu.memory_space<vmem>>, %arg17: memref<1x32xf32, #tpu.memory_space<vmem>>, %arg18: memref<1x32xf32, #tpu.memory_space<vmem>>, %arg19: memref<1x32xf32, #tpu.memory_space<vmem>>, %arg20: memref<32x2xbf16, #tpu.memory_space<vmem>>, %arg21: memref<1x2xf32, #tpu.memory_space<vmem>>, %arg22: memref<32x384xbf16, #tpu.memory_space<vmem>>, %arg23: memref<1x384xf32, #tpu.memory_space<vmem>>, %arg24: memref<128x32xbf16, #tpu.memory_space<vmem>>, %arg25: memref<1x32xf32, #tpu.memory_space<vmem>>, %arg26: memref<1x32xf32, #tpu.memory_space<vmem>>, %arg27: memref<1x32xf32, #tpu.memory_space<vmem>>, %arg28: memref<32x32xbf16, #tpu.memory_space<vmem>>, %arg29: memref<1x32xf32, #tpu.memory_space<vmem>>, %arg30: memref<32x128xbf16, #tpu.memory_space<vmem>>, %arg31: memref<1x128xf32, #tpu.memory_space<vmem>>, %arg32: memref<1x1x128xf32, #tpu.memory_space<vmem>>) attributes {dimension_semantics = [#tpu.dimension_semantics<parallel>], iteration_bounds = array<i64: 2>, scalar_prefetch = 0 : i64, scratch_operands = 0 : i64, tpu.core_type = #tpu.core_type<tc>, window_params = [{transform_indices = @transform_0, window_bounds = array<i64: 1, 8, 32>}, {pipeline_mode = #tpu.pipeline_mode<synchronous>, transform_indices = @transform_1, window_bounds = array<i64: 32, 96>}, {pipeline_mode = #tpu.pipeline_mode<synchronous>, transform_indices = @transform_2, window_bounds = array<i64: 1, 96>}, {pipeline_mode = #tpu.pipeline_mode<synchronous>, transform_indices = @transform_3, window_bounds = array<i64: 32, 32>}, {pipeline_mode = #tpu.pipeline_mode<synchronous>, transform_indices = @transform_4, window_bounds = array<i64: 1, 32>}, {pipeline_mode = #tpu.pipeline_mode<synchronous>, transform_indices = @transform_5, window_bounds = array<i64: 1, 32>}, {pipeline_mode = #tpu.pipeline_mode<synchronous>, transform_indices = @transform_6, window_bounds = array<i64: 1, 32>}, {pipeline_mode = #tpu.pipeline_mode<synchronous>, transform_indices = @transform_7, window_bounds = array<i64: 32, 128>}, {pipeline_mode = #tpu.pipeline_mode<synchronous>, transform_indices = @transform_8, window_bounds = array<i64: 1, 128>}, {pipeline_mode = #tpu.pipeline_mode<synchronous>, transform_indices = @transform_9, window_bounds = array<i64: 128, 32>}, {pipeline_mode = #tpu.pipeline_mode<synchronous>, transform_indices = @transform_10, window_bounds = array<i64: 1, 32>}, {pipeline_mode = #tpu.pipeline_mode<synchronous>, transform_indices = @transform_11, window_bounds = array<i64: 1, 32>}, {pipeline_mode = #tpu.pipeline_mode<synchronous>, transform_indices = @transform_12, window_bounds = array<i64: 1, 32>}, {pipeline_mode = #tpu.pipeline_mode<synchronous>, transform_indices = @transform_13, window_bounds = array<i64: 32, 96>}, {pipeline_mode = #tpu.pipeline_mode<synchronous>, transform_indices = @transform_14, window_bounds = array<i64: 1, 96>}, {pipeline_mode = #tpu.pipeline_mode<synchronous>, transform_indices = @transform_15, window_bounds = array<i64: 32, 32>}, {pipeline_mode = #tpu.pipeline_mode<synchronous>, transform_indices = @transform_16, window_bounds = array<i64: 1, 32>}, {pipeline_mode = #tpu.pipeline_mode<synchronous>, transform_indices = @transform_17, window_bounds = array<i64: 1, 32>}, {pipeline_mode = #tpu.pipeline_mode<synchronous>, transform_indices = @transform_18, window_bounds = array<i64: 1, 32>}, {pipeline_mode = #tpu.pipeline_mode<synchronous>, transform_indices = @transform_19, window_bounds = array<i64: 32, 2>}, {pipeline_mode = #tpu.pipeline_mode<synchronous>, transform_indices = @transform_20, window_bounds = array<i64: 1, 2>}, {pipeline_mode = #tpu.pipeline_mode<synchronous>, transform_indices = @transform_21, window_bounds = array<i64: 32, 384>}, {pipeline_mode = #tpu.pipeline_mode<synchronous>, transform_indices = @transform_22, window_bounds = array<i64: 1, 384>}, {pipeline_mode = #tpu.pipeline_mode<synchronous>, transform_indices = @transform_23, window_bounds = array<i64: 128, 32>}, {pipeline_mode = #tpu.pipeline_mode<synchronous>, transform_indices = @transform_24, window_bounds = array<i64: 1, 32>}, {pipeline_mode = #tpu.pipeline_mode<synchronous>, transform_indices = @transform_25, window_bounds = array<i64: 1, 32>}, {pipeline_mode = #tpu.pipeline_mode<synchronous>, transform_indices = @transform_26, window_bounds = array<i64: 1, 32>}, {pipeline_mode = #tpu.pipeline_mode<synchronous>, transform_indices = @transform_27, window_bounds = array<i64: 32, 32>}, {pipeline_mode = #tpu.pipeline_mode<synchronous>, transform_indices = @transform_28, window_bounds = array<i64: 1, 32>}, {pipeline_mode = #tpu.pipeline_mode<synchronous>, transform_indices = @transform_29, window_bounds = array<i64: 32, 128>}, {pipeline_mode = #tpu.pipeline_mode<synchronous>, transform_indices = @transform_30, window_bounds = array<i64: 1, 128>}, {transform_indices = @transform_31, window_bounds = array<i64: 1, 1, 128>}]} {
    %c0 = arith.constant 0 : index
    %c0_0 = arith.constant 0 : index
    %c0_1 = arith.constant 0 : index
    %0 = vector.load %arg1[%c0, %c0_0, %c0_1] : memref<1x8x32xf32, #tpu.memory_space<vmem>>, vector<1x8x32xf32>
    %1 = vector.shape_cast %0 : vector<1x8x32xf32> to vector<8x32xf32>
    %c0_2 = arith.constant 0 : index
    %c0_3 = arith.constant 0 : index
    %2 = vector.load %arg2[%c0_2, %c0_3] : memref<32x96xbf16, #tpu.memory_space<vmem>>, vector<32x96xbf16>
    %c0_4 = arith.constant 0 : index
    %c0_5 = arith.constant 0 : index
    %3 = vector.load %arg3[%c0_4, %c0_5] : memref<1x96xf32, #tpu.memory_space<vmem>>, vector<1x96xf32>
    %c0_6 = arith.constant 0 : index
    %c0_7 = arith.constant 0 : index
    %4 = vector.load %arg4[%c0_6, %c0_7] : memref<32x32xbf16, #tpu.memory_space<vmem>>, vector<32x32xbf16>
    %c0_8 = arith.constant 0 : index
    %c0_9 = arith.constant 0 : index
    %5 = vector.load %arg5[%c0_8, %c0_9] : memref<1x32xf32, #tpu.memory_space<vmem>>, vector<1x32xf32>
    %c0_10 = arith.constant 0 : index
    %c0_11 = arith.constant 0 : index
    %6 = vector.load %arg6[%c0_10, %c0_11] : memref<1x32xf32, #tpu.memory_space<vmem>>, vector<1x32xf32>
    %c0_12 = arith.constant 0 : index
    %c0_13 = arith.constant 0 : index
    %7 = vector.load %arg7[%c0_12, %c0_13] : memref<1x32xf32, #tpu.memory_space<vmem>>, vector<1x32xf32>
    %8 = arith.truncf %1 : vector<8x32xf32> to vector<8x32xbf16>
    %cst = arith.constant dense<0.000000e+00> : vector<8x96xf32>
    %9 = tpu.matmul %8, %2, %cst {dimension_numbers = #tpu.dot_dimension_numbers<[1], [0], [0], [1], [0, 0, 1, 1], [], []>} : vector<8x32xbf16>, vector<32x96xbf16>, vector<8x96xf32> -> vector<8x96xf32>
    %10 = vector.broadcast %3 : vector<1x96xf32> to vector<8x96xf32>
    %11 = arith.addf %9, %10 : vector<8x96xf32>
    %12 = vector.extract_strided_slice %11 {offsets = [0, 0], sizes = [8, 16], strides = [1, 1]} : vector<8x96xf32> to vector<8x16xf32>
    %cst_14 = arith.constant 2.500000e-01 : f32
    %13 = vector.broadcast %cst_14 : f32 to vector<8x16xf32>
    %14 = arith.mulf %12, %13 : vector<8x16xf32>
    %15 = arith.truncf %14 : vector<8x16xf32> to vector<8x16xbf16>
    %16 = vector.extract_strided_slice %11 {offsets = [0, 32], sizes = [8, 16], strides = [1, 1]} : vector<8x96xf32> to vector<8x16xf32>
    %17 = arith.truncf %16 : vector<8x16xf32> to vector<8x16xbf16>
    %18 = vector.extract_strided_slice %11 {offsets = [0, 64], sizes = [8, 16], strides = [1, 1]} : vector<8x96xf32> to vector<8x16xf32>
    %19 = arith.truncf %18 : vector<8x16xf32> to vector<8x16xbf16>
    "tpu.trace_start"() <{level = 10 : i32, message = "sd,td->st"}> : () -> ()
    %cst_15 = arith.constant dense<0.000000e+00> : vector<8x8xf32>
    %20 = tpu.matmul %15, %17, %cst_15 {dimension_numbers = #tpu.dot_dimension_numbers<[1], [1], [0], [0], [0, 0, 1, 0], [], []>} : vector<8x16xbf16>, vector<8x16xbf16>, vector<8x8xf32> -> vector<8x8xf32>
    "tpu.trace_stop"() : () -> ()
    %cst_16 = arith.constant dense<0xFF800000> : vector<8xf32>
    %21 = vector.multi_reduction <maximumf>, %20, %cst_16 [1] : vector<8x8xf32> to vector<8xf32>
    %22 = vector.shape_cast %21 : vector<8xf32> to vector<8x1xf32>
    %23 = vector.broadcast %22 : vector<8x1xf32> to vector<8x8xf32>
    %24 = arith.subf %20, %23 : vector<8x8xf32>
    %25 = math.exp %24 : vector<8x8xf32>
    %cst_17 = arith.constant dense<0.000000e+00> : vector<8xf32>
    %26 = vector.multi_reduction <add>, %25, %cst_17 [1] : vector<8x8xf32> to vector<8xf32>
    %27 = vector.shape_cast %26 : vector<8xf32> to vector<8x1xf32>
    %28 = tpu.reciprocal %27 {approx = true} : vector<8x1xf32> -> vector<8x1xf32>
    %29 = vector.broadcast %28 : vector<8x1xf32> to vector<8x8xf32>
    %30 = arith.mulf %25, %29 : vector<8x8xf32>
    %31 = arith.truncf %30 : vector<8x8xf32> to vector<8x8xbf16>
    %cst_18 = arith.constant dense<0.000000e+00> : vector<8x16xf32>
    %32 = tpu.matmul %31, %19, %cst_18 {dimension_numbers = #tpu.dot_dimension_numbers<[1], [0], [0], [1], [0, 0, 1, 1], [], []>} : vector<8x8xbf16>, vector<8x16xbf16>, vector<8x16xf32> -> vector<8x16xf32>
    %33 = vector.extract_strided_slice %11 {offsets = [0, 16], sizes = [8, 16], strides = [1, 1]} : vector<8x96xf32> to vector<8x16xf32>
    %cst_19 = arith.constant 2.500000e-01 : f32
    %34 = vector.broadcast %cst_19 : f32 to vector<8x16xf32>
    %35 = arith.mulf %33, %34 : vector<8x16xf32>
    %36 = arith.truncf %35 : vector<8x16xf32> to vector<8x16xbf16>
    %37 = vector.extract_strided_slice %11 {offsets = [0, 48], sizes = [8, 16], strides = [1, 1]} : vector<8x96xf32> to vector<8x16xf32>
    %38 = arith.truncf %37 : vector<8x16xf32> to vector<8x16xbf16>
    %39 = vector.extract_strided_slice %11 {offsets = [0, 80], sizes = [8, 16], strides = [1, 1]} : vector<8x96xf32> to vector<8x16xf32>
    %40 = arith.truncf %39 : vector<8x16xf32> to vector<8x16xbf16>
    "tpu.trace_start"() <{level = 10 : i32, message = "sd,td->st"}> : () -> ()
    %cst_20 = arith.constant dense<0.000000e+00> : vector<8x8xf32>
    %41 = tpu.matmul %36, %38, %cst_20 {dimension_numbers = #tpu.dot_dimension_numbers<[1], [1], [0], [0], [0, 0, 1, 0], [], []>} : vector<8x16xbf16>, vector<8x16xbf16>, vector<8x8xf32> -> vector<8x8xf32>
    "tpu.trace_stop"() : () -> ()
    %cst_21 = arith.constant dense<0xFF800000> : vector<8xf32>
    %42 = vector.multi_reduction <maximumf>, %41, %cst_21 [1] : vector<8x8xf32> to vector<8xf32>
    %43 = vector.shape_cast %42 : vector<8xf32> to vector<8x1xf32>
    %44 = vector.broadcast %43 : vector<8x1xf32> to vector<8x8xf32>
    %45 = arith.subf %41, %44 : vector<8x8xf32>
    %46 = math.exp %45 : vector<8x8xf32>
    %cst_22 = arith.constant dense<0.000000e+00> : vector<8xf32>
    %47 = vector.multi_reduction <add>, %46, %cst_22 [1] : vector<8x8xf32> to vector<8xf32>
    %48 = vector.shape_cast %47 : vector<8xf32> to vector<8x1xf32>
    %49 = tpu.reciprocal %48 {approx = true} : vector<8x1xf32> -> vector<8x1xf32>
    %50 = vector.broadcast %49 : vector<8x1xf32> to vector<8x8xf32>
    %51 = arith.mulf %46, %50 : vector<8x8xf32>
    %52 = arith.truncf %51 : vector<8x8xf32> to vector<8x8xbf16>
    %cst_23 = arith.constant dense<0.000000e+00> : vector<8x16xf32>
    %53 = tpu.matmul %52, %40, %cst_23 {dimension_numbers = #tpu.dot_dimension_numbers<[1], [0], [0], [1], [0, 0, 1, 1], [], []>} : vector<8x8xbf16>, vector<8x16xbf16>, vector<8x16xf32> -> vector<8x16xf32>
    %54 = tpu.concatenate %32, %53 in 1 : vector<8x16xf32>, vector<8x16xf32> -> vector<8x32xf32>
    %55 = arith.truncf %54 : vector<8x32xf32> to vector<8x32xbf16>
    %cst_24 = arith.constant dense<0.000000e+00> : vector<8x32xf32>
    %56 = tpu.matmul %55, %4, %cst_24 {dimension_numbers = #tpu.dot_dimension_numbers<[1], [0], [0], [1], [0, 0, 1, 1], [], []>} : vector<8x32xbf16>, vector<32x32xbf16>, vector<8x32xf32> -> vector<8x32xf32>
    %57 = vector.broadcast %5 : vector<1x32xf32> to vector<8x32xf32>
    %58 = arith.addf %56, %57 : vector<8x32xf32>
    %59 = arith.addf %1, %58 : vector<8x32xf32>
    %cst_25 = arith.constant dense<0.000000e+00> : vector<8xf32>
    %60 = vector.multi_reduction <add>, %59, %cst_25 [1] : vector<8x32xf32> to vector<8xf32>
    %61 = vector.shape_cast %60 : vector<8xf32> to vector<8x1xf32>
    %cst_26 = arith.constant 3.200000e+01 : f32
    %62 = vector.broadcast %cst_26 : f32 to vector<8x1xf32>
    %63 = arith.divf %61, %62 : vector<8x1xf32>
    %64 = vector.broadcast %63 : vector<8x1xf32> to vector<8x32xf32>
    %65 = arith.subf %59, %64 : vector<8x32xf32>
    %66 = arith.mulf %65, %65 : vector<8x32xf32>
    %cst_27 = arith.constant dense<0.000000e+00> : vector<8xf32>
    %67 = vector.multi_reduction <add>, %66, %cst_27 [1] : vector<8x32xf32> to vector<8xf32>
    %68 = vector.shape_cast %67 : vector<8xf32> to vector<8x1xf32>
    %cst_28 = arith.constant 3.200000e+01 : f32
    %69 = vector.broadcast %cst_28 : f32 to vector<8x1xf32>
    %70 = arith.divf %68, %69 : vector<8x1xf32>
    %cst_29 = arith.constant 9.99999996E-13 : f32
    %71 = vector.broadcast %cst_29 : f32 to vector<8x1xf32>
    %72 = arith.addf %70, %71 : vector<8x1xf32>
    %73 = math.rsqrt %72 : vector<8x1xf32>
    %74 = vector.broadcast %73 : vector<8x1xf32> to vector<8x32xf32>
    %75 = arith.mulf %65, %74 : vector<8x32xf32>
    %76 = vector.broadcast %6 : vector<1x32xf32> to vector<8x32xf32>
    %77 = arith.mulf %75, %76 : vector<8x32xf32>
    %78 = vector.broadcast %7 : vector<1x32xf32> to vector<8x32xf32>
    %79 = arith.addf %77, %78 : vector<8x32xf32>
    %c0_30 = arith.constant 0 : index
    %c0_31 = arith.constant 0 : index
    %80 = vector.load %arg8[%c0_30, %c0_31] : memref<32x128xbf16, #tpu.memory_space<vmem>>, vector<32x128xbf16>
    %c0_32 = arith.constant 0 : index
    %c0_33 = arith.constant 0 : index
    %81 = vector.load %arg9[%c0_32, %c0_33] : memref<1x128xf32, #tpu.memory_space<vmem>>, vector<1x128xf32>
    %82 = arith.truncf %79 : vector<8x32xf32> to vector<8x32xbf16>
    %cst_34 = arith.constant dense<0.000000e+00> : vector<8x128xf32>
    %83 = tpu.matmul %82, %80, %cst_34 {dimension_numbers = #tpu.dot_dimension_numbers<[1], [0], [0], [1], [0, 0, 1, 1], [], []>} : vector<8x32xbf16>, vector<32x128xbf16>, vector<8x128xf32> -> vector<8x128xf32>
    %84 = vector.broadcast %81 : vector<1x128xf32> to vector<8x128xf32>
    %85 = arith.addf %83, %84 : vector<8x128xf32>
    %cst_35 = arith.constant 5.000000e-01 : f32
    %86 = vector.broadcast %cst_35 : f32 to vector<8x128xf32>
    %87 = arith.mulf %86, %85 : vector<8x128xf32>
    %cst_36 = arith.constant 4.471500e-02 : f32
    %88 = vector.broadcast %cst_36 : f32 to vector<8x128xf32>
    %89 = arith.mulf %88, %85 : vector<8x128xf32>
    %90 = arith.mulf %89, %85 : vector<8x128xf32>
    %91 = arith.mulf %90, %85 : vector<8x128xf32>
    %92 = arith.addf %85, %91 : vector<8x128xf32>
    %cst_37 = arith.constant 0.797884583 : f32
    %93 = vector.broadcast %cst_37 : f32 to vector<8x128xf32>
    %94 = arith.mulf %93, %92 : vector<8x128xf32>
    %95 = math.tanh %94 : vector<8x128xf32>
    %cst_38 = arith.constant 1.000000e+00 : f32
    %96 = vector.broadcast %cst_38 : f32 to vector<8x128xf32>
    %97 = arith.addf %96, %95 : vector<8x128xf32>
    %98 = arith.mulf %87, %97 : vector<8x128xf32>
    %c0_39 = arith.constant 0 : index
    %c0_40 = arith.constant 0 : index
    %99 = vector.load %arg10[%c0_39, %c0_40] : memref<128x32xbf16, #tpu.memory_space<vmem>>, vector<128x32xbf16>
    %c0_41 = arith.constant 0 : index
    %c0_42 = arith.constant 0 : index
    %100 = vector.load %arg11[%c0_41, %c0_42] : memref<1x32xf32, #tpu.memory_space<vmem>>, vector<1x32xf32>
    %c0_43 = arith.constant 0 : index
    %c0_44 = arith.constant 0 : index
    %101 = vector.load %arg12[%c0_43, %c0_44] : memref<1x32xf32, #tpu.memory_space<vmem>>, vector<1x32xf32>
    %c0_45 = arith.constant 0 : index
    %c0_46 = arith.constant 0 : index
    %102 = vector.load %arg13[%c0_45, %c0_46] : memref<1x32xf32, #tpu.memory_space<vmem>>, vector<1x32xf32>
    %103 = arith.truncf %98 : vector<8x128xf32> to vector<8x128xbf16>
    %cst_47 = arith.constant dense<0.000000e+00> : vector<8x32xf32>
    %104 = tpu.matmul %103, %99, %cst_47 {dimension_numbers = #tpu.dot_dimension_numbers<[1], [0], [0], [1], [0, 0, 1, 1], [], []>} : vector<8x128xbf16>, vector<128x32xbf16>, vector<8x32xf32> -> vector<8x32xf32>
    %105 = vector.broadcast %100 : vector<1x32xf32> to vector<8x32xf32>
    %106 = arith.addf %104, %105 : vector<8x32xf32>
    %107 = arith.addf %79, %106 : vector<8x32xf32>
    %cst_48 = arith.constant dense<0.000000e+00> : vector<8xf32>
    %108 = vector.multi_reduction <add>, %107, %cst_48 [1] : vector<8x32xf32> to vector<8xf32>
    %109 = vector.shape_cast %108 : vector<8xf32> to vector<8x1xf32>
    %cst_49 = arith.constant 3.200000e+01 : f32
    %110 = vector.broadcast %cst_49 : f32 to vector<8x1xf32>
    %111 = arith.divf %109, %110 : vector<8x1xf32>
    %112 = vector.broadcast %111 : vector<8x1xf32> to vector<8x32xf32>
    %113 = arith.subf %107, %112 : vector<8x32xf32>
    %114 = arith.mulf %113, %113 : vector<8x32xf32>
    %cst_50 = arith.constant dense<0.000000e+00> : vector<8xf32>
    %115 = vector.multi_reduction <add>, %114, %cst_50 [1] : vector<8x32xf32> to vector<8xf32>
    %116 = vector.shape_cast %115 : vector<8xf32> to vector<8x1xf32>
    %cst_51 = arith.constant 3.200000e+01 : f32
    %117 = vector.broadcast %cst_51 : f32 to vector<8x1xf32>
    %118 = arith.divf %116, %117 : vector<8x1xf32>
    %cst_52 = arith.constant 9.99999996E-13 : f32
    %119 = vector.broadcast %cst_52 : f32 to vector<8x1xf32>
    %120 = arith.addf %118, %119 : vector<8x1xf32>
    %121 = math.rsqrt %120 : vector<8x1xf32>
    %122 = vector.broadcast %121 : vector<8x1xf32> to vector<8x32xf32>
    %123 = arith.mulf %113, %122 : vector<8x32xf32>
    %124 = vector.broadcast %101 : vector<1x32xf32> to vector<8x32xf32>
    %125 = arith.mulf %123, %124 : vector<8x32xf32>
    %126 = vector.broadcast %102 : vector<1x32xf32> to vector<8x32xf32>
    %127 = arith.addf %125, %126 : vector<8x32xf32>
    %c0_53 = arith.constant 0 : index
    %c0_54 = arith.constant 0 : index
    %128 = vector.load %arg14[%c0_53, %c0_54] : memref<32x96xbf16, #tpu.memory_space<vmem>>, vector<32x96xbf16>
    %c0_55 = arith.constant 0 : index
    %c0_56 = arith.constant 0 : index
    %129 = vector.load %arg15[%c0_55, %c0_56] : memref<1x96xf32, #tpu.memory_space<vmem>>, vector<1x96xf32>
    %c0_57 = arith.constant 0 : index
    %c0_58 = arith.constant 0 : index
    %130 = vector.load %arg16[%c0_57, %c0_58] : memref<32x32xbf16, #tpu.memory_space<vmem>>, vector<32x32xbf16>
    %c0_59 = arith.constant 0 : index
    %c0_60 = arith.constant 0 : index
    %131 = vector.load %arg17[%c0_59, %c0_60] : memref<1x32xf32, #tpu.memory_space<vmem>>, vector<1x32xf32>
    %c0_61 = arith.constant 0 : index
    %c0_62 = arith.constant 0 : index
    %132 = vector.load %arg18[%c0_61, %c0_62] : memref<1x32xf32, #tpu.memory_space<vmem>>, vector<1x32xf32>
    %c0_63 = arith.constant 0 : index
    %c0_64 = arith.constant 0 : index
    %133 = vector.load %arg19[%c0_63, %c0_64] : memref<1x32xf32, #tpu.memory_space<vmem>>, vector<1x32xf32>
    %134 = arith.truncf %127 : vector<8x32xf32> to vector<8x32xbf16>
    %cst_65 = arith.constant dense<0.000000e+00> : vector<8x96xf32>
    %135 = tpu.matmul %134, %128, %cst_65 {dimension_numbers = #tpu.dot_dimension_numbers<[1], [0], [0], [1], [0, 0, 1, 1], [], []>} : vector<8x32xbf16>, vector<32x96xbf16>, vector<8x96xf32> -> vector<8x96xf32>
    %136 = vector.broadcast %129 : vector<1x96xf32> to vector<8x96xf32>
    %137 = arith.addf %135, %136 : vector<8x96xf32>
    %138 = vector.extract_strided_slice %137 {offsets = [0, 0], sizes = [8, 16], strides = [1, 1]} : vector<8x96xf32> to vector<8x16xf32>
    %cst_66 = arith.constant 2.500000e-01 : f32
    %139 = vector.broadcast %cst_66 : f32 to vector<8x16xf32>
    %140 = arith.mulf %138, %139 : vector<8x16xf32>
    %141 = arith.truncf %140 : vector<8x16xf32> to vector<8x16xbf16>
    %142 = vector.extract_strided_slice %137 {offsets = [0, 32], sizes = [8, 16], strides = [1, 1]} : vector<8x96xf32> to vector<8x16xf32>
    %143 = arith.truncf %142 : vector<8x16xf32> to vector<8x16xbf16>
    %144 = vector.extract_strided_slice %137 {offsets = [0, 64], sizes = [8, 16], strides = [1, 1]} : vector<8x96xf32> to vector<8x16xf32>
    %145 = arith.truncf %144 : vector<8x16xf32> to vector<8x16xbf16>
    "tpu.trace_start"() <{level = 10 : i32, message = "sd,td->st"}> : () -> ()
    %cst_67 = arith.constant dense<0.000000e+00> : vector<8x8xf32>
    %146 = tpu.matmul %141, %143, %cst_67 {dimension_numbers = #tpu.dot_dimension_numbers<[1], [1], [0], [0], [0, 0, 1, 0], [], []>} : vector<8x16xbf16>, vector<8x16xbf16>, vector<8x8xf32> -> vector<8x8xf32>
    "tpu.trace_stop"() : () -> ()
    %cst_68 = arith.constant dense<0xFF800000> : vector<8xf32>
    %147 = vector.multi_reduction <maximumf>, %146, %cst_68 [1] : vector<8x8xf32> to vector<8xf32>
    %148 = vector.shape_cast %147 : vector<8xf32> to vector<8x1xf32>
    %149 = vector.broadcast %148 : vector<8x1xf32> to vector<8x8xf32>
    %150 = arith.subf %146, %149 : vector<8x8xf32>
    %151 = math.exp %150 : vector<8x8xf32>
    %cst_69 = arith.constant dense<0.000000e+00> : vector<8xf32>
    %152 = vector.multi_reduction <add>, %151, %cst_69 [1] : vector<8x8xf32> to vector<8xf32>
    %153 = vector.shape_cast %152 : vector<8xf32> to vector<8x1xf32>
    %154 = tpu.reciprocal %153 {approx = true} : vector<8x1xf32> -> vector<8x1xf32>
    %155 = vector.broadcast %154 : vector<8x1xf32> to vector<8x8xf32>
    %156 = arith.mulf %151, %155 : vector<8x8xf32>
    %157 = arith.truncf %156 : vector<8x8xf32> to vector<8x8xbf16>
    %cst_70 = arith.constant dense<0.000000e+00> : vector<8x16xf32>
    %158 = tpu.matmul %157, %145, %cst_70 {dimension_numbers = #tpu.dot_dimension_numbers<[1], [0], [0], [1], [0, 0, 1, 1], [], []>} : vector<8x8xbf16>, vector<8x16xbf16>, vector<8x16xf32> -> vector<8x16xf32>
    %159 = vector.extract_strided_slice %137 {offsets = [0, 16], sizes = [8, 16], strides = [1, 1]} : vector<8x96xf32> to vector<8x16xf32>
    %cst_71 = arith.constant 2.500000e-01 : f32
    %160 = vector.broadcast %cst_71 : f32 to vector<8x16xf32>
    %161 = arith.mulf %159, %160 : vector<8x16xf32>
    %162 = arith.truncf %161 : vector<8x16xf32> to vector<8x16xbf16>
    %163 = vector.extract_strided_slice %137 {offsets = [0, 48], sizes = [8, 16], strides = [1, 1]} : vector<8x96xf32> to vector<8x16xf32>
    %164 = arith.truncf %163 : vector<8x16xf32> to vector<8x16xbf16>
    %165 = vector.extract_strided_slice %137 {offsets = [0, 80], sizes = [8, 16], strides = [1, 1]} : vector<8x96xf32> to vector<8x16xf32>
    %166 = arith.truncf %165 : vector<8x16xf32> to vector<8x16xbf16>
    "tpu.trace_start"() <{level = 10 : i32, message = "sd,td->st"}> : () -> ()
    %cst_72 = arith.constant dense<0.000000e+00> : vector<8x8xf32>
    %167 = tpu.matmul %162, %164, %cst_72 {dimension_numbers = #tpu.dot_dimension_numbers<[1], [1], [0], [0], [0, 0, 1, 0], [], []>} : vector<8x16xbf16>, vector<8x16xbf16>, vector<8x8xf32> -> vector<8x8xf32>
    "tpu.trace_stop"() : () -> ()
    %cst_73 = arith.constant dense<0xFF800000> : vector<8xf32>
    %168 = vector.multi_reduction <maximumf>, %167, %cst_73 [1] : vector<8x8xf32> to vector<8xf32>
    %169 = vector.shape_cast %168 : vector<8xf32> to vector<8x1xf32>
    %170 = vector.broadcast %169 : vector<8x1xf32> to vector<8x8xf32>
    %171 = arith.subf %167, %170 : vector<8x8xf32>
    %172 = math.exp %171 : vector<8x8xf32>
    %cst_74 = arith.constant dense<0.000000e+00> : vector<8xf32>
    %173 = vector.multi_reduction <add>, %172, %cst_74 [1] : vector<8x8xf32> to vector<8xf32>
    %174 = vector.shape_cast %173 : vector<8xf32> to vector<8x1xf32>
    %175 = tpu.reciprocal %174 {approx = true} : vector<8x1xf32> -> vector<8x1xf32>
    %176 = vector.broadcast %175 : vector<8x1xf32> to vector<8x8xf32>
    %177 = arith.mulf %172, %176 : vector<8x8xf32>
    %178 = arith.truncf %177 : vector<8x8xf32> to vector<8x8xbf16>
    %cst_75 = arith.constant dense<0.000000e+00> : vector<8x16xf32>
    %179 = tpu.matmul %178, %166, %cst_75 {dimension_numbers = #tpu.dot_dimension_numbers<[1], [0], [0], [1], [0, 0, 1, 1], [], []>} : vector<8x8xbf16>, vector<8x16xbf16>, vector<8x16xf32> -> vector<8x16xf32>
    %180 = tpu.concatenate %158, %179 in 1 : vector<8x16xf32>, vector<8x16xf32> -> vector<8x32xf32>
    %181 = arith.truncf %180 : vector<8x32xf32> to vector<8x32xbf16>
    %cst_76 = arith.constant dense<0.000000e+00> : vector<8x32xf32>
    %182 = tpu.matmul %181, %130, %cst_76 {dimension_numbers = #tpu.dot_dimension_numbers<[1], [0], [0], [1], [0, 0, 1, 1], [], []>} : vector<8x32xbf16>, vector<32x32xbf16>, vector<8x32xf32> -> vector<8x32xf32>
    %183 = vector.broadcast %131 : vector<1x32xf32> to vector<8x32xf32>
    %184 = arith.addf %182, %183 : vector<8x32xf32>
    %185 = arith.addf %127, %184 : vector<8x32xf32>
    %cst_77 = arith.constant dense<0.000000e+00> : vector<8xf32>
    %186 = vector.multi_reduction <add>, %185, %cst_77 [1] : vector<8x32xf32> to vector<8xf32>
    %187 = vector.shape_cast %186 : vector<8xf32> to vector<8x1xf32>
    %cst_78 = arith.constant 3.200000e+01 : f32
    %188 = vector.broadcast %cst_78 : f32 to vector<8x1xf32>
    %189 = arith.divf %187, %188 : vector<8x1xf32>
    %190 = vector.broadcast %189 : vector<8x1xf32> to vector<8x32xf32>
    %191 = arith.subf %185, %190 : vector<8x32xf32>
    %192 = arith.mulf %191, %191 : vector<8x32xf32>
    %cst_79 = arith.constant dense<0.000000e+00> : vector<8xf32>
    %193 = vector.multi_reduction <add>, %192, %cst_79 [1] : vector<8x32xf32> to vector<8xf32>
    %194 = vector.shape_cast %193 : vector<8xf32> to vector<8x1xf32>
    %cst_80 = arith.constant 3.200000e+01 : f32
    %195 = vector.broadcast %cst_80 : f32 to vector<8x1xf32>
    %196 = arith.divf %194, %195 : vector<8x1xf32>
    %cst_81 = arith.constant 9.99999996E-13 : f32
    %197 = vector.broadcast %cst_81 : f32 to vector<8x1xf32>
    %198 = arith.addf %196, %197 : vector<8x1xf32>
    %199 = math.rsqrt %198 : vector<8x1xf32>
    %200 = vector.broadcast %199 : vector<8x1xf32> to vector<8x32xf32>
    %201 = arith.mulf %191, %200 : vector<8x32xf32>
    %202 = vector.broadcast %132 : vector<1x32xf32> to vector<8x32xf32>
    %203 = arith.mulf %201, %202 : vector<8x32xf32>
    %204 = vector.broadcast %133 : vector<1x32xf32> to vector<8x32xf32>
    %205 = arith.addf %203, %204 : vector<8x32xf32>
    %c0_82 = arith.constant 0 : index
    %c0_83 = arith.constant 0 : index
    %206 = vector.load %arg20[%c0_82, %c0_83] : memref<32x2xbf16, #tpu.memory_space<vmem>>, vector<32x2xbf16>
    %c0_84 = arith.constant 0 : index
    %c0_85 = arith.constant 0 : index
    %207 = vector.load %arg21[%c0_84, %c0_85] : memref<1x2xf32, #tpu.memory_space<vmem>>, vector<1x2xf32>
    %c0_86 = arith.constant 0 : index
    %c0_87 = arith.constant 0 : index
    %208 = vector.load %arg22[%c0_86, %c0_87] : memref<32x384xbf16, #tpu.memory_space<vmem>>, vector<32x384xbf16>
    %c0_88 = arith.constant 0 : index
    %c0_89 = arith.constant 0 : index
    %209 = vector.load %arg23[%c0_88, %c0_89] : memref<1x384xf32, #tpu.memory_space<vmem>>, vector<1x384xf32>
    %210 = arith.truncf %205 : vector<8x32xf32> to vector<8x32xbf16>
    %cst_90 = arith.constant dense<0.000000e+00> : vector<8x2xf32>
    %211 = tpu.matmul %210, %206, %cst_90 {dimension_numbers = #tpu.dot_dimension_numbers<[1], [0], [0], [1], [0, 0, 1, 1], [], []>} : vector<8x32xbf16>, vector<32x2xbf16>, vector<8x2xf32> -> vector<8x2xf32>
    %212 = vector.broadcast %207 : vector<1x2xf32> to vector<8x2xf32>
    %213 = arith.addf %211, %212 : vector<8x2xf32>
    %cst_91 = arith.constant dense<0xFF800000> : vector<8xf32>
    %214 = vector.multi_reduction <maximumf>, %213, %cst_91 [1] : vector<8x2xf32> to vector<8xf32>
    %215 = vector.shape_cast %214 : vector<8xf32> to vector<8x1xf32>
    %216 = vector.broadcast %215 : vector<8x1xf32> to vector<8x2xf32>
    %217 = arith.subf %213, %216 : vector<8x2xf32>
    %218 = math.exp %217 : vector<8x2xf32>
    %cst_92 = arith.constant dense<0.000000e+00> : vector<8xf32>
    %219 = vector.multi_reduction <add>, %218, %cst_92 [1] : vector<8x2xf32> to vector<8xf32>
    %220 = vector.shape_cast %219 : vector<8xf32> to vector<8x1xf32>
    %221 = tpu.reciprocal %220 {approx = true} : vector<8x1xf32> -> vector<8x1xf32>
    %222 = vector.broadcast %221 : vector<8x1xf32> to vector<8x2xf32>
    %223 = arith.mulf %218, %222 : vector<8x2xf32>
    %224 = arith.truncf %205 : vector<8x32xf32> to vector<8x32xbf16>
    %cst_93 = arith.constant dense<0.000000e+00> : vector<8x384xf32>
    %225 = tpu.matmul %224, %208, %cst_93 {dimension_numbers = #tpu.dot_dimension_numbers<[1], [0], [0], [1], [0, 0, 1, 1], [], []>} : vector<8x32xbf16>, vector<32x384xbf16>, vector<8x384xf32> -> vector<8x384xf32>
    %226 = vector.broadcast %209 : vector<1x384xf32> to vector<8x384xf32>
    %227 = arith.addf %225, %226 : vector<8x384xf32>
    %228 = vector.extract_strided_slice %227 {offsets = [0, 0], sizes = [8, 128], strides = [1, 1]} : vector<8x384xf32> to vector<8x128xf32>
    %229 = vector.extract_strided_slice %223 {offsets = [0, 0], sizes = [8, 1], strides = [1, 1]} : vector<8x2xf32> to vector<8x1xf32>
    %230 = vector.extract_strided_slice %227 {offsets = [0, 128], sizes = [8, 128], strides = [1, 1]} : vector<8x384xf32> to vector<8x128xf32>
    %231 = vector.broadcast %229 : vector<8x1xf32> to vector<8x128xf32>
    %232 = arith.mulf %231, %230 : vector<8x128xf32>
    %233 = arith.addf %228, %232 : vector<8x128xf32>
    %234 = vector.extract_strided_slice %223 {offsets = [0, 1], sizes = [8, 1], strides = [1, 1]} : vector<8x2xf32> to vector<8x1xf32>
    %235 = vector.extract_strided_slice %227 {offsets = [0, 256], sizes = [8, 128], strides = [1, 1]} : vector<8x384xf32> to vector<8x128xf32>
    %236 = vector.broadcast %234 : vector<8x1xf32> to vector<8x128xf32>
    %237 = arith.mulf %236, %235 : vector<8x128xf32>
    %238 = arith.addf %233, %237 : vector<8x128xf32>
    %cst_94 = arith.constant 5.000000e-01 : f32
    %239 = vector.broadcast %cst_94 : f32 to vector<8x128xf32>
    %240 = arith.mulf %239, %238 : vector<8x128xf32>
    %cst_95 = arith.constant 4.471500e-02 : f32
    %241 = vector.broadcast %cst_95 : f32 to vector<8x128xf32>
    %242 = arith.mulf %241, %238 : vector<8x128xf32>
    %243 = arith.mulf %242, %238 : vector<8x128xf32>
    %244 = arith.mulf %243, %238 : vector<8x128xf32>
    %245 = arith.addf %238, %244 : vector<8x128xf32>
    %cst_96 = arith.constant 0.797884583 : f32
    %246 = vector.broadcast %cst_96 : f32 to vector<8x128xf32>
    %247 = arith.mulf %246, %245 : vector<8x128xf32>
    %248 = math.tanh %247 : vector<8x128xf32>
    %cst_97 = arith.constant 1.000000e+00 : f32
    %249 = vector.broadcast %cst_97 : f32 to vector<8x128xf32>
    %250 = arith.addf %249, %248 : vector<8x128xf32>
    %251 = arith.mulf %240, %250 : vector<8x128xf32>
    %c0_98 = arith.constant 0 : index
    %c0_99 = arith.constant 0 : index
    %252 = vector.load %arg24[%c0_98, %c0_99] : memref<128x32xbf16, #tpu.memory_space<vmem>>, vector<128x32xbf16>
    %c0_100 = arith.constant 0 : index
    %c0_101 = arith.constant 0 : index
    %253 = vector.load %arg25[%c0_100, %c0_101] : memref<1x32xf32, #tpu.memory_space<vmem>>, vector<1x32xf32>
    %c0_102 = arith.constant 0 : index
    %c0_103 = arith.constant 0 : index
    %254 = vector.load %arg26[%c0_102, %c0_103] : memref<1x32xf32, #tpu.memory_space<vmem>>, vector<1x32xf32>
    %c0_104 = arith.constant 0 : index
    %c0_105 = arith.constant 0 : index
    %255 = vector.load %arg27[%c0_104, %c0_105] : memref<1x32xf32, #tpu.memory_space<vmem>>, vector<1x32xf32>
    %256 = arith.truncf %251 : vector<8x128xf32> to vector<8x128xbf16>
    %cst_106 = arith.constant dense<0.000000e+00> : vector<8x32xf32>
    %257 = tpu.matmul %256, %252, %cst_106 {dimension_numbers = #tpu.dot_dimension_numbers<[1], [0], [0], [1], [0, 0, 1, 1], [], []>} : vector<8x128xbf16>, vector<128x32xbf16>, vector<8x32xf32> -> vector<8x32xf32>
    %258 = vector.broadcast %253 : vector<1x32xf32> to vector<8x32xf32>
    %259 = arith.addf %257, %258 : vector<8x32xf32>
    %260 = arith.addf %205, %259 : vector<8x32xf32>
    %cst_107 = arith.constant dense<0.000000e+00> : vector<8xf32>
    %261 = vector.multi_reduction <add>, %260, %cst_107 [1] : vector<8x32xf32> to vector<8xf32>
    %262 = vector.shape_cast %261 : vector<8xf32> to vector<8x1xf32>
    %cst_108 = arith.constant 3.200000e+01 : f32
    %263 = vector.broadcast %cst_108 : f32 to vector<8x1xf32>
    %264 = arith.divf %262, %263 : vector<8x1xf32>
    %265 = vector.broadcast %264 : vector<8x1xf32> to vector<8x32xf32>
    %266 = arith.subf %260, %265 : vector<8x32xf32>
    %267 = arith.mulf %266, %266 : vector<8x32xf32>
    %cst_109 = arith.constant dense<0.000000e+00> : vector<8xf32>
    %268 = vector.multi_reduction <add>, %267, %cst_109 [1] : vector<8x32xf32> to vector<8xf32>
    %269 = vector.shape_cast %268 : vector<8xf32> to vector<8x1xf32>
    %cst_110 = arith.constant 3.200000e+01 : f32
    %270 = vector.broadcast %cst_110 : f32 to vector<8x1xf32>
    %271 = arith.divf %269, %270 : vector<8x1xf32>
    %cst_111 = arith.constant 9.99999996E-13 : f32
    %272 = vector.broadcast %cst_111 : f32 to vector<8x1xf32>
    %273 = arith.addf %271, %272 : vector<8x1xf32>
    %274 = math.rsqrt %273 : vector<8x1xf32>
    %275 = vector.broadcast %274 : vector<8x1xf32> to vector<8x32xf32>
    %276 = arith.mulf %266, %275 : vector<8x32xf32>
    %277 = vector.broadcast %254 : vector<1x32xf32> to vector<8x32xf32>
    %278 = arith.mulf %276, %277 : vector<8x32xf32>
    %279 = vector.broadcast %255 : vector<1x32xf32> to vector<8x32xf32>
    %280 = arith.addf %278, %279 : vector<8x32xf32>
    %c0_112 = arith.constant 0 : index
    %c0_113 = arith.constant 0 : index
    %281 = vector.load %arg28[%c0_112, %c0_113] : memref<32x32xbf16, #tpu.memory_space<vmem>>, vector<32x32xbf16>
    %c0_114 = arith.constant 0 : index
    %c0_115 = arith.constant 0 : index
    %282 = vector.load %arg29[%c0_114, %c0_115] : memref<1x32xf32, #tpu.memory_space<vmem>>, vector<1x32xf32>
    %c0_116 = arith.constant 0 : index
    %c0_117 = arith.constant 0 : index
    %283 = vector.load %arg30[%c0_116, %c0_117] : memref<32x128xbf16, #tpu.memory_space<vmem>>, vector<32x128xbf16>
    %c0_118 = arith.constant 0 : index
    %c0_119 = arith.constant 0 : index
    %284 = vector.load %arg31[%c0_118, %c0_119] : memref<1x128xf32, #tpu.memory_space<vmem>>, vector<1x128xf32>
    %285 = vector.extract_strided_slice %280 {offsets = [0, 0], sizes = [1, 32], strides = [1, 1]} : vector<8x32xf32> to vector<1x32xf32>
    %286 = arith.truncf %285 : vector<1x32xf32> to vector<1x32xbf16>
    %cst_120 = arith.constant dense<0.000000e+00> : vector<1x32xf32>
    %287 = tpu.matmul %286, %281, %cst_120 {dimension_numbers = #tpu.dot_dimension_numbers<[1], [0], [0], [1], [0, 0, 1, 1], [], []>} : vector<1x32xbf16>, vector<32x32xbf16>, vector<1x32xf32> -> vector<1x32xf32>
    %288 = arith.addf %287, %282 : vector<1x32xf32>
    %289 = math.tanh %288 : vector<1x32xf32>
    %290 = arith.truncf %289 : vector<1x32xf32> to vector<1x32xbf16>
    %cst_121 = arith.constant dense<0.000000e+00> : vector<1x128xf32>
    %291 = tpu.matmul %290, %283, %cst_121 {dimension_numbers = #tpu.dot_dimension_numbers<[1], [0], [0], [1], [0, 0, 1, 1], [], []>} : vector<1x32xbf16>, vector<32x128xbf16>, vector<1x128xf32> -> vector<1x128xf32>
    %292 = arith.addf %291, %284 : vector<1x128xf32>
    %293 = vector.shape_cast %292 : vector<1x128xf32> to vector<1x1x128xf32>
    %c0_122 = arith.constant 0 : index
    %c0_123 = arith.constant 0 : index
    %c0_124 = arith.constant 0 : index
    %294 = vector.load %arg32[%c0_122, %c0_123, %c0_124] : memref<1x1x128xf32, #tpu.memory_space<vmem>>, vector<1x1x128xf32>
    tpu.vector_store %arg32[%c0_122, %c0_123, %c0_124], %293 {strides = array<i32>} : memref<1x1x128xf32, #tpu.memory_space<vmem>>, vector<1x1x128xf32>,
    return
  }
  func.func @transform_0(%arg0: i32) -> (i32, i32, i32) {
    %c0_i32 = arith.constant 0 : i32
    %c0_i32_0 = arith.constant 0 : i32
    %c0_i32_1 = arith.constant 0 : i32
    return %arg0, %c0_i32, %c0_i32_0 : i32, i32, i32
  }
  func.func @transform_1(%arg0: i32) -> (i32, i32) {
    %c0_i32 = arith.constant 0 : i32
    %c0_i32_0 = arith.constant 0 : i32
    %c0_i32_1 = arith.constant 0 : i32
    return %c0_i32, %c0_i32_0 : i32, i32
  }
  func.func @transform_2(%arg0: i32) -> (i32, i32) {
    %c0_i32 = arith.constant 0 : i32
    %c0_i32_0 = arith.constant 0 : i32
    %c0_i32_1 = arith.constant 0 : i32
    return %c0_i32, %c0_i32_0 : i32, i32
  }
  func.func @transform_3(%arg0: i32) -> (i32, i32) {
    %c0_i32 = arith.constant 0 : i32
    %c0_i32_0 = arith.constant 0 : i32
    %c0_i32_1 = arith.constant 0 : i32
    return %c0_i32, %c0_i32_0 : i32, i32
  }
  func.func @transform_4(%arg0: i32) -> (i32, i32) {
    %c0_i32 = arith.constant 0 : i32
    %c0_i32_0 = arith.constant 0 : i32
    %c0_i32_1 = arith.constant 0 : i32
    return %c0_i32, %c0_i32_0 : i32, i32
  }
  func.func @transform_5(%arg0: i32) -> (i32, i32) {
    %c0_i32 = arith.constant 0 : i32
    %c0_i32_0 = arith.constant 0 : i32
    %c0_i32_1 = arith.constant 0 : i32
    return %c0_i32, %c0_i32_0 : i32, i32
  }
  func.func @transform_6(%arg0: i32) -> (i32, i32) {
    %c0_i32 = arith.constant 0 : i32
    %c0_i32_0 = arith.constant 0 : i32
    %c0_i32_1 = arith.constant 0 : i32
    return %c0_i32, %c0_i32_0 : i32, i32
  }
  func.func @transform_7(%arg0: i32) -> (i32, i32) {
    %c0_i32 = arith.constant 0 : i32
    %c0_i32_0 = arith.constant 0 : i32
    %c0_i32_1 = arith.constant 0 : i32
    return %c0_i32, %c0_i32_0 : i32, i32
  }
  func.func @transform_8(%arg0: i32) -> (i32, i32) {
    %c0_i32 = arith.constant 0 : i32
    %c0_i32_0 = arith.constant 0 : i32
    %c0_i32_1 = arith.constant 0 : i32
    return %c0_i32, %c0_i32_0 : i32, i32
  }
  func.func @transform_9(%arg0: i32) -> (i32, i32) {
    %c0_i32 = arith.constant 0 : i32
    %c0_i32_0 = arith.constant 0 : i32
    %c0_i32_1 = arith.constant 0 : i32
    return %c0_i32, %c0_i32_0 : i32, i32
  }
  func.func @transform_10(%arg0: i32) -> (i32, i32) {
    %c0_i32 = arith.constant 0 : i32
    %c0_i32_0 = arith.constant 0 : i32
    %c0_i32_1 = arith.constant 0 : i32
    return %c0_i32, %c0_i32_0 : i32, i32
  }
  func.func @transform_11(%arg0: i32) -> (i32, i32) {
    %c0_i32 = arith.constant 0 : i32
    %c0_i32_0 = arith.constant 0 : i32
    %c0_i32_1 = arith.constant 0 : i32
    return %c0_i32, %c0_i32_0 : i32, i32
  }
  func.func @transform_12(%arg0: i32) -> (i32, i32) {
    %c0_i32 = arith.constant 0 : i32
    %c0_i32_0 = arith.constant 0 : i32
    %c0_i32_1 = arith.constant 0 : i32
    return %c0_i32, %c0_i32_0 : i32, i32
  }
  func.func @transform_13(%arg0: i32) -> (i32, i32) {
    %c0_i32 = arith.constant 0 : i32
    %c0_i32_0 = arith.constant 0 : i32
    %c0_i32_1 = arith.constant 0 : i32
    return %c0_i32, %c0_i32_0 : i32, i32
  }
  func.func @transform_14(%arg0: i32) -> (i32, i32) {
    %c0_i32 = arith.constant 0 : i32
    %c0_i32_0 = arith.constant 0 : i32
    %c0_i32_1 = arith.constant 0 : i32
    return %c0_i32, %c0_i32_0 : i32, i32
  }
  func.func @transform_15(%arg0: i32) -> (i32, i32) {
    %c0_i32 = arith.constant 0 : i32
    %c0_i32_0 = arith.constant 0 : i32
    %c0_i32_1 = arith.constant 0 : i32
    return %c0_i32, %c0_i32_0 : i32, i32
  }
  func.func @transform_16(%arg0: i32) -> (i32, i32) {
    %c0_i32 = arith.constant 0 : i32
    %c0_i32_0 = arith.constant 0 : i32
    %c0_i32_1 = arith.constant 0 : i32
    return %c0_i32, %c0_i32_0 : i32, i32
  }
  func.func @transform_17(%arg0: i32) -> (i32, i32) {
    %c0_i32 = arith.constant 0 : i32
    %c0_i32_0 = arith.constant 0 : i32
    %c0_i32_1 = arith.constant 0 : i32
    return %c0_i32, %c0_i32_0 : i32, i32
  }
  func.func @transform_18(%arg0: i32) -> (i32, i32) {
    %c0_i32 = arith.constant 0 : i32
    %c0_i32_0 = arith.constant 0 : i32
    %c0_i32_1 = arith.constant 0 : i32
    return %c0_i32, %c0_i32_0 : i32, i32
  }
  func.func @transform_19(%arg0: i32) -> (i32, i32) {
    %c0_i32 = arith.constant 0 : i32
    %c0_i32_0 = arith.constant 0 : i32
    %c0_i32_1 = arith.constant 0 : i32
    return %c0_i32, %c0_i32_0 : i32, i32
  }
  func.func @transform_20(%arg0: i32) -> (i32, i32) {
    %c0_i32 = arith.constant 0 : i32
    %c0_i32_0 = arith.constant 0 : i32
    %c0_i32_1 = arith.constant 0 : i32
    return %c0_i32, %c0_i32_0 : i32, i32
  }
  func.func @transform_21(%arg0: i32) -> (i32, i32) {
    %c0_i32 = arith.constant 0 : i32
    %c0_i32_0 = arith.constant 0 : i32
    %c0_i32_1 = arith.constant 0 : i32
    return %c0_i32, %c0_i32_0 : i32, i32
  }
  func.func @transform_22(%arg0: i32) -> (i32, i32) {
    %c0_i32 = arith.constant 0 : i32
    %c0_i32_0 = arith.constant 0 : i32
    %c0_i32_1 = arith.constant 0 : i32
    return %c0_i32, %c0_i32_0 : i32, i32
  }
  func.func @transform_23(%arg0: i32) -> (i32, i32) {
    %c0_i32 = arith.constant 0 : i32
    %c0_i32_0 = arith.constant 0 : i32
    %c0_i32_1 = arith.constant 0 : i32
    return %c0_i32, %c0_i32_0 : i32, i32
  }
  func.func @transform_24(%arg0: i32) -> (i32, i32) {
    %c0_i32 = arith.constant 0 : i32
    %c0_i32_0 = arith.constant 0 : i32
    %c0_i32_1 = arith.constant 0 : i32
    return %c0_i32, %c0_i32_0 : i32, i32
  }
  func.func @transform_25(%arg0: i32) -> (i32, i32) {
    %c0_i32 = arith.constant 0 : i32
    %c0_i32_0 = arith.constant 0 : i32
    %c0_i32_1 = arith.constant 0 : i32
    return %c0_i32, %c0_i32_0 : i32, i32
  }
  func.func @transform_26(%arg0: i32) -> (i32, i32) {
    %c0_i32 = arith.constant 0 : i32
    %c0_i32_0 = arith.constant 0 : i32
    %c0_i32_1 = arith.constant 0 : i32
    return %c0_i32, %c0_i32_0 : i32, i32
  }
  func.func @transform_27(%arg0: i32) -> (i32, i32) {
    %c0_i32 = arith.constant 0 : i32
    %c0_i32_0 = arith.constant 0 : i32
    %c0_i32_1 = arith.constant 0 : i32
    return %c0_i32, %c0_i32_0 : i32, i32
  }
  func.func @transform_28(%arg0: i32) -> (i32, i32) {
    %c0_i32 = arith.constant 0 : i32
    %c0_i32_0 = arith.constant 0 : i32
    %c0_i32_1 = arith.constant 0 : i32
    return %c0_i32, %c0_i32_0 : i32, i32
  }
  func.func @transform_29(%arg0: i32) -> (i32, i32) {
    %c0_i32 = arith.constant 0 : i32
    %c0_i32_0 = arith.constant 0 : i32
    %c0_i32_1 = arith.constant 0 : i32
    return %c0_i32, %c0_i32_0 : i32, i32
  }
  func.func @transform_30(%arg0: i32) -> (i32, i32) {
    %c0_i32 = arith.constant 0 : i32
    %c0_i32_0 = arith.constant 0 : i32
    %c0_i32_1 = arith.constant 0 : i32
    return %c0_i32, %c0_i32_0 : i32, i32
  }
  func.func @transform_31(%arg0: i32) -> (i32, i32, i32) {
    %c0_i32 = arith.constant 0 : i32
    %c0_i32_0 = arith.constant 0 : i32
    %c0_i32_1 = arith.constant 0 : i32
    return %arg0, %c0_i32, %c0_i32_0 : i32, i32, i32
  }
}

</mosaic_0001>

<llo_original>
// kernel: moebert_forward.1
$region0: #{moebert_forward.1}
  #allocation0 [shape = 'u32[]', space=smem, size = 0x4, offset = 0x4, fixed_abs, tag = 'smem constant byte address 0x4 - core index']
  #allocation1 [shape = 'u32[144,128]{1,0:T(1,128)}', space=vmem, size = 0x12000, scoped, tag = 'internal scratch']
  %s0 = inlined_call_operand.smem [shape: u32[32], index: -1, kind: input, shape index: {}]
  %s1 = sld [smem:[%s0]]
  %s2 = scalar_lea.smem %s0, 1
  %s3 = sld [smem:[%s2]]
  %s4 = scalar_lea.smem %s0, 2
  %s5 = sld [smem:[%s4]]
  %s6 = scalar_lea.smem %s0, 3
  %s7 = sld [smem:[%s6]]
  %s8 = scalar_lea.smem %s0, 4
  %s9 = sld [smem:[%s8]]
  %s10 = scalar_lea.smem %s0, 5
  %s11 = sld [smem:[%s10]]
  %s12 = scalar_lea.smem %s0, 6
  %s13 = sld [smem:[%s12]]
  %s14 = scalar_lea.smem %s0, 7
  %s15 = sld [smem:[%s14]]
  %s16 = scalar_lea.smem %s0, 8
  %s17 = sld [smem:[%s16]]
  %s18 = scalar_lea.smem %s0, 9
  %s19 = sld [smem:[%s18]]
  %s20 = scalar_lea.smem %s0, 10
  %s21 = sld [smem:[%s20]]
  %s22 = scalar_lea.smem %s0, 11
  %s23 = sld [smem:[%s22]]
  %s24 = scalar_lea.smem %s0, 12
  %s25 = sld [smem:[%s24]]
  %s26 = scalar_lea.smem %s0, 13
  %s27 = sld [smem:[%s26]]
  %s28 = scalar_lea.smem %s0, 14
  %s29 = sld [smem:[%s28]]
  %s30 = scalar_lea.smem %s0, 15
  %s31 = sld [smem:[%s30]]
  %s32 = scalar_lea.smem %s0, 16
  %s33 = sld [smem:[%s32]]
  %s34 = scalar_lea.smem %s0, 17
  %s35 = sld [smem:[%s34]]
  %s36 = scalar_lea.smem %s0, 18
  %s37 = sld [smem:[%s36]]
  %s38 = scalar_lea.smem %s0, 19
  %s39 = sld [smem:[%s38]]
  %s40 = scalar_lea.smem %s0, 20
  %s41 = sld [smem:[%s40]]
  %s42 = scalar_lea.smem %s0, 21
  %s43 = sld [smem:[%s42]]
  %s44 = scalar_lea.smem %s0, 22
  %s45 = sld [smem:[%s44]]
  %s46 = scalar_lea.smem %s0, 23
  %s47 = sld [smem:[%s46]]
  %s48 = scalar_lea.smem %s0, 24
  %s49 = sld [smem:[%s48]]
  %s50 = scalar_lea.smem %s0, 25
  %s51 = sld [smem:[%s50]]
  %s52 = scalar_lea.smem %s0, 26
  %s53 = sld [smem:[%s52]]
  %s54 = scalar_lea.smem %s0, 27
  %s55 = sld [smem:[%s54]]
  %s56 = scalar_lea.smem %s0, 28
  %s57 = sld [smem:[%s56]]
  %s58 = scalar_lea.smem %s0, 29
  %s59 = sld [smem:[%s58]]
  %s60 = scalar_lea.smem %s0, 30
  %s61 = sld [smem:[%s60]]
  %s62 = scalar_lea.smem %s0, 31
  %s63 = sld [smem:[%s62]]
  %s64 = sld [smem:[#allocation0]]
  $region189: #{moebert_forward.1} parent=0
    _
  %s66 = ssub.s32 1, %s64
  %s67 = scalar_select 0, %s66, %s64
  $region1: #{moebert_forward.1} parent=0
    #allocation2 [shape = 'u8[512]{0}', space=vmem, size = 0x400, scoped, tag = 'input window, operand 2, single buffered']
    #allocation3 [shape = 's32[2]{0}', space=sflag, size = 0x8, scoped, tag = 'scoped memory for moebert_forward.1']
    #allocation4 [shape = 's32[2]{0}', space=sflag, size = 0x8, scoped, tag = 'scoped memory for moebert_forward.1']
    #allocation5 [shape = 'u8[512]{0}', space=vmem, size = 0x400, scoped, tag = 'input window, operand 4, single buffered']
    #allocation6 [shape = 's32[1]{0}', space=sflag, size = 0x4, scoped, tag = 'scoped memory for moebert_forward.1']
    #allocation7 [shape = 'u8[512]{0}', space=vmem, size = 0x400, scoped, tag = 'input window, operand 5, single buffered']
    #allocation8 [shape = 'u8[512]{0}', space=vmem, size = 0x400, scoped, tag = 'input window, operand 6, single buffered']
    #allocation9 [shape = 's32[1]{0}', space=sflag, size = 0x4, scoped, tag = 'scoped memory for moebert_forward.1']
    #allocation10 [shape = 'u8[512]{0}', space=vmem, size = 0x400, scoped, tag = 'input window, operand 8, single buffered']
    #allocation11 [shape = 'u8[512]{0}', space=vmem, size = 0x400, scoped, tag = 'input window, operand 10, single buffered']
    #allocation12 [shape = 's32[1]{0}', space=sflag, size = 0x4, scoped, tag = 'scoped memory for moebert_forward.1']
    #allocation13 [shape = 'u8[512]{0}', space=vmem, size = 0x400, scoped, tag = 'input window, operand 11, single buffered']
    #allocation14 [shape = 'u8[512]{0}', space=vmem, size = 0x400, scoped, tag = 'input window, operand 12, single buffered']
    #allocation15 [shape = 's32[1]{0}', space=sflag, size = 0x4, scoped, tag = 'scoped memory for moebert_forward.1']
    #allocation16 [shape = 'u8[1024]{0}', space=vmem, size = 0x400, scoped, tag = 'output window, operand 0']
    %68 = vsyncpa [#allocation3], 0
    %69 = vsyncpa [#allocation6], 0
    %70 = vsyncpa [#allocation9], 0
    %71 = vsyncpa [#allocation12], 0
    %72 = vsyncpa [#allocation15], 0
    %73 = vsyncpa [#allocation4], 0
    %s74 = scalar_lea.sflag [#allocation4], 1
    %75 = vsyncpa %s74, 0
    loop: start=0, step=1, limit=4
    $region2: #{moebert_forward.1} parent=1 // loop_pre_header
      _
    $region3: #{moebert_forward.1} parent=1 // loop_header
      %s77 = sphi 0, %s81
      %p78 = scmp.ge.s32.totalorder %s77, 4
      %s87 = sphi 0, %s89
      %s90 = sphi 0, %s87
      %s91 = sphi 0, %s90
      %s107 = sphi 0, %s91
      %s111 = sphi 0, %s111
      %s113 = sphi 0, %s111
      %s114 = sphi 0, %s113
      %s128 = sphi 0, %s114
      %s132 = sphi 0, %s132
      %s134 = sphi 0, %s132
      %s135 = sphi 0, %s134
      %s149 = sphi 0, %s135
      %s153 = sphi 0, %s153
      %s155 = sphi 0, %s153
      %s156 = sphi 0, %s155
      %s170 = sphi 0, %s156
      %s174 = sphi 0, %s174
      %s176 = sphi 0, %s174
      %s177 = sphi 0, %s176
      %s191 = sphi 0, %s177
      %s195 = sphi 0, %s195
      %s197 = sphi 0, %s195
      %s198 = sphi 0, %s197
      %s212 = sphi 0, %s198
      %s216 = sphi 0, %s216
      %s218 = sphi 0, %s216
      %s219 = sphi 0, %s218
      %s233 = sphi 0, %s219
      %s237 = sphi 0, %s237
      %s239 = sphi 0, %s237
      %s240 = sphi 0, %s239
      %s254 = sphi 0, %s240
      %s258 = sphi 0, %s258
      %s260 = sphi 0, %s258
      %s261 = sphi 0, %s260
      %s275 = sphi 0, %s261
      %s279 = sphi 0, %s279
      %s281 = sphi 0, %s279
      %s282 = sphi 0, %s281
      %s296 = sphi 0, %s282
      %s300 = sphi 0, %s300
      %s302 = sphi 0, %s300
      %s303 = sphi 0, %s302
      %s317 = sphi 0, %s303
      %s321 = sphi 0, %s321
      %s323 = sphi 0, %s321
      %s324 = sphi 0, %s323
      %s338 = sphi 0, %s324
      %s342 = sphi 0, %s342
      %s344 = sphi 0, %s342
      %s345 = sphi 0, %s344
      %s359 = sphi 0, %s345
      %s363 = sphi 0, %s363
      %s365 = sphi 0, %s363
      %s366 = sphi 0, %s365
      %s380 = sphi 0, %s366
      %s384 = sphi 0, %s384
      %s386 = sphi 0, %s384
      %s387 = sphi 0, %s386
      %s401 = sphi 0, %s387
      %s405 = sphi 0, %s405
      %s407 = sphi 0, %s405
      %s408 = sphi 0, %s407
      %s422 = sphi 0, %s408
      %s426 = sphi 0, %s426
      %s428 = sphi 0, %s426
      %s429 = sphi 0, %s428
      %s443 = sphi 0, %s429
      %s447 = sphi 0, %s447
      %s449 = sphi 0, %s447
      %s450 = sphi 0, %s449
      %s464 = sphi 0, %s450
      %s468 = sphi 0, %s468
      %s470 = sphi 0, %s468
      %s471 = sphi 0, %s470
      %s485 = sphi 0, %s471
      %s489 = sphi 0, %s489
      %s491 = sphi 0, %s489
      %s492 = sphi 0, %s491
      %s506 = sphi 0, %s492
      %s510 = sphi 0, %s510
      %s512 = sphi 0, %s510
      %s513 = sphi 0, %s512
      %s527 = sphi 0, %s513
      %s531 = sphi 0, %s531
      %s533 = sphi 0, %s531
      %s534 = sphi 0, %s533
      %s548 = sphi 0, %s534
      %s552 = sphi 0, %s552
      %s554 = sphi 0, %s552
      %s555 = sphi 0, %s554
      %s569 = sphi 0, %s555
      %s573 = sphi 0, %s573
      %s575 = sphi 0, %s573
      %s576 = sphi 0, %s575
      %s590 = sphi 0, %s576
      %s594 = sphi 0, %s594
      %s596 = sphi 0, %s594
      %s597 = sphi 0, %s596
      %s611 = sphi 0, %s597
      %s615 = sphi 0, %s615
      %s617 = sphi 0, %s615
      %s618 = sphi 0, %s617
      %s632 = sphi 0, %s618
      %s636 = sphi 0, %s636
      %s638 = sphi 0, %s636
      %s639 = sphi 0, %s638
      %s653 = sphi 0, %s639
      %s657 = sphi 0, %s657
      %s659 = sphi 0, %s657
      %s660 = sphi 0, %s659
      %s674 = sphi 0, %s660
      %s678 = sphi 0, %s678
      %s680 = sphi 0, %s678
      %s681 = sphi 0, %s680
      %s695 = sphi 0, %s681
      %s699 = sphi 0, %s699
      %s701 = sphi 0, %s699
      %s702 = sphi 0, %s701
      %s716 = sphi 0, %s702
      %s720 = sphi 0, %s720
      %s722 = sphi 0, %s720
      %s723 = sphi 0, %s722
      %s737 = sphi 0, %s723
      %s743 = sphi 0, %s745
      %s746 = sphi 0, %s743
      %s747 = sphi 0, %s746
      %s763 = sphi 0, %s747
    $region4: #{moebert_forward.1} parent=1 // loop_header_branch
      %80 = sbr.rel (%p78) target = $region8
    $region5: #{moebert_forward.1} parent=1 // loop_body
      %s82 = ssub.s32 %s77, 1
      %s83 = ssub.s32 %s77, 2
      %s84 = sadd.s32 %s77, 1
      %s85 = ssub.s32 %s77, %s84
      %p86 = scmp.eq.s32.totalorder %s85, 0
      %s88 = sadd.s32 %s87, 1
      %s89 = scalar_select %p86, %s87, %s88
      %p92 = pneg %p86
      %p93 = scmp.eq.s32.totalorder %s77, 1
      %p94 = por %p92, %p93
      %p95 = scmp.ne.s32.totalorder %s87, %s90
      %p96 = scmp.eq.s32.totalorder %s77, 0
      %p97 = por %p95, %p96
      %p98 = scmp.ne.s32.totalorder %s87, %s90
      %p99 = scmp.eq.s32.totalorder %s82, 1
      %p100 = por %p98, %p99
      %p101 = scmp.ne.s32.totalorder %s90, %s91
      %p102 = scmp.eq.s32.totalorder %s82, 0
      %p103 = por %p101, %p102
      %p104 = scmp.ne.s32.totalorder %s90, %s91
      %p105 = scmp.eq.s32.totalorder %s83, 1
      %p106 = por %p104, %p105
      %p108 = scmp.ne.s32.totalorder %s91, %s107
      %p109 = scmp.eq.s32.totalorder %s83, 0
      %p110 = por %p108, %p109
      %s112 = sadd.s32 %s111, 1
      %p115 = scmp.eq.s32.totalorder %s77, 1
      %p116 = scmp.ne.s32.totalorder %s111, %s113
      %p117 = scmp.eq.s32.totalorder %s77, 0
      %p118 = por %p116, %p117
      %p119 = scmp.ne.s32.totalorder %s111, %s113
      %p120 = scmp.eq.s32.totalorder %s82, 1
      %p121 = por %p119, %p120
      %p122 = scmp.ne.s32.totalorder %s113, %s114
      %p123 = scmp.eq.s32.totalorder %s82, 0
      %p124 = por %p122, %p123
      %p125 = scmp.ne.s32.totalorder %s113, %s114
      %p126 = scmp.eq.s32.totalorder %s83, 1
      %p127 = por %p125, %p126
      %p129 = scmp.ne.s32.totalorder %s114, %s128
      %p130 = scmp.eq.s32.totalorder %s83, 0
      %p131 = por %p129, %p130
      %s133 = sadd.s32 %s132, 1
      %p136 = scmp.eq.s32.totalorder %s77, 1
      %p137 = scmp.ne.s32.totalorder %s132, %s134
      %p138 = scmp.eq.s32.totalorder %s77, 0
      %p139 = por %p137, %p138
      %p140 = scmp.ne.s32.totalorder %s132, %s134
      %p141 = scmp.eq.s32.totalorder %s82, 1
      %p142 = por %p140, %p141
      %p143 = scmp.ne.s32.totalorder %s134, %s135
      %p144 = scmp.eq.s32.totalorder %s82, 0
      %p145 = por %p143, %p144
      %p146 = scmp.ne.s32.totalorder %s134, %s135
      %p147 = scmp.eq.s32.totalorder %s83, 1
      %p148 = por %p146, %p147
      %p150 = scmp.ne.s32.totalorder %s135, %s149
      %p151 = scmp.eq.s32.totalorder %s83, 0
      %p152 = por %p150, %p151
      %s154 = sadd.s32 %s153, 1
      %p157 = scmp.eq.s32.totalorder %s77, 1
      %p158 = scmp.ne.s32.totalorder %s153, %s155
      %p159 = scmp.eq.s32.totalorder %s77, 0
      %p160 = por %p158, %p159
      %p161 = scmp.ne.s32.totalorder %s153, %s155
      %p162 = scmp.eq.s32.totalorder %s82, 1
      %p163 = por %p161, %p162
      %p164 = scmp.ne.s32.totalorder %s155, %s156
      %p165 = scmp.eq.s32.totalorder %s82, 0
      %p166 = por %p164, %p165
      %p167 = scmp.ne.s32.totalorder %s155, %s156
      %p168 = scmp.eq.s32.totalorder %s83, 1
      %p169 = por %p167, %p168
      %p171 = scmp.ne.s32.totalorder %s156, %s170
      %p172 = scmp.eq.s32.totalorder %s83, 0
      %p173 = por %p171, %p172
      %s175 = sadd.s32 %s174, 1
      %p178 = scmp.eq.s32.totalorder %s77, 1
      %p179 = scmp.ne.s32.totalorder %s174, %s176
      %p180 = scmp.eq.s32.totalorder %s77, 0
      %p181 = por %p179, %p180
      %p182 = scmp.ne.s32.totalorder %s174, %s176
      %p183 = scmp.eq.s32.totalorder %s82, 1
      %p184 = por %p182, %p183
      %p185 = scmp.ne.s32.totalorder %s176, %s177
      %p186 = scmp.eq.s32.totalorder %s82, 0
      %p187 = por %p185, %p186
      %p188 = scmp.ne.s32.totalorder %s176, %s177
      %p189 = scmp.eq.s32.totalorder %s83, 1
      %p190 = por %p188, %p189
      %p192 = scmp.ne.s32.totalorder %s177, %s191
      %p193 = scmp.eq.s32.totalorder %s83, 0
      %p194 = por %p192, %p193
      %s196 = sadd.s32 %s195, 1
      %p199 = scmp.eq.s32.totalorder %s77, 1
      %p200 = scmp.ne.s32.totalorder %s195, %s197
      %p201 = scmp.eq.s32.totalorder %s77, 0
      %p202 = por %p200, %p201
      %p203 = scmp.ne.s32.totalorder %s195, %s197
      %p204 = scmp.eq.s32.totalorder %s82, 1
      %p205 = por %p203, %p204
      %p206 = scmp.ne.s32.totalorder %s197, %s198
      %p207 = scmp.eq.s32.totalorder %s82, 0
      %p208 = por %p206, %p207
      %p209 = scmp.ne.s32.totalorder %s197, %s198
      %p210 = scmp.eq.s32.totalorder %s83, 1
      %p211 = por %p209, %p210
      %p213 = scmp.ne.s32.totalorder %s198, %s212
      %p214 = scmp.eq.s32.totalorder %s83, 0
      %p215 = por %p213, %p214
      %s217 = sadd.s32 %s216, 1
      %p220 = scmp.eq.s32.totalorder %s77, 1
      %p221 = scmp.ne.s32.totalorder %s216, %s218
      %p222 = scmp.eq.s32.totalorder %s77, 0
      %p223 = por %p221, %p222
      %p224 = scmp.ne.s32.totalorder %s216, %s218
      %p225 = scmp.eq.s32.totalorder %s82, 1
      %p226 = por %p224, %p225
      %p227 = scmp.ne.s32.totalorder %s218, %s219
      %p228 = scmp.eq.s32.totalorder %s82, 0
      %p229 = por %p227, %p228
      %p230 = scmp.ne.s32.totalorder %s218, %s219
      %p231 = scmp.eq.s32.totalorder %s83, 1
      %p232 = por %p230, %p231
      %p234 = scmp.ne.s32.totalorder %s219, %s233
      %p235 = scmp.eq.s32.totalorder %s83, 0
      %p236 = por %p234, %p235
      %s238 = sadd.s32 %s237, 1
      %p241 = scmp.eq.s32.totalorder %s77, 1
      %p242 = scmp.ne.s32.totalorder %s237, %s239
      %p243 = scmp.eq.s32.totalorder %s77, 0
      %p244 = por %p242, %p243
      %p245 = scmp.ne.s32.totalorder %s237, %s239
      %p246 = scmp.eq.s32.totalorder %s82, 1
      %p247 = por %p245, %p246
      %p248 = scmp.ne.s32.totalorder %s239, %s240
      %p249 = scmp.eq.s32.totalorder %s82, 0
      %p250 = por %p248, %p249
      %p251 = scmp.ne.s32.totalorder %s239, %s240
      %p252 = scmp.eq.s32.totalorder %s83, 1
      %p253 = por %p251, %p252
      %p255 = scmp.ne.s32.totalorder %s240, %s254
      %p256 = scmp.eq.s32.totalorder %s83, 0
      %p257 = por %p255, %p256
      %s259 = sadd.s32 %s258, 1
      %p262 = scmp.eq.s32.totalorder %s77, 1
      %p263 = scmp.ne.s32.totalorder %s258, %s260
      %p264 = scmp.eq.s32.totalorder %s77, 0
      %p265 = por %p263, %p264
      %p266 = scmp.ne.s32.totalorder %s258, %s260
      %p267 = scmp.eq.s32.totalorder %s82, 1
      %p268 = por %p266, %p267
      %p269 = scmp.ne.s32.totalorder %s260, %s261
      %p270 = scmp.eq.s32.totalorder %s82, 0
      %p271 = por %p269, %p270
      %p272 = scmp.ne.s32.totalorder %s260, %s261
      %p273 = scmp.eq.s32.totalorder %s83, 1
      %p274 = por %p272, %p273
      %p276 = scmp.ne.s32.totalorder %s261, %s275
      %p277 = scmp.eq.s32.totalorder %s83, 0
      %p278 = por %p276, %p277
      %s280 = sadd.s32 %s279, 1
      %p283 = scmp.eq.s32.totalorder %s77, 1
      %p284 = scmp.ne.s32.totalorder %s279, %s281
      %p285 = scmp.eq.s32.totalorder %s77, 0
      %p286 = por %p284, %p285
      %p287 = scmp.ne.s32.totalorder %s279, %s281
      %p288 = scmp.eq.s32.totalorder %s82, 1
      %p289 = por %p287, %p288
      %p290 = scmp.ne.s32.totalorder %s281, %s282
      %p291 = scmp.eq.s32.totalorder %s82, 0
      %p292 = por %p290, %p291
      %p293 = scmp.ne.s32.totalorder %s281, %s282
      %p294 = scmp.eq.s32.totalorder %s83, 1
      %p295 = por %p293, %p294
      %p297 = scmp.ne.s32.totalorder %s282, %s296
      %p298 = scmp.eq.s32.totalorder %s83, 0
      %p299 = por %p297, %p298
      %s301 = sadd.s32 %s300, 1
      %p304 = scmp.eq.s32.totalorder %s77, 1
      %p305 = scmp.ne.s32.totalorder %s300, %s302
      %p306 = scmp.eq.s32.totalorder %s77, 0
      %p307 = por %p305, %p306
      %p308 = scmp.ne.s32.totalorder %s300, %s302
      %p309 = scmp.eq.s32.totalorder %s82, 1
      %p310 = por %p308, %p309
      %p311 = scmp.ne.s32.totalorder %s302, %s303
      %p312 = scmp.eq.s32.totalorder %s82, 0
      %p313 = por %p311, %p312
      %p314 = scmp.ne.s32.totalorder %s302, %s303
      %p315 = scmp.eq.s32.totalorder %s83, 1
      %p316 = por %p314, %p315
      %p318 = scmp.ne.s32.totalorder %s303, %s317
      %p319 = scmp.eq.s32.totalorder %s83, 0
      %p320 = por %p318, %p319
      %s322 = sadd.s32 %s321, 1
      %p325 = scmp.eq.s32.totalorder %s77, 1
      %p326 = scmp.ne.s32.totalorder %s321, %s323
      %p327 = scmp.eq.s32.totalorder %s77, 0
      %p328 = por %p326, %p327
      %p329 = scmp.ne.s32.totalorder %s321, %s323
      %p330 = scmp.eq.s32.totalorder %s82, 1
      %p331 = por %p329, %p330
      %p332 = scmp.ne.s32.totalorder %s323, %s324
      %p333 = scmp.eq.s32.totalorder %s82, 0
      %p334 = por %p332, %p333
      %p335 = scmp.ne.s32.totalorder %s323, %s324
      %p336 = scmp.eq.s32.totalorder %s83, 1
      %p337 = por %p335, %p336
      %p339 = scmp.ne.s32.totalorder %s324, %s338
      %p340 = scmp.eq.s32.totalorder %s83, 0
      %p341 = por %p339, %p340
      %s343 = sadd.s32 %s342, 1
      %p346 = scmp.eq.s32.totalorder %s77, 1
      %p347 = scmp.ne.s32.totalorder %s342, %s344
      %p348 = scmp.eq.s32.totalorder %s77, 0
      %p349 = por %p347, %p348
      %p350 = scmp.ne.s32.totalorder %s342, %s344
      %p351 = scmp.eq.s32.totalorder %s82, 1
      %p352 = por %p350, %p351
      %p353 = scmp.ne.s32.totalorder %s344, %s345
      %p354 = scmp.eq.s32.totalorder %s82, 0
      %p355 = por %p353, %p354
      %p356 = scmp.ne.s32.totalorder %s344, %s345
      %p357 = scmp.eq.s32.totalorder %s83, 1
      %p358 = por %p356, %p357
      %p360 = scmp.ne.s32.totalorder %s345, %s359
      %p361 = scmp.eq.s32.totalorder %s83, 0
      %p362 = por %p360, %p361
      %s364 = sadd.s32 %s363, 1
      %p367 = scmp.eq.s32.totalorder %s77, 1
      %p368 = scmp.ne.s32.totalorder %s363, %s365
      %p369 = scmp.eq.s32.totalorder %s77, 0
      %p370 = por %p368, %p369
      %p371 = scmp.ne.s32.totalorder %s363, %s365
      %p372 = scmp.eq.s32.totalorder %s82, 1
      %p373 = por %p371, %p372
      %p374 = scmp.ne.s32.totalorder %s365, %s366
      %p375 = scmp.eq.s32.totalorder %s82, 0
      %p376 = por %p374, %p375
      %p377 = scmp.ne.s32.totalorder %s365, %s366
      %p378 = scmp.eq.s32.totalorder %s83, 1
      %p379 = por %p377, %p378
      %p381 = scmp.ne.s32.totalorder %s366, %s380
      %p382 = scmp.eq.s32.totalorder %s83, 0
      %p383 = por %p381, %p382
      %s385 = sadd.s32 %s384, 1
      %p388 = scmp.eq.s32.totalorder %s77, 1
      %p389 = scmp.ne.s32.totalorder %s384, %s386
      %p390 = scmp.eq.s32.totalorder %s77, 0
      %p391 = por %p389, %p390
      %p392 = scmp.ne.s32.totalorder %s384, %s386
      %p393 = scmp.eq.s32.totalorder %s82, 1
      %p394 = por %p392, %p393
      %p395 = scmp.ne.s32.totalorder %s386, %s387
      %p396 = scmp.eq.s32.totalorder %s82, 0
      %p397 = por %p395, %p396
      %p398 = scmp.ne.s32.totalorder %s386, %s387
      %p399 = scmp.eq.s32.totalorder %s83, 1
      %p400 = por %p398, %p399
      %p402 = scmp.ne.s32.totalorder %s387, %s401
      %p403 = scmp.eq.s32.totalorder %s83, 0
      %p404 = por %p402, %p403
      %s406 = sadd.s32 %s405, 1
      %p409 = scmp.eq.s32.totalorder %s77, 1
      %p410 = scmp.ne.s32.totalorder %s405, %s407
      %p411 = scmp.eq.s32.totalorder %s77, 0
      %p412 = por %p410, %p411
      %p413 = scmp.ne.s32.totalorder %s405, %s407
      %p414 = scmp.eq.s32.totalorder %s82, 1
      %p415 = por %p413, %p414
      %p416 = scmp.ne.s32.totalorder %s407, %s408
      %p417 = scmp.eq.s32.totalorder %s82, 0
      %p418 = por %p416, %p417
      %p419 = scmp.ne.s32.totalorder %s407, %s408
      %p420 = scmp.eq.s32.totalorder %s83, 1
      %p421 = por %p419, %p420
      %p423 = scmp.ne.s32.totalorder %s408, %s422
      %p424 = scmp.eq.s32.totalorder %s83, 0
      %p425 = por %p423, %p424
      %s427 = sadd.s32 %s426, 1
      %p430 = scmp.eq.s32.totalorder %s77, 1
      %p431 = scmp.ne.s32.totalorder %s426, %s428
      %p432 = scmp.eq.s32.totalorder %s77, 0
      %p433 = por %p431, %p432
      %p434 = scmp.ne.s32.totalorder %s426, %s428
      %p435 = scmp.eq.s32.totalorder %s82, 1
      %p436 = por %p434, %p435
      %p437 = scmp.ne.s32.totalorder %s428, %s429
      %p438 = scmp.eq.s32.totalorder %s82, 0
      %p439 = por %p437, %p438
      %p440 = scmp.ne.s32.totalorder %s428, %s429
      %p441 = scmp.eq.s32.totalorder %s83, 1
      %p442 = por %p440, %p441
      %p444 = scmp.ne.s32.totalorder %s429, %s443
      %p445 = scmp.eq.s32.totalorder %s83, 0
      %p446 = por %p444, %p445
      %s448 = sadd.s32 %s447, 1
      %p451 = scmp.eq.s32.totalorder %s77, 1
      %p452 = scmp.ne.s32.totalorder %s447, %s449
      %p453 = scmp.eq.s32.totalorder %s77, 0
      %p454 = por %p452, %p453
      %p455 = scmp.ne.s32.totalorder %s447, %s449
      %p456 = scmp.eq.s32.totalorder %s82, 1
      %p457 = por %p455, %p456
      %p458 = scmp.ne.s32.totalorder %s449, %s450
      %p459 = scmp.eq.s32.totalorder %s82, 0
      %p460 = por %p458, %p459
      %p461 = scmp.ne.s32.totalorder %s449, %s450
      %p462 = scmp.eq.s32.totalorder %s83, 1
      %p463 = por %p461, %p462
      %p465 = scmp.ne.s32.totalorder %s450, %s464
      %p466 = scmp.eq.s32.totalorder %s83, 0
      %p467 = por %p465, %p466
      %s469 = sadd.s32 %s468, 1
      %p472 = scmp.eq.s32.totalorder %s77, 1
      %p473 = scmp.ne.s32.totalorder %s468, %s470
      %p474 = scmp.eq.s32.totalorder %s77, 0
      %p475 = por %p473, %p474
      %p476 = scmp.ne.s32.totalorder %s468, %s470
      %p477 = scmp.eq.s32.totalorder %s82, 1
      %p478 = por %p476, %p477
      %p479 = scmp.ne.s32.totalorder %s470, %s471
      %p480 = scmp.eq.s32.totalorder %s82, 0
      %p481 = por %p479, %p480
      %p482 = scmp.ne.s32.totalorder %s470, %s471
      %p483 = scmp.eq.s32.totalorder %s83, 1
      %p484 = por %p482, %p483
      %p486 = scmp.ne.s32.totalorder %s471, %s485
      %p487 = scmp.eq.s32.totalorder %s83, 0
      %p488 = por %p486, %p487
      %s490 = sadd.s32 %s489, 1
      %p493 = scmp.eq.s32.totalorder %s77, 1
      %p494 = scmp.ne.s32.totalorder %s489, %s491
      %p495 = scmp.eq.s32.totalorder %s77, 0
      %p496 = por %p494, %p495
      %p497 = scmp.ne.s32.totalorder %s489, %s491
      %p498 = scmp.eq.s32.totalorder %s82, 1
      %p499 = por %p497, %p498
      %p500 = scmp.ne.s32.totalorder %s491, %s492
      %p501 = scmp.eq.s32.totalorder %s82, 0
      %p502 = por %p500, %p501
      %p503 = scmp.ne.s32.totalorder %s491, %s492
      %p504 = scmp.eq.s32.totalorder %s83, 1
      %p505 = por %p503, %p504
      %p507 = scmp.ne.s32.totalorder %s492, %s506
      %p508 = scmp.eq.s32.totalorder %s83, 0
      %p509 = por %p507, %p508
      %s511 = sadd.s32 %s510, 1
      %p514 = scmp.eq.s32.totalorder %s77, 1
      %p515 = scmp.ne.s32.totalorder %s510, %s512
      %p516 = scmp.eq.s32.totalorder %s77, 0
      %p517 = por %p515, %p516
      %p518 = scmp.ne.s32.totalorder %s510, %s512
      %p519 = scmp.eq.s32.totalorder %s82, 1
      %p520 = por %p518, %p519
      %p521 = scmp.ne.s32.totalorder %s512, %s513
      %p522 = scmp.eq.s32.totalorder %s82, 0
      %p523 = por %p521, %p522
      %p524 = scmp.ne.s32.totalorder %s512, %s513
      %p525 = scmp.eq.s32.totalorder %s83, 1
      %p526 = por %p524, %p525
      %p528 = scmp.ne.s32.totalorder %s513, %s527
      %p529 = scmp.eq.s32.totalorder %s83, 0
      %p530 = por %p528, %p529
      %s532 = sadd.s32 %s531, 1
      %p535 = scmp.eq.s32.totalorder %s77, 1
      %p536 = scmp.ne.s32.totalorder %s531, %s533
      %p537 = scmp.eq.s32.totalorder %s77, 0
      %p538 = por %p536, %p537
      %p539 = scmp.ne.s32.totalorder %s531, %s533
      %p540 = scmp.eq.s32.totalorder %s82, 1
      %p541 = por %p539, %p540
      %p542 = scmp.ne.s32.totalorder %s533, %s534
      %p543 = scmp.eq.s32.totalorder %s82, 0
      %p544 = por %p542, %p543
      %p545 = scmp.ne.s32.totalorder %s533, %s534
      %p546 = scmp.eq.s32.totalorder %s83, 1
      %p547 = por %p545, %p546
      %p549 = scmp.ne.s32.totalorder %s534, %s548
      %p550 = scmp.eq.s32.totalorder %s83, 0
      %p551 = por %p549, %p550
      %s553 = sadd.s32 %s552, 1
      %p556 = scmp.eq.s32.totalorder %s77, 1
      %p557 = scmp.ne.s32.totalorder %s552, %s554
      %p558 = scmp.eq.s32.totalorder %s77, 0
      %p559 = por %p557, %p558
      %p560 = scmp.ne.s32.totalorder %s552, %s554
      %p561 = scmp.eq.s32.totalorder %s82, 1
      %p562 = por %p560, %p561
      %p563 = scmp.ne.s32.totalorder %s554, %s555
      %p564 = scmp.eq.s32.totalorder %s82, 0
      %p565 = por %p563, %p564
      %p566 = scmp.ne.s32.totalorder %s554, %s555
      %p567 = scmp.eq.s32.totalorder %s83, 1
      %p568 = por %p566, %p567
      %p570 = scmp.ne.s32.totalorder %s555, %s569
      %p571 = scmp.eq.s32.totalorder %s83, 0
      %p572 = por %p570, %p571
      %s574 = sadd.s32 %s573, 1
      %p577 = scmp.eq.s32.totalorder %s77, 1
      %p578 = scmp.ne.s32.totalorder %s573, %s575
      %p579 = scmp.eq.s32.totalorder %s77, 0
      %p580 = por %p578, %p579
      %p581 = scmp.ne.s32.totalorder %s573, %s575
      %p582 = scmp.eq.s32.totalorder %s82, 1
      %p583 = por %p581, %p582
      %p584 = scmp.ne.s32.totalorder %s575, %s576
      %p585 = scmp.eq.s32.totalorder %s82, 0
      %p586 = por %p584, %p585
      %p587 = scmp.ne.s32.totalorder %s575, %s576
      %p588 = scmp.eq.s32.totalorder %s83, 1
      %p589 = por %p587, %p588
      %p591 = scmp.ne.s32.totalorder %s576, %s590
      %p592 = scmp.eq.s32.totalorder %s83, 0
      %p593 = por %p591, %p592
      %s595 = sadd.s32 %s594, 1
      %p598 = scmp.eq.s32.totalorder %s77, 1
      %p599 = scmp.ne.s32.totalorder %s594, %s596
      %p600 = scmp.eq.s32.totalorder %s77, 0
      %p601 = por %p599, %p600
      %p602 = scmp.ne.s32.totalorder %s594, %s596
      %p603 = scmp.eq.s32.totalorder %s82, 1
      %p604 = por %p602, %p603
      %p605 = scmp.ne.s32.totalorder %s596, %s597
      %p606 = scmp.eq.s32.totalorder %s82, 0
      %p607 = por %p605, %p606
      %p608 = scmp.ne.s32.totalorder %s596, %s597
      %p609 = scmp.eq.s32.totalorder %s83, 1
      %p610 = por %p608, %p609
      %p612 = scmp.ne.s32.totalorder %s597, %s611
      %p613 = scmp.eq.s32.totalorder %s83, 0
      %p614 = por %p612, %p613
      %s616 = sadd.s32 %s615, 1
      %p619 = scmp.eq.s32.totalorder %s77, 1
      %p620 = scmp.ne.s32.totalorder %s615, %s617
      %p621 = scmp.eq.s32.totalorder %s77, 0
      %p622 = por %p620, %p621
      %p623 = scmp.ne.s32.totalorder %s615, %s617
      %p624 = scmp.eq.s32.totalorder %s82, 1
      %p625 = por %p623, %p624
      %p626 = scmp.ne.s32.totalorder %s617, %s618
      %p627 = scmp.eq.s32.totalorder %s82, 0
      %p628 = por %p626, %p627
      %p629 = scmp.ne.s32.totalorder %s617, %s618
      %p630 = scmp.eq.s32.totalorder %s83, 1
      %p631 = por %p629, %p630
      %p633 = scmp.ne.s32.totalorder %s618, %s632
      %p634 = scmp.eq.s32.totalorder %s83, 0
      %p635 = por %p633, %p634
      %s637 = sadd.s32 %s636, 1
      %p640 = scmp.eq.s32.totalorder %s77, 1
      %p641 = scmp.ne.s32.totalorder %s636, %s638
      %p642 = scmp.eq.s32.totalorder %s77, 0
      %p643 = por %p641, %p642
      %p644 = scmp.ne.s32.totalorder %s636, %s638
      %p645 = scmp.eq.s32.totalorder %s82, 1
      %p646 = por %p644, %p645
      %p647 = scmp.ne.s32.totalorder %s638, %s639
      %p648 = scmp.eq.s32.totalorder %s82, 0
      %p649 = por %p647, %p648
      %p650 = scmp.ne.s32.totalorder %s638, %s639
      %p651 = scmp.eq.s32.totalorder %s83, 1
      %p652 = por %p650, %p651
      %p654 = scmp.ne.s32.totalorder %s639, %s653
      %p655 = scmp.eq.s32.totalorder %s83, 0
      %p656 = por %p654, %p655
      %s658 = sadd.s32 %s657, 1
      %p661 = scmp.eq.s32.totalorder %s77, 1
      %p662 = scmp.ne.s32.totalorder %s657, %s659
      %p663 = scmp.eq.s32.totalorder %s77, 0
      %p664 = por %p662, %p663
      %p665 = scmp.ne.s32.totalorder %s657, %s659
      %p666 = scmp.eq.s32.totalorder %s82, 1
      %p667 = por %p665, %p666
      %p668 = scmp.ne.s32.totalorder %s659, %s660
      %p669 = scmp.eq.s32.totalorder %s82, 0
      %p670 = por %p668, %p669
      %p671 = scmp.ne.s32.totalorder %s659, %s660
      %p672 = scmp.eq.s32.totalorder %s83, 1
      %p673 = por %p671, %p672
      %p675 = scmp.ne.s32.totalorder %s660, %s674
      %p676 = scmp.eq.s32.totalorder %s83, 0
      %p677 = por %p675, %p676
      %s679 = sadd.s32 %s678, 1
      %p682 = scmp.eq.s32.totalorder %s77, 1
      %p683 = scmp.ne.s32.totalorder %s678, %s680
      %p684 = scmp.eq.s32.totalorder %s77, 0
      %p685 = por %p683, %p684
      %p686 = scmp.ne.s32.totalorder %s678, %s680
      %p687 = scmp.eq.s32.totalorder %s82, 1
      %p688 = por %p686, %p687
      %p689 = scmp.ne.s32.totalorder %s680, %s681
      %p690 = scmp.eq.s32.totalorder %s82, 0
      %p691 = por %p689, %p690
      %p692 = scmp.ne.s32.totalorder %s680, %s681
      %p693 = scmp.eq.s32.totalorder %s83, 1
      %p694 = por %p692, %p693
      %p696 = scmp.ne.s32.totalorder %s681, %s695
      %p697 = scmp.eq.s32.totalorder %s83, 0
      %p698 = por %p696, %p697
      %s700 = sadd.s32 %s699, 1
      %p703 = scmp.eq.s32.totalorder %s77, 1
      %p704 = scmp.ne.s32.totalorder %s699, %s701
      %p705 = scmp.eq.s32.totalorder %s77, 0
      %p706 = por %p704, %p705
      %p707 = scmp.ne.s32.totalorder %s699, %s701
      %p708 = scmp.eq.s32.totalorder %s82, 1
      %p709 = por %p707, %p708
      %p710 = scmp.ne.s32.totalorder %s701, %s702
      %p711 = scmp.eq.s32.totalorder %s82, 0
      %p712 = por %p710, %p711
      %p713 = scmp.ne.s32.totalorder %s701, %s702
      %p714 = scmp.eq.s32.totalorder %s83, 1
      %p715 = por %p713, %p714
      %p717 = scmp.ne.s32.totalorder %s702, %s716
      %p718 = scmp.eq.s32.totalorder %s83, 0
      %p719 = por %p717, %p718
      %s721 = sadd.s32 %s720, 1
      %p724 = scmp.eq.s32.totalorder %s77, 1
      %p725 = scmp.ne.s32.totalorder %s720, %s722
      %p726 = scmp.eq.s32.totalorder %s77, 0
      %p727 = por %p725, %p726
      %p728 = scmp.ne.s32.totalorder %s720, %s722
      %p729 = scmp.eq.s32.totalorder %s82, 1
      %p730 = por %p728, %p729
      %p731 = scmp.ne.s32.totalorder %s722, %s723
      %p732 = scmp.eq.s32.totalorder %s82, 0
      %p733 = por %p731, %p732
      %p734 = scmp.ne.s32.totalorder %s722, %s723
      %p735 = scmp.eq.s32.totalorder %s83, 1
      %p736 = por %p734, %p735
      %p738 = scmp.ne.s32.totalorder %s723, %s737
      %p739 = scmp.eq.s32.totalorder %s83, 0
      %p740 = por %p738, %p739
      %s741 = ssub.s32 %s77, %s84
      %p742 = scmp.eq.s32.totalorder %s741, 0
      %s744 = sadd.s32 %s743, 1
      %s745 = scalar_select %p742, %s743, %s744
      %p748 = pneg %p742
      %p749 = scmp.eq.s32.totalorder %s77, 1
      %p750 = por %p748, %p749
      %p751 = scmp.ne.s32.totalorder %s743, %s746
      %p752 = scmp.eq.s32.totalorder %s77, 0
      %p753 = por %p751, %p752
      %p754 = scmp.ne.s32.totalorder %s743, %s746
      %p755 = scmp.eq.s32.totalorder %s82, 1
      %p756 = por %p754, %p755
      %p757 = scmp.ne.s32.totalorder %s746, %s747
      %p758 = scmp.eq.s32.totalorder %s82, 0
      %p759 = por %p757, %p758
      %p760 = scmp.ne.s32.totalorder %s746, %s747
      %p761 = scmp.eq.s32.totalorder %s83, 1
      %p762 = por %p760, %p761
      %p764 = scmp.ne.s32.totalorder %s747, %s763
      %p765 = scmp.eq.s32.totalorder %s83, 0
      %p766 = por %p764, %p765
      %p767 = scmp.le.s32.totalorder 1, %s77
      %p768 = scmp.lt.s32.totalorder %s77, 3
      %p769 = pnand %p767, %p768
      %p770 = pneg %p769
      // Predicated region
      $region9: #{moebert_forward.1} parent=5 // pred_check
        _
      $region10: #{moebert_forward.1} parent=5 // pred_check_branch
        %772 = sbr.rel (%p769) target = $region12
      $region11: #{moebert_forward.1} parent=5 // pred_region
        %s773 = ssub.s32 %s77, 1
        // Predicated region
        $region13: #{moebert_forward.1} parent=11 // pred_check
          %p774 = pneg %p124
        $region14: #{moebert_forward.1} parent=11 // pred_check_branch
          %776 = sbr.rel (%p774) target = $region16
        $region15: #{moebert_forward.1} parent=11 // pred_region
          _
        $region16: #{moebert_forward.1} parent=11 // pred_fallthru
          _
        // Predicated region
        $region17: #{moebert_forward.1} parent=11 // pred_check
          %p777 = pneg %p145
        $region18: #{moebert_forward.1} parent=11 // pred_check_branch
          %779 = sbr.rel (%p777) target = $region20
        $region19: #{moebert_forward.1} parent=11 // pred_region
          %s781 = ssub.s32 16, 16
          %782 = vsyncadd [#allocation3], %s781
          %s784 = sshll.u32 [#allocation2], 4
          %s785 = int_to_ptr.vmem [resolvable:$true] %s784
          %787 = dma.hbm_to_vmem [thread:$0]  %s5, 16, %s785, [#allocation3]
        $region20: #{moebert_forward.1} parent=11 // pred_fallthru
          _
        // Predicated region
        $region21: #{moebert_forward.1} parent=11 // pred_check
          %p788 = pneg %p166
        $region22: #{moebert_forward.1} parent=11 // pred_check_branch
          %790 = sbr.rel (%p788) target = $region24
        $region23: #{moebert_forward.1} parent=11 // pred_region
          _
        $region24: #{moebert_forward.1} parent=11 // pred_fallthru
          _
        // Predicated region
        $region25: #{moebert_forward.1} parent=11 // pred_check
          %p791 = pneg %p187
        $region26: #{moebert_forward.1} parent=11 // pred_check_branch
          %793 = sbr.rel (%p791) target = $region28
        $region27: #{moebert_forward.1} parent=11 // pred_region
          %s795 = ssub.s32 16, 16
          %796 = vsyncadd [#allocation6], %s795
          %s798 = sshll.u32 [#allocation5], 4
          %s799 = int_to_ptr.vmem [resolvable:$true] %s798
          %801 = dma.hbm_to_vmem [thread:$0]  %s9, 16, %s799, [#allocation6]
        $region28: #{moebert_forward.1} parent=11 // pred_fallthru
          _
        // Predicated region
        $region29: #{moebert_forward.1} parent=11 // pred_check
          %p802 = pneg %p208
        $region30: #{moebert_forward.1} parent=11 // pred_check_branch
          %804 = sbr.rel (%p802) target = $region32
        $region31: #{moebert_forward.1} parent=11 // pred_region
          %s806 = ssub.s32 16, 16
          %807 = vsyncadd [#allocation6], %s806
          %s809 = sshll.u32 [#allocation7], 4
          %s810 = int_to_ptr.vmem [resolvable:$true] %s809
          %812 = dma.hbm_to_vmem [thread:$0]  %s11, 16, %s810, [#allocation6]
        $region32: #{moebert_forward.1} parent=11 // pred_fallthru
          _
        // Predicated region
        $region33: #{moebert_forward.1} parent=11 // pred_check
          %p813 = pneg %p229
        $region34: #{moebert_forward.1} parent=11 // pred_check_branch
          %815 = sbr.rel (%p813) target = $region36
        $region35: #{moebert_forward.1} parent=11 // pred_region
          %s817 = ssub.s32 16, 16
          %818 = vsyncadd [#allocation9], %s817
          %s820 = sshll.u32 [#allocation8], 4
          %s821 = int_to_ptr.vmem [resolvable:$true] %s820
          %823 = dma.hbm_to_vmem [thread:$0]  %s13, 16, %s821, [#allocation9]
        $region36: #{moebert_forward.1} parent=11 // pred_fallthru
          _
        // Predicated region
        $region37: #{moebert_forward.1} parent=11 // pred_check
          %p824 = pneg %p250
        $region38: #{moebert_forward.1} parent=11 // pred_check_branch
          %826 = sbr.rel (%p824) target = $region40
        $region39: #{moebert_forward.1} parent=11 // pred_region
          _
        $region40: #{moebert_forward.1} parent=11 // pred_fallthru
          _
        // Predicated region
        $region41: #{moebert_forward.1} parent=11 // pred_check
          %p827 = pneg %p271
        $region42: #{moebert_forward.1} parent=11 // pred_check_branch
          %829 = sbr.rel (%p827) target = $region44
        $region43: #{moebert_forward.1} parent=11 // pred_region
          %s831 = ssub.s32 16, 16
          %832 = vsyncadd [#allocation9], %s831
          %s834 = sshll.u32 [#allocation10], 4
          %s835 = int_to_ptr.vmem [resolvable:$true] %s834
          %837 = dma.hbm_to_vmem [thread:$0]  %s17, 16, %s835, [#allocation9]
        $region44: #{moebert_forward.1} parent=11 // pred_fallthru
          _
        // Predicated region
        $region45: #{moebert_forward.1} parent=11 // pred_check
          %p838 = pneg %p292
        $region46: #{moebert_forward.1} parent=11 // pred_check_branch
          %840 = sbr.rel (%p838) target = $region48
        $region47: #{moebert_forward.1} parent=11 // pred_region
          _
        $region48: #{moebert_forward.1} parent=11 // pred_fallthru
          _
        // Predicated region
        $region49: #{moebert_forward.1} parent=11 // pred_check
          %p841 = pneg %p313
        $region50: #{moebert_forward.1} parent=11 // pred_check_branch
          %843 = sbr.rel (%p841) target = $region52
        $region51: #{moebert_forward.1} parent=11 // pred_region
          %s845 = ssub.s32 16, 16
          %846 = vsyncadd [#allocation12], %s845
          %s848 = sshll.u32 [#allocation11], 4
          %s849 = int_to_ptr.vmem [resolvable:$true] %s848
          %851 = dma.hbm_to_vmem [thread:$0]  %s21, 16, %s849, [#allocation12]
        $region52: #{moebert_forward.1} parent=11 // pred_fallthru
          _
        // Predicated region
        $region53: #{moebert_forward.1} parent=11 // pred_check
          %p852 = pneg %p334
        $region54: #{moebert_forward.1} parent=11 // pred_check_branch
          %854 = sbr.rel (%p852) target = $region56
        $region55: #{moebert_forward.1} parent=11 // pred_region
          %s856 = ssub.s32 16, 16
          %857 = vsyncadd [#allocation12], %s856
          %s859 = sshll.u32 [#allocation13], 4
          %s860 = int_to_ptr.vmem [resolvable:$true] %s859
          %862 = dma.hbm_to_vmem [thread:$0]  %s23, 16, %s860, [#allocation12]
        $region56: #{moebert_forward.1} parent=11 // pred_fallthru
          _
        // Predicated region
        $region57: #{moebert_forward.1} parent=11 // pred_check
          %p863 = pneg %p355
        $region58: #{moebert_forward.1} parent=11 // pred_check_branch
          %865 = sbr.rel (%p863) target = $region60
        $region59: #{moebert_forward.1} parent=11 // pred_region
          %s867 = ssub.s32 16, 16
          %868 = vsyncadd [#allocation15], %s867
          %s870 = sshll.u32 [#allocation14], 4
          %s871 = int_to_ptr.vmem [resolvable:$true] %s870
          %873 = dma.hbm_to_vmem [thread:$0]  %s25, 16, %s871, [#allocation15]
        $region60: #{moebert_forward.1} parent=11 // pred_fallthru
          _
        // Predicated region
        $region61: #{moebert_forward.1} parent=11 // pred_check
          %p874 = pneg %p376
        $region62: #{moebert_forward.1} parent=11 // pred_check_branch
          %876 = sbr.rel (%p874) target = $region64
        $region63: #{moebert_forward.1} parent=11 // pred_region
          _
        $region64: #{moebert_forward.1} parent=11 // pred_fallthru
          _
        // Predicated region
        $region65: #{moebert_forward.1} parent=11 // pred_check
          %p877 = pneg %p397
        $region66: #{moebert_forward.1} parent=11 // pred_check_branch
          %879 = sbr.rel (%p877) target = $region68
        $region67: #{moebert_forward.1} parent=11 // pred_region
          _
        $region68: #{moebert_forward.1} parent=11 // pred_fallthru
          _
        // Predicated region
        $region69: #{moebert_forward.1} parent=11 // pred_check
          %p880 = pneg %p418
        $region70: #{moebert_forward.1} parent=11 // pred_check_branch
          %882 = sbr.rel (%p880) target = $region72
        $region71: #{moebert_forward.1} parent=11 // pred_region
          _
        $region72: #{moebert_forward.1} parent=11 // pred_fallthru
          _
        // Predicated region
        $region73: #{moebert_forward.1} parent=11 // pred_check
          %p883 = pneg %p439
        $region74: #{moebert_forward.1} parent=11 // pred_check_branch
          %885 = sbr.rel (%p883) target = $region76
        $region75: #{moebert_forward.1} parent=11 // pred_region
          _
        $region76: #{moebert_forward.1} parent=11 // pred_fallthru
          _
        // Predicated region
        $region77: #{moebert_forward.1} parent=11 // pred_check
          %p886 = pneg %p460
        $region78: #{moebert_forward.1} parent=11 // pred_check_branch
          %888 = sbr.rel (%p886) target = $region80
        $region79: #{moebert_forward.1} parent=11 // pred_region
          _
        $region80: #{moebert_forward.1} parent=11 // pred_fallthru
          _
        // Predicated region
        $region81: #{moebert_forward.1} parent=11 // pred_check
          %p889 = pneg %p481
        $region82: #{moebert_forward.1} parent=11 // pred_check_branch
          %891 = sbr.rel (%p889) target = $region84
        $region83: #{moebert_forward.1} parent=11 // pred_region
          _
        $region84: #{moebert_forward.1} parent=11 // pred_fallthru
          _
        // Predicated region
        $region85: #{moebert_forward.1} parent=11 // pred_check
          %p892 = pneg %p502
        $region86: #{moebert_forward.1} parent=11 // pred_check_branch
          %894 = sbr.rel (%p892) target = $region88
        $region87: #{moebert_forward.1} parent=11 // pred_region
          _
        $region88: #{moebert_forward.1} parent=11 // pred_fallthru
          _
        // Predicated region
        $region89: #{moebert_forward.1} parent=11 // pred_check
          %p895 = pneg %p523
        $region90: #{moebert_forward.1} parent=11 // pred_check_branch
          %897 = sbr.rel (%p895) target = $region92
        $region91: #{moebert_forward.1} parent=11 // pred_region
          _
        $region92: #{moebert_forward.1} parent=11 // pred_fallthru
          _
        // Predicated region
        $region93: #{moebert_forward.1} parent=11 // pred_check
          %p898 = pneg %p544
        $region94: #{moebert_forward.1} parent=11 // pred_check_branch
          %900 = sbr.rel (%p898) target = $region96
        $region95: #{moebert_forward.1} parent=11 // pred_region
          _
        $region96: #{moebert_forward.1} parent=11 // pred_fallthru
          _
        // Predicated region
        $region97: #{moebert_forward.1} parent=11 // pred_check
          %p901 = pneg %p565
        $region98: #{moebert_forward.1} parent=11 // pred_check_branch
          %903 = sbr.rel (%p901) target = $region100
        $region99: #{moebert_forward.1} parent=11 // pred_region
          _
        $region100: #{moebert_forward.1} parent=11 // pred_fallthru
          _
        // Predicated region
        $region101: #{moebert_forward.1} parent=11 // pred_check
          %p904 = pneg %p586
        $region102: #{moebert_forward.1} parent=11 // pred_check_branch
          %906 = sbr.rel (%p904) target = $region104
        $region103: #{moebert_forward.1} parent=11 // pred_region
          _
        $region104: #{moebert_forward.1} parent=11 // pred_fallthru
          _
        // Predicated region
        $region105: #{moebert_forward.1} parent=11 // pred_check
          %p907 = pneg %p607
        $region106: #{moebert_forward.1} parent=11 // pred_check_branch
          %909 = sbr.rel (%p907) target = $region108
        $region107: #{moebert_forward.1} parent=11 // pred_region
          _
        $region108: #{moebert_forward.1} parent=11 // pred_fallthru
          _
        // Predicated region
        $region109: #{moebert_forward.1} parent=11 // pred_check
          %p910 = pneg %p628
        $region110: #{moebert_forward.1} parent=11 // pred_check_branch
          %912 = sbr.rel (%p910) target = $region112
        $region111: #{moebert_forward.1} parent=11 // pred_region
          _
        $region112: #{moebert_forward.1} parent=11 // pred_fallthru
          _
        // Predicated region
        $region113: #{moebert_forward.1} parent=11 // pred_check
          %p913 = pneg %p649
        $region114: #{moebert_forward.1} parent=11 // pred_check_branch
          %915 = sbr.rel (%p913) target = $region116
        $region115: #{moebert_forward.1} parent=11 // pred_region
          _
        $region116: #{moebert_forward.1} parent=11 // pred_fallthru
          _
        // Predicated region
        $region117: #{moebert_forward.1} parent=11 // pred_check
          %p916 = pneg %p670
        $region118: #{moebert_forward.1} parent=11 // pred_check_branch
          %918 = sbr.rel (%p916) target = $region120
        $region119: #{moebert_forward.1} parent=11 // pred_region
          _
        $region120: #{moebert_forward.1} parent=11 // pred_fallthru
          _
        // Predicated region
        $region121: #{moebert_forward.1} parent=11 // pred_check
          %p919 = pneg %p691
        $region122: #{moebert_forward.1} parent=11 // pred_check_branch
          %921 = sbr.rel (%p919) target = $region124
        $region123: #{moebert_forward.1} parent=11 // pred_region
          _
        $region124: #{moebert_forward.1} parent=11 // pred_fallthru
          _
        // Predicated region
        $region125: #{moebert_forward.1} parent=11 // pred_check
          %p922 = pneg %p712
        $region126: #{moebert_forward.1} parent=11 // pred_check_branch
          %924 = sbr.rel (%p922) target = $region128
        $region127: #{moebert_forward.1} parent=11 // pred_region
          _
        $region128: #{moebert_forward.1} parent=11 // pred_fallthru
          _
        // Predicated region
        $region129: #{moebert_forward.1} parent=11 // pred_check
          %p925 = pneg %p733
        $region130: #{moebert_forward.1} parent=11 // pred_check_branch
          %927 = sbr.rel (%p925) target = $region132
        $region131: #{moebert_forward.1} parent=11 // pred_region
          _
        $region132: #{moebert_forward.1} parent=11 // pred_fallthru
          _
      $region12: #{moebert_forward.1} parent=5 // pred_fallthru
        _
      %p928 = scmp.lt.s32.totalorder %s77, 2
      // Predicated region
      $region133: #{moebert_forward.1} parent=5 // pred_check
        %p929 = pneg %p928
      $region134: #{moebert_forward.1} parent=5 // pred_check_branch
        %931 = sbr.rel (%p929) target = $region136
      $region135: #{moebert_forward.1} parent=5 // pred_region
        // Predicated region
        $region137: #{moebert_forward.1} parent=135 // pred_check
          %p932 = pneg %p97
        $region138: #{moebert_forward.1} parent=135 // pred_check_branch
          %934 = sbr.rel (%p932) target = $region140
        $region139: #{moebert_forward.1} parent=135 // pred_region
          %p935 = scmp.lt.s32.totalorder %s77, 1
          %s936 = scalar_select %p935, %s77, 1
          %s937 = smul.addr %s936, 8
          %s938 = scalar_lea.vmem %s1, %s937
        $region140: #{moebert_forward.1} parent=135 // pred_fallthru
          _
      $region136: #{moebert_forward.1} parent=5 // pred_fallthru
        _
      %p939 = scmp.le.s32.totalorder 1, %s77
      %p940 = scmp.lt.s32.totalorder %s77, 3
      %p941 = pnand %p939, %p940
      %p942 = pneg %p941
      // Predicated region
      $region141: #{moebert_forward.1} parent=5 // pred_check
        _
      $region142: #{moebert_forward.1} parent=5 // pred_check_branch
        %944 = sbr.rel (%p941) target = $region144
      $region143: #{moebert_forward.1} parent=5 // pred_region
        %s945 = ssub.s32 %s77, 1
        // Predicated region
        $region145: #{moebert_forward.1} parent=143 // pred_check
          %p946 = pneg %p145
        $region146: #{moebert_forward.1} parent=143 // pred_check_branch
          %948 = sbr.rel (%p946) target = $region148
        $region147: #{moebert_forward.1} parent=143 // pred_region
          %949 = dma.done [#allocation3], 16
        $region148: #{moebert_forward.1} parent=143 // pred_fallthru
          _
        // Predicated region
        $region149: #{moebert_forward.1} parent=143 // pred_check
          %p950 = pneg %p187
        $region150: #{moebert_forward.1} parent=143 // pred_check_branch
          %952 = sbr.rel (%p950) target = $region152
        $region151: #{moebert_forward.1} parent=143 // pred_region
          %953 = dma.done [#allocation6], 16
        $region152: #{moebert_forward.1} parent=143 // pred_fallthru
          _
        // Predicated region
        $region153: #{moebert_forward.1} parent=143 // pred_check
          %p954 = pneg %p208
        $region154: #{moebert_forward.1} parent=143 // pred_check_branch
          %956 = sbr.rel (%p954) target = $region156
        $region155: #{moebert_forward.1} parent=143 // pred_region
          %957 = dma.done [#allocation6], 16
        $region156: #{moebert_forward.1} parent=143 // pred_fallthru
          _
        // Predicated region
        $region157: #{moebert_forward.1} parent=143 // pred_check
          %p958 = pneg %p229
        $region158: #{moebert_forward.1} parent=143 // pred_check_branch
          %960 = sbr.rel (%p958) target = $region160
        $region159: #{moebert_forward.1} parent=143 // pred_region
          %961 = dma.done [#allocation9], 16
        $region160: #{moebert_forward.1} parent=143 // pred_fallthru
          _
        // Predicated region
        $region161: #{moebert_forward.1} parent=143 // pred_check
          %p962 = pneg %p271
        $region162: #{moebert_forward.1} parent=143 // pred_check_branch
          %964 = sbr.rel (%p962) target = $region164
        $region163: #{moebert_forward.1} parent=143 // pred_region
          %965 = dma.done [#allocation9], 16
        $region164: #{moebert_forward.1} parent=143 // pred_fallthru
          _
        // Predicated region
        $region165: #{moebert_forward.1} parent=143 // pred_check
          %p966 = pneg %p313
        $region166: #{moebert_forward.1} parent=143 // pred_check_branch
          %968 = sbr.rel (%p966) target = $region168
        $region167: #{moebert_forward.1} parent=143 // pred_region
          %969 = dma.done [#allocation12], 16
        $region168: #{moebert_forward.1} parent=143 // pred_fallthru
          _
        // Predicated region
        $region169: #{moebert_forward.1} parent=143 // pred_check
          %p970 = pneg %p334
        $region170: #{moebert_forward.1} parent=143 // pred_check_branch
          %972 = sbr.rel (%p970) target = $region172
        $region171: #{moebert_forward.1} parent=143 // pred_region
          %973 = dma.done [#allocation12], 16
        $region172: #{moebert_forward.1} parent=143 // pred_fallthru
          _
        // Predicated region
        $region173: #{moebert_forward.1} parent=143 // pred_check
          %p974 = pneg %p355
        $region174: #{moebert_forward.1} parent=143 // pred_check_branch
          %976 = sbr.rel (%p974) target = $region176
        $region175: #{moebert_forward.1} parent=143 // pred_region
          %977 = dma.done [#allocation15], 16
        $region176: #{moebert_forward.1} parent=143 // pred_fallthru
          _
        %p978 = scmp.lt.s32.totalorder %s82, 1
        %s979 = scalar_select %p978, %s82, 1
        %s980 = smul.addr %s979, 8
        %s981 = scalar_lea.vmem %s1, %s980
        %p982 = pneg %p103
        %p983 = pneg %p100
        %p984 = pneg %p124
        %p985 = pneg %p121
        %p986 = pneg %p145
        %p987 = pneg %p142
        %p988 = pneg %p166
        %p989 = pneg %p163
        %p990 = pneg %p187
        %p991 = pneg %p184
        %p992 = pneg %p208
        %p993 = pneg %p205
        %p994 = pneg %p229
        %p995 = pneg %p226
        %p996 = pneg %p250
        %p997 = pneg %p247
        %p998 = pneg %p271
        %p999 = pneg %p268
        %p1000 = pneg %p292
        %p1001 = pneg %p289
        %p1002 = pneg %p313
        %p1003 = pneg %p310
        %p1004 = pneg %p334
        %p1005 = pneg %p331
        %p1006 = pneg %p355
        %p1007 = pneg %p352
        %p1008 = pneg %p376
        %p1009 = pneg %p373
        %p1010 = pneg %p397
        %p1011 = pneg %p394
        %p1012 = pneg %p418
        %p1013 = pneg %p415
        %p1014 = pneg %p439
        %p1015 = pneg %p436
        %p1016 = pneg %p460
        %p1017 = pneg %p457
        %p1018 = pneg %p481
        %p1019 = pneg %p478
        %p1020 = pneg %p502
        %p1021 = pneg %p499
        %p1022 = pneg %p523
        %p1023 = pneg %p520
        %p1024 = pneg %p544
        %p1025 = pneg %p541
        %p1026 = pneg %p565
        %p1027 = pneg %p562
        %p1028 = pneg %p586
        %p1029 = pneg %p583
        %p1030 = pneg %p607
        %p1031 = pneg %p604
        %p1032 = pneg %p628
        %p1033 = pneg %p625
        %p1034 = pneg %p649
        %p1035 = pneg %p646
        %p1036 = pneg %p670
        %p1037 = pneg %p667
        %p1038 = pneg %p691
        %p1039 = pneg %p688
        %p1040 = pneg %p712
        %p1041 = pneg %p709
        %p1042 = pneg %p733
        %p1043 = pneg %p730
        %p1044 = pneg %p759
        %p1045 = pneg %p756
        %s1046 = sand.u32 %s746, 1
        %s1047 = scalar_lea.sflag [#allocation4], %s1046
        %s1048 = sand.u32 %s746, 1
        %s1049 = scalar_lea.vmem [#allocation16], %s1048
        %p1050 = scmp.lt.s32.totalorder %s82, 1
        %s1051 = scalar_select %p1050, %s82, 1
        %s1052 = smul.addr %s1051, 8
        %s1053 = scalar_lea.vmem %s1, %s1052
        %v1055 = vld [vmem:[%s1053] sm:$0xff]
        %v1056 = vld [vmem:[%s3] sm:$0xf]
        %v1057 = vld [vmem:[%s3 + $0x4] sm:$0xf]
        %v1058 = vld [vmem:[%s3 + $0x8] sm:$0xf]
        %v1059 = vld [vmem:[%s3 + $0xc] sm:$0xf]
        %v1060 = vld [vmem:[#allocation2] sm:$0x1]
        %v1061 = vld [vmem:[%s7] sm:$0xf]
        %v1062 = vld [vmem:[%s7 + $0x4] sm:$0xf]
        %v1063 = vld [vmem:[%s7 + $0x8] sm:$0xf]
        %v1064 = vld [vmem:[%s7 + $0xc] sm:$0xf]
        %v1065 = vld [vmem:[#allocation5] sm:$0x1]
        %v1066 = vld [vmem:[#allocation7] sm:$0x1]
        %v1067 = vld [vmem:[#allocation8] sm:$0x1]
        %v1068 = vpack.c.bf16 %v1055, %v1055
        %v1070 = vlaneseq
        %v1071 = vshrl.u32 %v1070, 7
        %v1072 = vsub.s32 0, %v1071
        %v1073 = vrot.slane %v1060, %v1072
        %v1079 = vunpack.c.l.b16 %v1056
        %v1080 = vunpack.c.l.b16 %v1057
        %v1081 = vunpack.c.l.b16 %v1058
        %v1082 = vunpack.c.l.b16 %v1059
        %v1083 = vpack.c.b16 %v1080, %v1079
        %v1084 = vpack.c.b16 %v1082, %v1081
        %vm1087 = vcmask 261120
        %v1089 = vsel %vm1087, %v1068, 0
        %1091 = vmatprep.subr.bf16.mxu0 0
        %1092 = vmatpush1.bf16.msra.mxu0 %v1083
        %1093 = vmatprep.subr.bf16.mxu0 0
        %1094 = vmatpush1.bf16.msra.mxu0 %v1084
        %1095 = vmatprep.subr.bf16.mxu0 0
        %1096 = vmatpush1.bf16.msra.mxu0 0
        %1097 = vmatprep.subr.bf16.mxu0 0
        %1098 = vmatpush1.bf16.msra.mxu0 0
        %1099 = vmatprep.subr.bf16.mxu0 0
        %1100 = vmatpush1.bf16.msra.mxu0 0
        %1101 = vmatprep.subr.bf16.mxu0 0
        %1102 = vmatpush1.bf16.msra.mxu0 0
        %1103 = vmatprep.subr.bf16.mxu0 0
        %1104 = vmatpush1.bf16.msra.mxu0 0
        %1105 = vmatprep.subr.bf16.mxu0 0
        %1106 = vmatpush1.bf16.msra.mxu0 0
        %1107 = vmatprep.subr.bf16.mxu0 0
        %1108 = vmatpush1.bf16.msra.mxu0 0
        %1109 = vmatprep.subr.bf16.mxu0 0
        %1110 = vmatpush1.bf16.msra.mxu0 0
        %1111 = vmatprep.subr.bf16.mxu0 0
        %1112 = vmatpush1.bf16.msra.mxu0 0
        %1113 = vmatprep.subr.bf16.mxu0 0
        %1114 = vmatpush1.bf16.msra.mxu0 0
        %1115 = vmatprep.subr.bf16.mxu0 0
        %1116 = vmatpush1.bf16.msra.mxu0 0
        %1117 = vmatprep.subr.bf16.mxu0 0
        %1118 = vmatpush1.bf16.msra.mxu0 0
        %1119 = vmatprep.subr.bf16.mxu0 0
        %1120 = vmatpush1.bf16.msra.mxu0 0
        %1121 = vmatprep.subr.bf16.mxu0 0
        %1122 = vmatpush1.bf16.msra.mxu0 0
        %1123 = vmatprep.mubr.bf16.mxu0 0
        %1124 = vmatmul.mubr.bf16.gmra.mrb[0].mxu0 %v1089
        %v1125 = vpop.f32.mrb[0].mxu0
        %v1126 = vadd.f32 %v1073, %v1125
        %v1127 = vpop.f32.mrb[0].mxu0
        %v1128 = vpop.f32.mrb[0].mxu0
        %v1129 = vpop.f32.mrb[0].mxu0
        %1130 = vdwg.mxu0
        %v1131 = vmul.f32 %v1126, 0.25
        %v1132 = vpack.c.bf16 %v1131, %v1131
        %v1133 = vpack.c.bf16 %v1126, %v1126
        %1135 = vrot.lane.b32.xlu0 %v1133, 96
        %v1136 = vpop.permute.xlu0 %1135
        %vm1137 = vcmask 130048
        %v1139 = vsel %vm1137, %v1132, 0
        %v1142 = vsel %vm1137, %v1136, 0
        %1144 = vmatprep.subr.bf16.mxu0 0
        %1145 = vmatpush1.bf16.xpose.msra.mxu0 %v1142
        %1146 = vmatprep.subr.bf16.mxu0 0
        %1147 = vmatpush1.bf16.xpose.msra.mxu0 0
        %1148 = vmatprep.subr.bf16.mxu0 0
        %1149 = vmatpush1.bf16.xpose.msra.mxu0 0
        %1150 = vmatprep.subr.bf16.mxu0 0
        %1151 = vmatpush1.bf16.xpose.msra.mxu0 0
        %1152 = vmatprep.subr.bf16.mxu0 0
        %1153 = vmatpush1.bf16.xpose.msra.mxu0 0
        %1154 = vmatprep.subr.bf16.mxu0 0
        %1155 = vmatpush1.bf16.xpose.msra.mxu0 0
        %1156 = vmatprep.subr.bf16.mxu0 0
        %1157 = vmatpush1.bf16.xpose.msra.mxu0 0
        %1158 = vmatprep.subr.bf16.mxu0 0
        %1159 = vmatpush1.bf16.xpose.msra.mxu0 0
        %1160 = vmatprep.subr.bf16.mxu0 0
        %1161 = vmatpush1.bf16.xpose.msra.mxu0 0
        %1162 = vmatprep.subr.bf16.mxu0 0
        %1163 = vmatpush1.bf16.xpose.msra.mxu0 0
        %1164 = vmatprep.subr.bf16.mxu0 0
        %1165 = vmatpush1.bf16.xpose.msra.mxu0 0
        %1166 = vmatprep.subr.bf16.mxu0 0
        %1167 = vmatpush1.bf16.xpose.msra.mxu0 0
        %1168 = vmatprep.subr.bf16.mxu0 0
        %1169 = vmatpush1.bf16.xpose.msra.mxu0 0
        %1170 = vmatprep.subr.bf16.mxu0 0
        %1171 = vmatpush1.bf16.xpose.msra.mxu0 0
        %1172 = vmatprep.subr.bf16.mxu0 0
        %1173 = vmatpush1.bf16.xpose.msra.mxu0 0
        %1174 = vmatprep.subr.bf16.mxu0 0
        %1175 = vmatpush1.bf16.xpose.msra.mxu0 0
        %1176 = vmatprep.mubr.bf16.mxu0 0
        %1177 = vmatmul.mubr.bf16.gmra.mrb[0].mxu0 %v1139
        %v1178 = vpop.f32.mrb[0].mxu0
        %v1179 = vadd.f32 0.0, %v1178
        %v1180 = vpop.f32.mrb[0].mxu0
        %v1181 = vpop.f32.mrb[0].mxu0
        %v1182 = vpop.f32.mrb[0].mxu0
        %1183 = vdwg.mxu0
        %vm1184 = vcmask 64512
        %v1185 = vsel %vm1184, %v1179, -inf
        %1186 = vmax.xlane.f32.xlu0 %v1185
        %v1187 = vpop.xlane.xlu0 %1186
        %v1188 = vsub.f32 %v1179, %v1187
        %v1189 = vmul.f32 %v1188, 1.442695
        %v1190 = vpow.pop %v1189
        %v1191 = vsel %vm1184, %v1190, 0.0
        %1192 = vadd.xlane.f32.xlu0 %v1191
        %v1193 = vpop.xlane.xlu0 %1192
        %v1194 = vrcp.pop %v1193
        %v1195 = vmul.f32 %v1190, %v1194
        %v1196 = vpack.c.bf16 %v1195, %v1195
        %1197 = vrot.lane.b32.xlu0 %v1133, 64
        %v1198 = vpop.permute.xlu0 %1197
        %v1200 = vsel %vm1184, %v1196, 0
        %vm1202 = vcmask 1043456
        %v1204 = vsel %vm1202, %v1198, 0
        %1206 = vmatprep.subr.bf16.mxu0 0
        %1207 = vmatpush1.bf16.msra.mxu0 %v1204
        %1208 = vmatprep.subr.bf16.mxu0 0
        %1209 = vmatpush1.bf16.msra.mxu0 0
        %1210 = vmatprep.subr.bf16.mxu0 0
        %1211 = vmatpush1.bf16.msra.mxu0 0
        %1212 = vmatprep.subr.bf16.mxu0 0
        %1213 = vmatpush1.bf16.msra.mxu0 0
        %1214 = vmatprep.subr.bf16.mxu0 0
        %1215 = vmatpush1.bf16.msra.mxu0 0
        %1216 = vmatprep.subr.bf16.mxu0 0
        %1217 = vmatpush1.bf16.msra.mxu0 0
        %1218 = vmatprep.subr.bf16.mxu0 0
        %1219 = vmatpush1.bf16.msra.mxu0 0
        %1220 = vmatprep.subr.bf16.mxu0 0
        %1221 = vmatpush1.bf16.msra.mxu0 0
        %1222 = vmatprep.subr.bf16.mxu0 0
        %1223 = vmatpush1.bf16.msra.mxu0 0
        %1224 = vmatprep.subr.bf16.mxu0 0
        %1225 = vmatpush1.bf16.msra.mxu0 0
        %1226 = vmatprep.subr.bf16.mxu0 0
        %1227 = vmatpush1.bf16.msra.mxu0 0
        %1228 = vmatprep.subr.bf16.mxu0 0
        %1229 = vmatpush1.bf16.msra.mxu0 0
        %1230 = vmatprep.subr.bf16.mxu0 0
        %1231 = vmatpush1.bf16.msra.mxu0 0
        %1232 = vmatprep.subr.bf16.mxu0 0
        %1233 = vmatpush1.bf16.msra.mxu0 0
        %1234 = vmatprep.subr.bf16.mxu0 0
        %1235 = vmatpush1.bf16.msra.mxu0 0
        %1236 = vmatprep.subr.bf16.mxu0 0
        %1237 = vmatpush1.bf16.msra.mxu0 0
        %1238 = vmatprep.mubr.bf16.mxu0 0
        %1239 = vmatmul.mubr.bf16.gmra.mrb[0].mxu0 %v1200
        %v1240 = vpop.f32.mrb[0].mxu0
        %v1241 = vadd.f32 0.0, %v1240
        %v1242 = vpop.f32.mrb[0].mxu0
        %v1243 = vpop.f32.mrb[0].mxu0
        %v1244 = vpop.f32.mrb[0].mxu0
        %1245 = vdwg.mxu0
        %1247 = vrot.lane.b32.xlu0 %v1132, 112
        %v1248 = vpop.permute.xlu0 %1247
        %1249 = vrot.lane.b32.xlu0 %v1133, 80
        %v1250 = vpop.permute.xlu0 %1249
        %v1252 = vsel %vm1137, %v1248, 0
        %v1255 = vsel %vm1137, %v1250, 0
        %1257 = vmatprep.subr.bf16.mxu0 0
        %1258 = vmatpush1.bf16.xpose.msra.mxu0 %v1255
        %1259 = vmatprep.subr.bf16.mxu0 0
        %1260 = vmatpush1.bf16.xpose.msra.mxu0 0
        %1261 = vmatprep.subr.bf16.mxu0 0
        %1262 = vmatpush1.bf16.xpose.msra.mxu0 0
        %1263 = vmatprep.subr.bf16.mxu0 0
        %1264 = vmatpush1.bf16.xpose.msra.mxu0 0
        %1265 = vmatprep.subr.bf16.mxu0 0
        %1266 = vmatpush1.bf16.xpose.msra.mxu0 0
        %1267 = vmatprep.subr.bf16.mxu0 0
        %1268 = vmatpush1.bf16.xpose.msra.mxu0 0
        %1269 = vmatprep.subr.bf16.mxu0 0
        %1270 = vmatpush1.bf16.xpose.msra.mxu0 0
        %1271 = vmatprep.subr.bf16.mxu0 0
        %1272 = vmatpush1.bf16.xpose.msra.mxu0 0
        %1273 = vmatprep.subr.bf16.mxu0 0
        %1274 = vmatpush1.bf16.xpose.msra.mxu0 0
        %1275 = vmatprep.subr.bf16.mxu0 0
        %1276 = vmatpush1.bf16.xpose.msra.mxu0 0
        %1277 = vmatprep.subr.bf16.mxu0 0
        %1278 = vmatpush1.bf16.xpose.msra.mxu0 0
        %1279 = vmatprep.subr.bf16.mxu0 0
        %1280 = vmatpush1.bf16.xpose.msra.mxu0 0
        %1281 = vmatprep.subr.bf16.mxu0 0
        %1282 = vmatpush1.bf16.xpose.msra.mxu0 0
        %1283 = vmatprep.subr.bf16.mxu0 0
        %1284 = vmatpush1.bf16.xpose.msra.mxu0 0
        %1285 = vmatprep.subr.bf16.mxu0 0
        %1286 = vmatpush1.bf16.xpose.msra.mxu0 0
        %1287 = vmatprep.subr.bf16.mxu0 0
        %1288 = vmatpush1.bf16.xpose.msra.mxu0 0
        %1289 = vmatprep.mubr.bf16.mxu0 0
        %1290 = vmatmul.mubr.bf16.gmra.mrb[0].mxu0 %v1252
        %v1291 = vpop.f32.mrb[0].mxu0
        %v1292 = vadd.f32 0.0, %v1291
        %v1293 = vpop.f32.mrb[0].mxu0
        %v1294 = vpop.f32.mrb[0].mxu0
        %v1295 = vpop.f32.mrb[0].mxu0
        %1296 = vdwg.mxu0
        %v1297 = vsel %vm1184, %v1292, -inf
        %1298 = vmax.xlane.f32.xlu0 %v1297
        %v1299 = vpop.xlane.xlu0 %1298
        %v1300 = vsub.f32 %v1292, %v1299
        %v1301 = vmul.f32 %v1300, 1.442695
        %v1302 = vpow.pop %v1301
        %v1303 = vsel %vm1184, %v1302, 0.0
        %1304 = vadd.xlane.f32.xlu0 %v1303
        %v1305 = vpop.xlane.xlu0 %1304
        %v1306 = vrcp.pop %v1305
        %v1307 = vmul.f32 %v1302, %v1306
        %v1308 = vpack.c.bf16 %v1307, %v1307
        %1309 = vrot.lane.b32.xlu0 %v1133, 48
        %v1310 = vpop.permute.xlu0 %1309
        %v1312 = vsel %vm1184, %v1308, 0
        %v1315 = vsel %vm1202, %v1310, 0
        %1317 = vmatprep.subr.bf16.mxu0 0
        %1318 = vmatpush1.bf16.msra.mxu0 %v1315
        %1319 = vmatprep.subr.bf16.mxu0 0
        %1320 = vmatpush1.bf16.msra.mxu0 0
        %1321 = vmatprep.subr.bf16.mxu0 0
        %1322 = vmatpush1.bf16.msra.mxu0 0
        %1323 = vmatprep.subr.bf16.mxu0 0
        %1324 = vmatpush1.bf16.msra.mxu0 0
        %1325 = vmatprep.subr.bf16.mxu0 0
        %1326 = vmatpush1.bf16.msra.mxu0 0
        %1327 = vmatprep.subr.bf16.mxu0 0
        %1328 = vmatpush1.bf16.msra.mxu0 0
        %1329 = vmatprep.subr.bf16.mxu0 0
        %1330 = vmatpush1.bf16.msra.mxu0 0
        %1331 = vmatprep.subr.bf16.mxu0 0
        %1332 = vmatpush1.bf16.msra.mxu0 0
        %1333 = vmatprep.subr.bf16.mxu0 0
        %1334 = vmatpush1.bf16.msra.mxu0 0
        %1335 = vmatprep.subr.bf16.mxu0 0
        %1336 = vmatpush1.bf16.msra.mxu0 0
        %1337 = vmatprep.subr.bf16.mxu0 0
        %1338 = vmatpush1.bf16.msra.mxu0 0
        %1339 = vmatprep.subr.bf16.mxu0 0
        %1340 = vmatpush1.bf16.msra.mxu0 0
        %1341 = vmatprep.subr.bf16.mxu0 0
        %1342 = vmatpush1.bf16.msra.mxu0 0
        %1343 = vmatprep.subr.bf16.mxu0 0
        %1344 = vmatpush1.bf16.msra.mxu0 0
        %1345 = vmatprep.subr.bf16.mxu0 0
        %1346 = vmatpush1.bf16.msra.mxu0 0
        %1347 = vmatprep.subr.bf16.mxu0 0
        %1348 = vmatpush1.bf16.msra.mxu0 0
        %1349 = vmatprep.mubr.bf16.mxu0 0
        %1350 = vmatmul.mubr.bf16.gmra.mrb[0].mxu0 %v1312
        %v1351 = vpop.f32.mrb[0].mxu0
        %v1352 = vadd.f32 0.0, %v1351
        %v1353 = vpop.f32.mrb[0].mxu0
        %v1354 = vpop.f32.mrb[0].mxu0
        %v1355 = vpop.f32.mrb[0].mxu0
        %1356 = vdwg.mxu0
        %1358 = vrot.lane.b32.xlu0 %v1352, 16
        %v1359 = vpop.permute.xlu0 %1358
        %v1361 = vsel %vm1137, %v1241, %v1359
        %v1362 = vpack.c.bf16 %v1361, %v1361
        %v1364 = vlaneseq
        %v1365 = vshrl.u32 %v1364, 7
        %v1366 = vsub.s32 0, %v1365
        %v1367 = vrot.slane %v1065, %v1366
        %v1373 = vunpack.c.l.b16 %v1061
        %v1374 = vunpack.c.l.b16 %v1062
        %v1375 = vunpack.c.l.b16 %v1063
        %v1376 = vunpack.c.l.b16 %v1064
        %v1377 = vpack.c.b16 %v1374, %v1373
        %v1378 = vpack.c.b16 %v1376, %v1375
        %v1382 = vsel %vm1087, %v1362, 0
        %1384 = vmatprep.subr.bf16.mxu0 0
        %1385 = vmatpush1.bf16.msra.mxu0 %v1377
        %1386 = vmatprep.subr.bf16.mxu0 0
        %1387 = vmatpush1.bf16.msra.mxu0 %v1378
        %1388 = vmatprep.subr.bf16.mxu0 0
        %1389 = vmatpush1.bf16.msra.mxu0 0
        %1390 = vmatprep.subr.bf16.mxu0 0
        %1391 = vmatpush1.bf16.msra.mxu0 0
        %1392 = vmatprep.subr.bf16.mxu0 0
        %1393 = vmatpush1.bf16.msra.mxu0 0
        %1394 = vmatprep.subr.bf16.mxu0 0
        %1395 = vmatpush1.bf16.msra.mxu0 0
        %1396 = vmatprep.subr.bf16.mxu0 0
        %1397 = vmatpush1.bf16.msra.mxu0 0
        %1398 = vmatprep.subr.bf16.mxu0 0
        %1399 = vmatpush1.bf16.msra.mxu0 0
        %1400 = vmatprep.subr.bf16.mxu0 0
        %1401 = vmatpush1.bf16.msra.mxu0 0
        %1402 = vmatprep.subr.bf16.mxu0 0
        %1403 = vmatpush1.bf16.msra.mxu0 0
        %1404 = vmatprep.subr.bf16.mxu0 0
        %1405 = vmatpush1.bf16.msra.mxu0 0
        %1406 = vmatprep.subr.bf16.mxu0 0
        %1407 = vmatpush1.bf16.msra.mxu0 0
        %1408 = vmatprep.subr.bf16.mxu0 0
        %1409 = vmatpush1.bf16.msra.mxu0 0
        %1410 = vmatprep.subr.bf16.mxu0 0
        %1411 = vmatpush1.bf16.msra.mxu0 0
        %1412 = vmatprep.subr.bf16.mxu0 0
        %1413 = vmatpush1.bf16.msra.mxu0 0
        %1414 = vmatprep.subr.bf16.mxu0 0
        %1415 = vmatpush1.bf16.msra.mxu0 0
        %1416 = vmatprep.mubr.bf16.mxu0 0
        %1417 = vmatmul.mubr.bf16.gmra.mrb[0].mxu0 %v1382
        %v1418 = vpop.f32.mrb[0].mxu0
        %v1419 = vadd.f32 %v1367, %v1418
        %v1420 = vpop.f32.mrb[0].mxu0
        %v1421 = vpop.f32.mrb[0].mxu0
        %v1422 = vpop.f32.mrb[0].mxu0
        %1423 = vdwg.mxu0
        %v1424 = vadd.f32 %v1055, %v1419
        %v1425 = vsel %vm1087, %v1424, 0.0
        %1426 = vadd.xlane.f32.xlu0 %v1425
        %v1427 = vpop.xlane.xlu0 %1426
        %v1428 = vrcp.pop 32.0
        %v1429 = vmul.f32 %v1427, %v1428
        %v1430 = vsub.f32 %v1424, %v1429
        %v1431 = vmul.f32 %v1430, %v1430
        %v1432 = vsel %vm1087, %v1431, 0.0
        %1433 = vadd.xlane.f32.xlu0 %v1432
        %v1434 = vpop.xlane.xlu0 %1433
        %v1435 = vmul.f32 %v1434, %v1428
        %v1436 = vadd.f32 %v1435, 1e-12
        %v1437 = vrsqrt.pop %v1436
        %v1438 = vmul.f32 %v1430, %v1437
        %v1440 = vlaneseq
        %v1441 = vshrl.u32 %v1440, 7
        %v1442 = vsub.s32 0, %v1441
        %v1443 = vrot.slane %v1066, %v1442
        %v1445 = vmul.f32 %v1438, %v1443
        %v1447 = vlaneseq
        %v1448 = vshrl.u32 %v1447, 7
        %v1449 = vsub.s32 0, %v1448
        %v1450 = vrot.slane %v1067, %v1449
        %v1452 = vadd.f32 %v1445, %v1450
        %v1453 = vld [vmem:[%s15] sm:$0xf]
        %v1454 = vld [vmem:[%s15 + $0x4] sm:$0xf]
        %v1455 = vld [vmem:[%s15 + $0x8] sm:$0xf]
        %v1456 = vld [vmem:[%s15 + $0xc] sm:$0xf]
        %v1457 = vld [vmem:[#allocation10] sm:$0x1]
        %v1458 = vpack.c.bf16 %v1452, %v1452
        %v1460 = vlaneseq
        %v1461 = vshrl.u32 %v1460, 7
        %v1462 = vsub.s32 0, %v1461
        %v1463 = vrot.slane %v1457, %v1462
        %v1469 = vunpack.c.l.b16 %v1453
        %v1470 = vunpack.c.l.b16 %v1454
        %v1471 = vunpack.c.l.b16 %v1455
        %v1472 = vunpack.c.l.b16 %v1456
        %v1473 = vpack.c.b16 %v1470, %v1469
        %v1474 = vpack.c.b16 %v1472, %v1471
        %v1478 = vsel %vm1087, %v1458, 0
        %1480 = vmatprep.subr.bf16.mxu0 0
        %1481 = vmatpush1.bf16.msra.mxu0 %v1473
        %1482 = vmatprep.subr.bf16.mxu0 0
        %1483 = vmatpush1.bf16.msra.mxu0 %v1474
        %1484 = vmatprep.subr.bf16.mxu0 0
        %1485 = vmatpush1.bf16.msra.mxu0 0
        %1486 = vmatprep.subr.bf16.mxu0 0
        %1487 = vmatpush1.bf16.msra.mxu0 0
        %1488 = vmatprep.subr.bf16.mxu0 0
        %1489 = vmatpush1.bf16.msra.mxu0 0
        %1490 = vmatprep.subr.bf16.mxu0 0
        %1491 = vmatpush1.bf16.msra.mxu0 0
        %1492 = vmatprep.subr.bf16.mxu0 0
        %1493 = vmatpush1.bf16.msra.mxu0 0
        %1494 = vmatprep.subr.bf16.mxu0 0
        %1495 = vmatpush1.bf16.msra.mxu0 0
        %1496 = vmatprep.subr.bf16.mxu0 0
        %1497 = vmatpush1.bf16.msra.mxu0 0
        %1498 = vmatprep.subr.bf16.mxu0 0
        %1499 = vmatpush1.bf16.msra.mxu0 0
        %1500 = vmatprep.subr.bf16.mxu0 0
        %1501 = vmatpush1.bf16.msra.mxu0 0
        %1502 = vmatprep.subr.bf16.mxu0 0
        %1503 = vmatpush1.bf16.msra.mxu0 0
        %1504 = vmatprep.subr.bf16.mxu0 0
        %1505 = vmatpush1.bf16.msra.mxu0 0
        %1506 = vmatprep.subr.bf16.mxu0 0
        %1507 = vmatpush1.bf16.msra.mxu0 0
        %1508 = vmatprep.subr.bf16.mxu0 0
        %1509 = vmatpush1.bf16.msra.mxu0 0
        %1510 = vmatprep.subr.bf16.mxu0 0
        %1511 = vmatpush1.bf16.msra.mxu0 0
        %1512 = vmatprep.mubr.bf16.mxu0 0
        %1513 = vmatmul.mubr.bf16.gmra.mrb[0].mxu0 %v1478
        %v1514 = vpop.f32.mrb[0].mxu0
        %v1515 = vadd.f32 %v1463, %v1514
        %v1516 = vpop.f32.mrb[0].mxu0
        %v1517 = vpop.f32.mrb[0].mxu0
        %v1518 = vpop.f32.mrb[0].mxu0
        %1519 = vdwg.mxu0
        %v1520 = vmul.f32 %v1515, 0.5
        %v1521 = vmul.f32 %v1515, 0.044715
        %v1522 = vmul.f32 %v1521, %v1515
        %v1523 = vmul.f32 %v1522, %v1515
        %v1524 = vadd.f32 %v1515, %v1523
        %v1525 = vmul.f32 %v1524, 0.7978846
        %v1526 = vtanh.pop %v1525
        %v1527 = vadd.f32 %v1526, 1.0
        %v1528 = vmul.f32 %v1520, %v1527
        %v1529 = vld [vmem:[%s19] sm:$0xf]
        %v1530 = vld [vmem:[%s19 + $0x4] sm:$0xf]
        %v1531 = vld [vmem:[%s19 + $0x8] sm:$0xf]
        %v1532 = vld [vmem:[%s19 + $0xc] sm:$0xf]
        %v1533 = vld [vmem:[%s19 + $0x10] sm:$0xf]
        %v1534 = vld [vmem:[%s19 + $0x14] sm:$0xf]
        %v1535 = vld [vmem:[%s19 + $0x18] sm:$0xf]
        %v1536 = vld [vmem:[%s19 + $0x1c] sm:$0xf]
        %v1537 = vld [vmem:[%s19 + $0x20] sm:$0xf]
        %v1538 = vld [vmem:[%s19 + $0x24] sm:$0xf]
        %v1539 = vld [vmem:[%s19 + $0x28] sm:$0xf]
        %v1540 = vld [vmem:[%s19 + $0x2c] sm:$0xf]
        %v1541 = vld [vmem:[%s19 + $0x30] sm:$0xf]
        %v1542 = vld [vmem:[%s19 + $0x34] sm:$0xf]
        %v1543 = vld [vmem:[%s19 + $0x38] sm:$0xf]
        %v1544 = vld [vmem:[%s19 + $0x3c] sm:$0xf]
        %v1545 = vld [vmem:[#allocation11] sm:$0x1]
        %v1546 = vld [vmem:[#allocation13] sm:$0x1]
        %v1547 = vld [vmem:[#allocation14] sm:$0x1]
        %v1548 = vpack.c.bf16 %v1528, %v1528
        %v1550 = vlaneseq
        %v1551 = vshrl.u32 %v1550, 7
        %v1552 = vsub.s32 0, %v1551
        %v1553 = vrot.slane %v1545, %v1552
        %v1571 = vunpack.c.l.b16 %v1529
        %v1572 = vunpack.c.l.b16 %v1530
        %v1573 = vunpack.c.l.b16 %v1531
        %v1574 = vunpack.c.l.b16 %v1532
        %v1575 = vunpack.c.l.b16 %v1533
        %v1576 = vunpack.c.l.b16 %v1534
        %v1577 = vunpack.c.l.b16 %v1535
        %v1578 = vunpack.c.l.b16 %v1536
        %v1579 = vunpack.c.l.b16 %v1537
        %v1580 = vunpack.c.l.b16 %v1538
        %v1581 = vunpack.c.l.b16 %v1539
        %v1582 = vunpack.c.l.b16 %v1540
        %v1583 = vunpack.c.l.b16 %v1541
        %v1584 = vunpack.c.l.b16 %v1542
        %v1585 = vunpack.c.l.b16 %v1543
        %v1586 = vunpack.c.l.b16 %v1544
        %v1587 = vpack.c.b16 %v1572, %v1571
        %v1588 = vpack.c.b16 %v1574, %v1573
        %v1589 = vpack.c.b16 %v1576, %v1575
        %v1590 = vpack.c.b16 %v1578, %v1577
        %v1591 = vpack.c.b16 %v1580, %v1579
        %v1592 = vpack.c.b16 %v1582, %v1581
        %v1593 = vpack.c.b16 %v1584, %v1583
        %v1594 = vpack.c.b16 %v1586, %v1585
        %1603 = vmatprep.subr.bf16.mxu0 0
        %1604 = vmatpush1.bf16.msra.mxu0 %v1587
        %1605 = vmatprep.subr.bf16.mxu0 0
        %1606 = vmatpush1.bf16.msra.mxu0 %v1588
        %1607 = vmatprep.subr.bf16.mxu0 0
        %1608 = vmatpush1.bf16.msra.mxu0 %v1589
        %1609 = vmatprep.subr.bf16.mxu0 0
        %1610 = vmatpush1.bf16.msra.mxu0 %v1590
        %1611 = vmatprep.subr.bf16.mxu0 0
        %1612 = vmatpush1.bf16.msra.mxu0 %v1591
        %1613 = vmatprep.subr.bf16.mxu0 0
        %1614 = vmatpush1.bf16.msra.mxu0 %v1592
        %1615 = vmatprep.subr.bf16.mxu0 0
        %1616 = vmatpush1.bf16.msra.mxu0 %v1593
        %1617 = vmatprep.subr.bf16.mxu0 0
        %1618 = vmatpush1.bf16.msra.mxu0 %v1594
        %1619 = vmatprep.subr.bf16.mxu0 0
        %1620 = vmatpush1.bf16.msra.mxu0 0
        %1621 = vmatprep.subr.bf16.mxu0 0
        %1622 = vmatpush1.bf16.msra.mxu0 0
        %1623 = vmatprep.subr.bf16.mxu0 0
        %1624 = vmatpush1.bf16.msra.mxu0 0
        %1625 = vmatprep.subr.bf16.mxu0 0
        %1626 = vmatpush1.bf16.msra.mxu0 0
        %1627 = vmatprep.subr.bf16.mxu0 0
        %1628 = vmatpush1.bf16.msra.mxu0 0
        %1629 = vmatprep.subr.bf16.mxu0 0
        %1630 = vmatpush1.bf16.msra.mxu0 0
        %1631 = vmatprep.subr.bf16.mxu0 0
        %1632 = vmatpush1.bf16.msra.mxu0 0
        %1633 = vmatprep.subr.bf16.mxu0 0
        %1634 = vmatpush1.bf16.msra.mxu0 0
        %1635 = vmatprep.mubr.bf16.mxu0 0
        %1636 = vmatmul.mubr.bf16.gmra.mrb[0].mxu0 %v1548
        %v1637 = vpop.f32.mrb[0].mxu0
        %v1638 = vadd.f32 %v1553, %v1637
        %v1639 = vpop.f32.mrb[0].mxu0
        %v1640 = vpop.f32.mrb[0].mxu0
        %v1641 = vpop.f32.mrb[0].mxu0
        %1642 = vdwg.mxu0
        %v1643 = vadd.f32 %v1452, %v1638
        %v1644 = vsel %vm1087, %v1643, 0.0
        %1645 = vadd.xlane.f32.xlu0 %v1644
        %v1646 = vpop.xlane.xlu0 %1645
        %v1647 = vmul.f32 %v1646, %v1428
        %v1648 = vsub.f32 %v1643, %v1647
        %v1649 = vmul.f32 %v1648, %v1648
        %v1650 = vsel %vm1087, %v1649, 0.0
        %1651 = vadd.xlane.f32.xlu0 %v1650
        %v1652 = vpop.xlane.xlu0 %1651
        %v1653 = vmul.f32 %v1652, %v1428
        %v1654 = vadd.f32 %v1653, 1e-12
        %v1655 = vrsqrt.pop %v1654
        %v1656 = vmul.f32 %v1648, %v1655
        %v1658 = vlaneseq
        %v1659 = vshrl.u32 %v1658, 7
        %v1660 = vsub.s32 0, %v1659
        %v1661 = vrot.slane %v1546, %v1660
        %v1663 = vmul.f32 %v1656, %v1661
        %v1665 = vlaneseq
        %v1666 = vshrl.u32 %v1665, 7
        %v1667 = vsub.s32 0, %v1666
        %v1668 = vrot.slane %v1547, %v1667
        %v1670 = vadd.f32 %v1663, %v1668
        %v1671 = vld [vmem:[%s27] sm:$0xf]
        %v1672 = vld [vmem:[%s27 + $0x4] sm:$0xf]
        %v1673 = vld [vmem:[%s27 + $0x8] sm:$0xf]
        %v1674 = vld [vmem:[%s27 + $0xc] sm:$0xf]
        %v1675 = vld [vmem:[%s29] sm:$0x1]
        %v1676 = vld [vmem:[%s31] sm:$0xf]
        %v1677 = vld [vmem:[%s31 + $0x4] sm:$0xf]
        %v1678 = vld [vmem:[%s31 + $0x8] sm:$0xf]
        %v1679 = vld [vmem:[%s31 + $0xc] sm:$0xf]
        %v1680 = vld [vmem:[%s33] sm:$0x1]
        %v1681 = vld [vmem:[%s35] sm:$0x1]
        %v1682 = vld [vmem:[%s37] sm:$0x1]
        %v1683 = vpack.c.bf16 %v1670, %v1670
        %v1685 = vlaneseq
        %v1686 = vshrl.u32 %v1685, 7
        %v1687 = vsub.s32 0, %v1686
        %v1688 = vrot.slane %v1675, %v1687
        %v1694 = vunpack.c.l.b16 %v1671
        %v1695 = vunpack.c.l.b16 %v1672
        %v1696 = vunpack.c.l.b16 %v1673
        %v1697 = vunpack.c.l.b16 %v1674
        %v1698 = vpack.c.b16 %v1695, %v1694
        %v1699 = vpack.c.b16 %v1697, %v1696
        %v1703 = vsel %vm1087, %v1683, 0
        %1705 = vmatprep.subr.bf16.mxu0 0
        %1706 = vmatpush1.bf16.msra.mxu0 %v1698
        %1707 = vmatprep.subr.bf16.mxu0 0
        %1708 = vmatpush1.bf16.msra.mxu0 %v1699
        %1709 = vmatprep.subr.bf16.mxu0 0
        %1710 = vmatpush1.bf16.msra.mxu0 0
        %1711 = vmatprep.subr.bf16.mxu0 0
        %1712 = vmatpush1.bf16.msra.mxu0 0
        %1713 = vmatprep.subr.bf16.mxu0 0
        %1714 = vmatpush1.bf16.msra.mxu0 0
        %1715 = vmatprep.subr.bf16.mxu0 0
        %1716 = vmatpush1.bf16.msra.mxu0 0
        %1717 = vmatprep.subr.bf16.mxu0 0
        %1718 = vmatpush1.bf16.msra.mxu0 0
        %1719 = vmatprep.subr.bf16.mxu0 0
        %1720 = vmatpush1.bf16.msra.mxu0 0
        %1721 = vmatprep.subr.bf16.mxu0 0
        %1722 = vmatpush1.bf16.msra.mxu0 0
        %1723 = vmatprep.subr.bf16.mxu0 0
        %1724 = vmatpush1.bf16.msra.mxu0 0
        %1725 = vmatprep.subr.bf16.mxu0 0
        %1726 = vmatpush1.bf16.msra.mxu0 0
        %1727 = vmatprep.subr.bf16.mxu0 0
        %1728 = vmatpush1.bf16.msra.mxu0 0
        %1729 = vmatprep.subr.bf16.mxu0 0
        %1730 = vmatpush1.bf16.msra.mxu0 0
        %1731 = vmatprep.subr.bf16.mxu0 0
        %1732 = vmatpush1.bf16.msra.mxu0 0
        %1733 = vmatprep.subr.bf16.mxu0 0
        %1734 = vmatpush1.bf16.msra.mxu0 0
        %1735 = vmatprep.subr.bf16.mxu0 0
        %1736 = vmatpush1.bf16.msra.mxu0 0
        %1737 = vmatprep.mubr.bf16.mxu0 0
        %1738 = vmatmul.mubr.bf16.gmra.mrb[0].mxu0 %v1703
        %v1739 = vpop.f32.mrb[0].mxu0
        %v1740 = vadd.f32 %v1688, %v1739
        %v1741 = vpop.f32.mrb[0].mxu0
        %v1742 = vpop.f32.mrb[0].mxu0
        %v1743 = vpop.f32.mrb[0].mxu0
        %1744 = vdwg.mxu0
        %v1745 = vmul.f32 %v1740, 0.25
        %v1746 = vpack.c.bf16 %v1745, %v1745
        %v1747 = vpack.c.bf16 %v1740, %v1740
        %1749 = vrot.lane.b32.xlu0 %v1747, 96
        %v1750 = vpop.permute.xlu0 %1749
        %v1752 = vsel %vm1137, %v1746, 0
        %v1755 = vsel %vm1137, %v1750, 0
        %1757 = vmatprep.subr.bf16.mxu0 0
        %1758 = vmatpush1.bf16.xpose.msra.mxu0 %v1755
        %1759 = vmatprep.subr.bf16.mxu0 0
        %1760 = vmatpush1.bf16.xpose.msra.mxu0 0
        %1761 = vmatprep.subr.bf16.mxu0 0
        %1762 = vmatpush1.bf16.xpose.msra.mxu0 0
        %1763 = vmatprep.subr.bf16.mxu0 0
        %1764 = vmatpush1.bf16.xpose.msra.mxu0 0
        %1765 = vmatprep.subr.bf16.mxu0 0
        %1766 = vmatpush1.bf16.xpose.msra.mxu0 0
        %1767 = vmatprep.subr.bf16.mxu0 0
        %1768 = vmatpush1.bf16.xpose.msra.mxu0 0
        %1769 = vmatprep.subr.bf16.mxu0 0
        %1770 = vmatpush1.bf16.xpose.msra.mxu0 0
        %1771 = vmatprep.subr.bf16.mxu0 0
        %1772 = vmatpush1.bf16.xpose.msra.mxu0 0
        %1773 = vmatprep.subr.bf16.mxu0 0
        %1774 = vmatpush1.bf16.xpose.msra.mxu0 0
        %1775 = vmatprep.subr.bf16.mxu0 0
        %1776 = vmatpush1.bf16.xpose.msra.mxu0 0
        %1777 = vmatprep.subr.bf16.mxu0 0
        %1778 = vmatpush1.bf16.xpose.msra.mxu0 0
        %1779 = vmatprep.subr.bf16.mxu0 0
        %1780 = vmatpush1.bf16.xpose.msra.mxu0 0
        %1781 = vmatprep.subr.bf16.mxu0 0
        %1782 = vmatpush1.bf16.xpose.msra.mxu0 0
        %1783 = vmatprep.subr.bf16.mxu0 0
        %1784 = vmatpush1.bf16.xpose.msra.mxu0 0
        %1785 = vmatprep.subr.bf16.mxu0 0
        %1786 = vmatpush1.bf16.xpose.msra.mxu0 0
        %1787 = vmatprep.subr.bf16.mxu0 0
        %1788 = vmatpush1.bf16.xpose.msra.mxu0 0
        %1789 = vmatprep.mubr.bf16.mxu0 0
        %1790 = vmatmul.mubr.bf16.gmra.mrb[0].mxu0 %v1752
        %v1791 = vpop.f32.mrb[0].mxu0
        %v1792 = vadd.f32 0.0, %v1791
        %v1793 = vpop.f32.mrb[0].mxu0
        %v1794 = vpop.f32.mrb[0].mxu0
        %v1795 = vpop.f32.mrb[0].mxu0
        %1796 = vdwg.mxu0
        %v1797 = vsel %vm1184, %v1792, -inf
        %1798 = vmax.xlane.f32.xlu0 %v1797
        %v1799 = vpop.xlane.xlu0 %1798
        %v1800 = vsub.f32 %v1792, %v1799
        %v1801 = vmul.f32 %v1800, 1.442695
        %v1802 = vpow.pop %v1801
        %v1803 = vsel %vm1184, %v1802, 0.0
        %1804 = vadd.xlane.f32.xlu0 %v1803
        %v1805 = vpop.xlane.xlu0 %1804
        %v1806 = vrcp.pop %v1805
        %v1807 = vmul.f32 %v1802, %v1806
        %v1808 = vpack.c.bf16 %v1807, %v1807
        %1809 = vrot.lane.b32.xlu0 %v1747, 64
        %v1810 = vpop.permute.xlu0 %1809
        %v1812 = vsel %vm1184, %v1808, 0
        %v1815 = vsel %vm1202, %v1810, 0
        %1817 = vmatprep.subr.bf16.mxu0 0
        %1818 = vmatpush1.bf16.msra.mxu0 %v1815
        %1819 = vmatprep.subr.bf16.mxu0 0
        %1820 = vmatpush1.bf16.msra.mxu0 0
        %1821 = vmatprep.subr.bf16.mxu0 0
        %1822 = vmatpush1.bf16.msra.mxu0 0
        %1823 = vmatprep.subr.bf16.mxu0 0
        %1824 = vmatpush1.bf16.msra.mxu0 0
        %1825 = vmatprep.subr.bf16.mxu0 0
        %1826 = vmatpush1.bf16.msra.mxu0 0
        %1827 = vmatprep.subr.bf16.mxu0 0
        %1828 = vmatpush1.bf16.msra.mxu0 0
        %1829 = vmatprep.subr.bf16.mxu0 0
        %1830 = vmatpush1.bf16.msra.mxu0 0
        %1831 = vmatprep.subr.bf16.mxu0 0
        %1832 = vmatpush1.bf16.msra.mxu0 0
        %1833 = vmatprep.subr.bf16.mxu0 0
        %1834 = vmatpush1.bf16.msra.mxu0 0
        %1835 = vmatprep.subr.bf16.mxu0 0
        %1836 = vmatpush1.bf16.msra.mxu0 0
        %1837 = vmatprep.subr.bf16.mxu0 0
        %1838 = vmatpush1.bf16.msra.mxu0 0
        %1839 = vmatprep.subr.bf16.mxu0 0
        %1840 = vmatpush1.bf16.msra.mxu0 0
        %1841 = vmatprep.subr.bf16.mxu0 0
        %1842 = vmatpush1.bf16.msra.mxu0 0
        %1843 = vmatprep.subr.bf16.mxu0 0
        %1844 = vmatpush1.bf16.msra.mxu0 0
        %1845 = vmatprep.subr.bf16.mxu0 0
        %1846 = vmatpush1.bf16.msra.mxu0 0
        %1847 = vmatprep.subr.bf16.mxu0 0
        %1848 = vmatpush1.bf16.msra.mxu0 0
        %1849 = vmatprep.mubr.bf16.mxu0 0
        %1850 = vmatmul.mubr.bf16.gmra.mrb[0].mxu0 %v1812
        %v1851 = vpop.f32.mrb[0].mxu0
        %v1852 = vadd.f32 0.0, %v1851
        %v1853 = vpop.f32.mrb[0].mxu0
        %v1854 = vpop.f32.mrb[0].mxu0
        %v1855 = vpop.f32.mrb[0].mxu0
        %1856 = vdwg.mxu0
        %1858 = vrot.lane.b32.xlu0 %v1746, 112
        %v1859 = vpop.permute.xlu0 %1858
        %1860 = vrot.lane.b32.xlu0 %v1747, 80
        %v1861 = vpop.permute.xlu0 %1860
        %v1863 = vsel %vm1137, %v1859, 0
        %v1866 = vsel %vm1137, %v1861, 0
        %1868 = vmatprep.subr.bf16.mxu0 0
        %1869 = vmatpush1.bf16.xpose.msra.mxu0 %v1866
        %1870 = vmatprep.subr.bf16.mxu0 0
        %1871 = vmatpush1.bf16.xpose.msra.mxu0 0
        %1872 = vmatprep.subr.bf16.mxu0 0
        %1873 = vmatpush1.bf16.xpose.msra.mxu0 0
        %1874 = vmatprep.subr.bf16.mxu0 0
        %1875 = vmatpush1.bf16.xpose.msra.mxu0 0
        %1876 = vmatprep.subr.bf16.mxu0 0
        %1877 = vmatpush1.bf16.xpose.msra.mxu0 0
        %1878 = vmatprep.subr.bf16.mxu0 0
        %1879 = vmatpush1.bf16.xpose.msra.mxu0 0
        %1880 = vmatprep.subr.bf16.mxu0 0
        %1881 = vmatpush1.bf16.xpose.msra.mxu0 0
        %1882 = vmatprep.subr.bf16.mxu0 0
        %1883 = vmatpush1.bf16.xpose.msra.mxu0 0
        %1884 = vmatprep.subr.bf16.mxu0 0
        %1885 = vmatpush1.bf16.xpose.msra.mxu0 0
        %1886 = vmatprep.subr.bf16.mxu0 0
        %1887 = vmatpush1.bf16.xpose.msra.mxu0 0
        %1888 = vmatprep.subr.bf16.mxu0 0
        %1889 = vmatpush1.bf16.xpose.msra.mxu0 0
        %1890 = vmatprep.subr.bf16.mxu0 0
        %1891 = vmatpush1.bf16.xpose.msra.mxu0 0
        %1892 = vmatprep.subr.bf16.mxu0 0
        %1893 = vmatpush1.bf16.xpose.msra.mxu0 0
        %1894 = vmatprep.subr.bf16.mxu0 0
        %1895 = vmatpush1.bf16.xpose.msra.mxu0 0
        %1896 = vmatprep.subr.bf16.mxu0 0
        %1897 = vmatpush1.bf16.xpose.msra.mxu0 0
        %1898 = vmatprep.subr.bf16.mxu0 0
        %1899 = vmatpush1.bf16.xpose.msra.mxu0 0
        %1900 = vmatprep.mubr.bf16.mxu0 0
        %1901 = vmatmul.mubr.bf16.gmra.mrb[0].mxu0 %v1863
        %v1902 = vpop.f32.mrb[0].mxu0
        %v1903 = vadd.f32 0.0, %v1902
        %v1904 = vpop.f32.mrb[0].mxu0
        %v1905 = vpop.f32.mrb[0].mxu0
        %v1906 = vpop.f32.mrb[0].mxu0
        %1907 = vdwg.mxu0
        %v1908 = vsel %vm1184, %v1903, -inf
        %1909 = vmax.xlane.f32.xlu0 %v1908
        %v1910 = vpop.xlane.xlu0 %1909
        %v1911 = vsub.f32 %v1903, %v1910
        %v1912 = vmul.f32 %v1911, 1.442695
        %v1913 = vpow.pop %v1912
        %v1914 = vsel %vm1184, %v1913, 0.0
        %1915 = vadd.xlane.f32.xlu0 %v1914
        %v1916 = vpop.xlane.xlu0 %1915
        %v1917 = vrcp.pop %v1916
        %v1918 = vmul.f32 %v1913, %v1917
        %v1919 = vpack.c.bf16 %v1918, %v1918
        %1920 = vrot.lane.b32.xlu0 %v1747, 48
        %v1921 = vpop.permute.xlu0 %1920
        %v1923 = vsel %vm1184, %v1919, 0
        %v1926 = vsel %vm1202, %v1921, 0
        %1928 = vmatprep.subr.bf16.mxu0 0
        %1929 = vmatpush1.bf16.msra.mxu0 %v1926
        %1930 = vmatprep.subr.bf16.mxu0 0
        %1931 = vmatpush1.bf16.msra.mxu0 0
        %1932 = vmatprep.subr.bf16.mxu0 0
        %1933 = vmatpush1.bf16.msra.mxu0 0
        %1934 = vmatprep.subr.bf16.mxu0 0
        %1935 = vmatpush1.bf16.msra.mxu0 0
        %1936 = vmatprep.subr.bf16.mxu0 0
        %1937 = vmatpush1.bf16.msra.mxu0 0
        %1938 = vmatprep.subr.bf16.mxu0 0
        %1939 = vmatpush1.bf16.msra.mxu0 0
        %1940 = vmatprep.subr.bf16.mxu0 0
        %1941 = vmatpush1.bf16.msra.mxu0 0
        %1942 = vmatprep.subr.bf16.mxu0 0
        %1943 = vmatpush1.bf16.msra.mxu0 0
        %1944 = vmatprep.subr.bf16.mxu0 0
        %1945 = vmatpush1.bf16.msra.mxu0 0
        %1946 = vmatprep.subr.bf16.mxu0 0
        %1947 = vmatpush1.bf16.msra.mxu0 0
        %1948 = vmatprep.subr.bf16.mxu0 0
        %1949 = vmatpush1.bf16.msra.mxu0 0
        %1950 = vmatprep.subr.bf16.mxu0 0
        %1951 = vmatpush1.bf16.msra.mxu0 0
        %1952 = vmatprep.subr.bf16.mxu0 0
        %1953 = vmatpush1.bf16.msra.mxu0 0
        %1954 = vmatprep.subr.bf16.mxu0 0
        %1955 = vmatpush1.bf16.msra.mxu0 0
        %1956 = vmatprep.subr.bf16.mxu0 0
        %1957 = vmatpush1.bf16.msra.mxu0 0
        %1958 = vmatprep.subr.bf16.mxu0 0
        %1959 = vmatpush1.bf16.msra.mxu0 0
        %1960 = vmatprep.mubr.bf16.mxu0 0
        %1961 = vmatmul.mubr.bf16.gmra.mrb[0].mxu0 %v1923
        %v1962 = vpop.f32.mrb[0].mxu0
        %v1963 = vadd.f32 0.0, %v1962
        %v1964 = vpop.f32.mrb[0].mxu0
        %v1965 = vpop.f32.mrb[0].mxu0
        %v1966 = vpop.f32.mrb[0].mxu0
        %1967 = vdwg.mxu0
        %1969 = vrot.lane.b32.xlu0 %v1963, 16
        %v1970 = vpop.permute.xlu0 %1969
        %v1972 = vsel %vm1137, %v1852, %v1970
        %v1973 = vpack.c.bf16 %v1972, %v1972
        %v1975 = vlaneseq
        %v1976 = vshrl.u32 %v1975, 7
        %v1977 = vsub.s32 0, %v1976
        %v1978 = vrot.slane %v1680, %v1977
        %v1984 = vunpack.c.l.b16 %v1676
        %v1985 = vunpack.c.l.b16 %v1677
        %v1986 = vunpack.c.l.b16 %v1678
        %v1987 = vunpack.c.l.b16 %v1679
        %v1988 = vpack.c.b16 %v1985, %v1984
        %v1989 = vpack.c.b16 %v1987, %v1986
        %v1993 = vsel %vm1087, %v1973, 0
        %1995 = vmatprep.subr.bf16.mxu0 0
        %1996 = vmatpush1.bf16.msra.mxu0 %v1988
        %1997 = vmatprep.subr.bf16.mxu0 0
        %1998 = vmatpush1.bf16.msra.mxu0 %v1989
        %1999 = vmatprep.subr.bf16.mxu0 0
        %2000 = vmatpush1.bf16.msra.mxu0 0
        %2001 = vmatprep.subr.bf16.mxu0 0
        %2002 = vmatpush1.bf16.msra.mxu0 0
        %2003 = vmatprep.subr.bf16.mxu0 0
        %2004 = vmatpush1.bf16.msra.mxu0 0
        %2005 = vmatprep.subr.bf16.mxu0 0
        %2006 = vmatpush1.bf16.msra.mxu0 0
        %2007 = vmatprep.subr.bf16.mxu0 0
        %2008 = vmatpush1.bf16.msra.mxu0 0
        %2009 = vmatprep.subr.bf16.mxu0 0
        %2010 = vmatpush1.bf16.msra.mxu0 0
        %2011 = vmatprep.subr.bf16.mxu0 0
        %2012 = vmatpush1.bf16.msra.mxu0 0
        %2013 = vmatprep.subr.bf16.mxu0 0
        %2014 = vmatpush1.bf16.msra.mxu0 0
        %2015 = vmatprep.subr.bf16.mxu0 0
        %2016 = vmatpush1.bf16.msra.mxu0 0
        %2017 = vmatprep.subr.bf16.mxu0 0
        %2018 = vmatpush1.bf16.msra.mxu0 0
        %2019 = vmatprep.subr.bf16.mxu0 0
        %2020 = vmatpush1.bf16.msra.mxu0 0
        %2021 = vmatprep.subr.bf16.mxu0 0
        %2022 = vmatpush1.bf16.msra.mxu0 0
        %2023 = vmatprep.subr.bf16.mxu0 0
        %2024 = vmatpush1.bf16.msra.mxu0 0
        %2025 = vmatprep.subr.bf16.mxu0 0
        %2026 = vmatpush1.bf16.msra.mxu0 0
        %2027 = vmatprep.mubr.bf16.mxu0 0
        %2028 = vmatmul.mubr.bf16.gmra.mrb[0].mxu0 %v1993
        %v2029 = vpop.f32.mrb[0].mxu0
        %v2030 = vadd.f32 %v1978, %v2029
        %v2031 = vpop.f32.mrb[0].mxu0
        %v2032 = vpop.f32.mrb[0].mxu0
        %v2033 = vpop.f32.mrb[0].mxu0
        %2034 = vdwg.mxu0
        %v2035 = vadd.f32 %v1670, %v2030
        %v2036 = vsel %vm1087, %v2035, 0.0
        %2037 = vadd.xlane.f32.xlu0 %v2036
        %v2038 = vpop.xlane.xlu0 %2037
        %v2039 = vmul.f32 %v2038, %v1428
        %v2040 = vsub.f32 %v2035, %v2039
        %v2041 = vmul.f32 %v2040, %v2040
        %v2042 = vsel %vm1087, %v2041, 0.0
        %2043 = vadd.xlane.f32.xlu0 %v2042
        %v2044 = vpop.xlane.xlu0 %2043
        %v2045 = vmul.f32 %v2044, %v1428
        %v2046 = vadd.f32 %v2045, 1e-12
        %v2047 = vrsqrt.pop %v2046
        %v2048 = vmul.f32 %v2040, %v2047
        %v2050 = vlaneseq
        %v2051 = vshrl.u32 %v2050, 7
        %v2052 = vsub.s32 0, %v2051
        %v2053 = vrot.slane %v1681, %v2052
        %v2055 = vmul.f32 %v2048, %v2053
        %v2057 = vlaneseq
        %v2058 = vshrl.u32 %v2057, 7
        %v2059 = vsub.s32 0, %v2058
        %v2060 = vrot.slane %v1682, %v2059
        %v2062 = vadd.f32 %v2055, %v2060
        %v2063 = vld [vmem:[%s39] sm:$0xf]
        %v2064 = vld [vmem:[%s39 + $0x4] sm:$0xf]
        %v2065 = vld [vmem:[%s39 + $0x8] sm:$0xf]
        %v2066 = vld [vmem:[%s39 + $0xc] sm:$0xf]
        %v2067 = vld [vmem:[%s41] sm:$0x1]
        %v2068 = vld [vmem:[%s43] sm:$0xff]
        %v2069 = vld [vmem:[%s43 + $0x8] sm:$0xf]
        %v2070 = vld [vmem:[%s43 + $0xc] sm:$0xff]
        %v2071 = vld [vmem:[%s43 + $0x14] sm:$0xf]
        %v2072 = vld [vmem:[%s43 + $0x18] sm:$0xff]
        %v2073 = vld [vmem:[%s43 + $0x20] sm:$0xf]
        %v2074 = vld [vmem:[%s43 + $0x24] sm:$0xff]
        %v2075 = vld [vmem:[%s43 + $0x2c] sm:$0xf]
        %v2076 = vld [vmem:[%s45] sm:$0x7]
        %v2077 = vpack.c.bf16 %v2062, %v2062
        %v2079 = vlaneseq
        %v2080 = vshrl.u32 %v2079, 7
        %v2081 = vsub.s32 0, %v2080
        %v2082 = vrot.slane %v2067, %v2081
        %v2088 = vunpack.c.l.b16 %v2063
        %v2089 = vunpack.c.l.b16 %v2064
        %v2090 = vunpack.c.l.b16 %v2065
        %v2091 = vunpack.c.l.b16 %v2066
        %v2092 = vpack.c.b16 %v2089, %v2088
        %v2093 = vpack.c.b16 %v2091, %v2090
        %v2097 = vsel %vm1087, %v2077, 0
        %2099 = vmatprep.subr.bf16.mxu0 0
        %2100 = vmatpush1.bf16.msra.mxu0 %v2092
        %2101 = vmatprep.subr.bf16.mxu0 0
        %2102 = vmatpush1.bf16.msra.mxu0 %v2093
        %2103 = vmatprep.subr.bf16.mxu0 0
        %2104 = vmatpush1.bf16.msra.mxu0 0
        %2105 = vmatprep.subr.bf16.mxu0 0
        %2106 = vmatpush1.bf16.msra.mxu0 0
        %2107 = vmatprep.subr.bf16.mxu0 0
        %2108 = vmatpush1.bf16.msra.mxu0 0
        %2109 = vmatprep.subr.bf16.mxu0 0
        %2110 = vmatpush1.bf16.msra.mxu0 0
        %2111 = vmatprep.subr.bf16.mxu0 0
        %2112 = vmatpush1.bf16.msra.mxu0 0
        %2113 = vmatprep.subr.bf16.mxu0 0
        %2114 = vmatpush1.bf16.msra.mxu0 0
        %2115 = vmatprep.subr.bf16.mxu0 0
        %2116 = vmatpush1.bf16.msra.mxu0 0
        %2117 = vmatprep.subr.bf16.mxu0 0
        %2118 = vmatpush1.bf16.msra.mxu0 0
        %2119 = vmatprep.subr.bf16.mxu0 0
        %2120 = vmatpush1.bf16.msra.mxu0 0
        %2121 = vmatprep.subr.bf16.mxu0 0
        %2122 = vmatpush1.bf16.msra.mxu0 0
        %2123 = vmatprep.subr.bf16.mxu0 0
        %2124 = vmatpush1.bf16.msra.mxu0 0
        %2125 = vmatprep.subr.bf16.mxu0 0
        %2126 = vmatpush1.bf16.msra.mxu0 0
        %2127 = vmatprep.subr.bf16.mxu0 0
        %2128 = vmatpush1.bf16.msra.mxu0 0
        %2129 = vmatprep.subr.bf16.mxu0 0
        %2130 = vmatpush1.bf16.msra.mxu0 0
        %2131 = vmatprep.mubr.bf16.mxu0 0
        %2132 = vmatmul.mubr.bf16.gmra.mrb[0].mxu0 %v2097
        %v2133 = vpop.f32.mrb[0].mxu0
        %v2134 = vadd.f32 %v2082, %v2133
        %v2135 = vpop.f32.mrb[0].mxu0
        %v2136 = vpop.f32.mrb[0].mxu0
        %v2137 = vpop.f32.mrb[0].mxu0
        %2138 = vdwg.mxu0
        %vm2139 = vcmask 15360
        %v2140 = vsel %vm2139, %v2134, -inf
        %2141 = vmax.xlane.f32.xlu0 %v2140
        %v2142 = vpop.xlane.xlu0 %2141
        %v2143 = vsub.f32 %v2134, %v2142
        %v2144 = vmul.f32 %v2143, 1.442695
        %v2145 = vpow.pop %v2144
        %v2146 = vsel %vm2139, %v2145, 0.0
        %2147 = vadd.xlane.f32.xlu0 %v2146
        %v2148 = vpop.xlane.xlu0 %2147
        %v2149 = vrcp.pop %v2148
        %v2150 = vmul.f32 %v2145, %v2149
        %v2152 = vlaneseq
        %v2153 = vshrl.u32 %v2152, 7
        %v2154 = vsub.s32 0, %v2153
        %v2155 = vrot.slane %v2076, %v2154
        %v2156 = vlaneseq
        %v2157 = vshrl.u32 %v2156, 7
        %v2158 = vsub.s32 1, %v2157
        %v2159 = vrot.slane %v2076, %v2158
        %v2160 = vlaneseq
        %v2161 = vshrl.u32 %v2160, 7
        %v2162 = vsub.s32 2, %v2161
        %v2163 = vrot.slane %v2076, %v2162
        %v2175 = vunpack.c.l.b16 %v2068
        %v2176 = vunpack.c.h.b16 %v2068
        %v2177 = vunpack.c.l.b16 %v2069
        %v2178 = vunpack.c.l.b16 %v2070
        %v2179 = vunpack.c.h.b16 %v2070
        %v2180 = vunpack.c.l.b16 %v2071
        %v2181 = vunpack.c.l.b16 %v2072
        %v2182 = vunpack.c.h.b16 %v2072
        %v2183 = vunpack.c.l.b16 %v2073
        %v2184 = vunpack.c.l.b16 %v2074
        %v2185 = vunpack.c.h.b16 %v2074
        %v2186 = vunpack.c.l.b16 %v2075
        %v2187 = vpack.c.b16 %v2178, %v2175
        %v2188 = vpack.c.b16 %v2179, %v2176
        %v2189 = vpack.c.b16 %v2180, %v2177
        %v2190 = vpack.c.b16 %v2184, %v2181
        %v2191 = vpack.c.b16 %v2185, %v2182
        %v2192 = vpack.c.b16 %v2186, %v2183
        %2199 = vmatprep.subr.bf16.mxu0 %v2188
        %2200 = vmatpush1.bf16.msra.mxu0 %v2187
        %2201 = vmatprep.subr.bf16.mxu0 %v2191
        %2202 = vmatpush1.bf16.msra.mxu0 %v2190
        %2203 = vmatprep.subr.bf16.mxu0 0
        %2204 = vmatpush1.bf16.msra.mxu0 0
        %2205 = vmatprep.subr.bf16.mxu0 0
        %2206 = vmatpush1.bf16.msra.mxu0 0
        %2207 = vmatprep.subr.bf16.mxu0 0
        %2208 = vmatpush1.bf16.msra.mxu0 0
        %2209 = vmatprep.subr.bf16.mxu0 0
        %2210 = vmatpush1.bf16.msra.mxu0 0
        %2211 = vmatprep.subr.bf16.mxu0 0
        %2212 = vmatpush1.bf16.msra.mxu0 0
        %2213 = vmatprep.subr.bf16.mxu0 0
        %2214 = vmatpush1.bf16.msra.mxu0 0
        %2215 = vmatprep.subr.bf16.mxu0 0
        %2216 = vmatpush1.bf16.msra.mxu0 0
        %2217 = vmatprep.subr.bf16.mxu0 0
        %2218 = vmatpush1.bf16.msra.mxu0 0
        %2219 = vmatprep.subr.bf16.mxu0 0
        %2220 = vmatpush1.bf16.msra.mxu0 0
        %2221 = vmatprep.subr.bf16.mxu0 0
        %2222 = vmatpush1.bf16.msra.mxu0 0
        %2223 = vmatprep.subr.bf16.mxu0 0
        %2224 = vmatpush1.bf16.msra.mxu0 0
        %2225 = vmatprep.subr.bf16.mxu0 0
        %2226 = vmatpush1.bf16.msra.mxu0 0
        %2227 = vmatprep.subr.bf16.mxu0 0
        %2228 = vmatpush1.bf16.msra.mxu0 0
        %2229 = vmatprep.subr.bf16.mxu0 0
        %2230 = vmatpush1.bf16.msra.mxu0 0
        %2231 = vmatprep.mubr.bf16.mxu0 0
        %2232 = vmatmul.mubr.bf16.gmra.mrb[0].mxu0 %v2097
        %v2233 = vpop.f32.mrb[0].mxu0
        %v2234 = vadd.f32 %v2155, %v2233
        %v2235 = vpop.f32.mrb[0].mxu0
        %v2236 = vadd.f32 %v2159, %v2235
        %v2237 = vpop.f32.mrb[0].mxu0
        %v2238 = vpop.f32.mrb[0].mxu0
        %2239 = vdwg.mxu0
        %2240 = vmatprep.subr.bf16.mxu0 0
        %2241 = vmatpush1.bf16.msra.mxu0 %v2189
        %2242 = vmatprep.subr.bf16.mxu0 0
        %2243 = vmatpush1.bf16.msra.mxu0 %v2192
        %2244 = vmatprep.subr.bf16.mxu0 0
        %2245 = vmatpush1.bf16.msra.mxu0 0
        %2246 = vmatprep.subr.bf16.mxu0 0
        %2247 = vmatpush1.bf16.msra.mxu0 0
        %2248 = vmatprep.subr.bf16.mxu0 0
        %2249 = vmatpush1.bf16.msra.mxu0 0
        %2250 = vmatprep.subr.bf16.mxu0 0
        %2251 = vmatpush1.bf16.msra.mxu0 0
        %2252 = vmatprep.subr.bf16.mxu0 0
        %2253 = vmatpush1.bf16.msra.mxu0 0
        %2254 = vmatprep.subr.bf16.mxu0 0
        %2255 = vmatpush1.bf16.msra.mxu0 0
        %2256 = vmatprep.subr.bf16.mxu0 0
        %2257 = vmatpush1.bf16.msra.mxu0 0
        %2258 = vmatprep.subr.bf16.mxu0 0
        %2259 = vmatpush1.bf16.msra.mxu0 0
        %2260 = vmatprep.subr.bf16.mxu0 0
        %2261 = vmatpush1.bf16.msra.mxu0 0
        %2262 = vmatprep.subr.bf16.mxu0 0
        %2263 = vmatpush1.bf16.msra.mxu0 0
        %2264 = vmatprep.subr.bf16.mxu0 0
        %2265 = vmatpush1.bf16.msra.mxu0 0
        %2266 = vmatprep.subr.bf16.mxu0 0
        %2267 = vmatpush1.bf16.msra.mxu0 0
        %2268 = vmatprep.subr.bf16.mxu0 0
        %2269 = vmatpush1.bf16.msra.mxu0 0
        %2270 = vmatprep.subr.bf16.mxu0 0
        %2271 = vmatpush1.bf16.msra.mxu0 0
        %2272 = vmatprep.mubr.bf16.mxu0 0
        %2273 = vmatmul.mubr.bf16.gmra.mrb[0].mxu0 %v2097
        %v2274 = vpop.f32.mrb[0].mxu0
        %v2275 = vadd.f32 %v2163, %v2274
        %v2276 = vpop.f32.mrb[0].mxu0
        %v2277 = vpop.f32.mrb[0].mxu0
        %v2278 = vpop.f32.mrb[0].mxu0
        %2279 = vdwg.mxu0
        %2281 = vset.pattern.permute.xlu0 0
        %2282 = vperm.xlu0 %2281, %v2150
        %v2283 = vpop.permute.xlu0 %2282
        %v2285 = vmul.f32 %v2283, %v2236
        %v2286 = vadd.f32 %v2234, %v2285
        %2287 = vset.pattern.permute.xlu0 1
        %2288 = vperm.xlu0 %2287, %v2150
        %v2289 = vpop.permute.xlu0 %2288
        %v2291 = vmul.f32 %v2289, %v2275
        %v2292 = vadd.f32 %v2286, %v2291
        %v2293 = vmul.f32 %v2292, 0.5
        %v2294 = vmul.f32 %v2292, 0.044715
        %v2295 = vmul.f32 %v2294, %v2292
        %v2296 = vmul.f32 %v2295, %v2292
        %v2297 = vadd.f32 %v2292, %v2296
        %v2298 = vmul.f32 %v2297, 0.7978846
        %v2299 = vtanh.pop %v2298
        %v2300 = vadd.f32 %v2299, 1.0
        %v2301 = vmul.f32 %v2293, %v2300
        %v2302 = vld [vmem:[%s47] sm:$0xf]
        %v2303 = vld [vmem:[%s47 + $0x4] sm:$0xf]
        %v2304 = vld [vmem:[%s47 + $0x8] sm:$0xf]
        %v2305 = vld [vmem:[%s47 + $0xc] sm:$0xf]
        %v2306 = vld [vmem:[%s47 + $0x10] sm:$0xf]
        %v2307 = vld [vmem:[%s47 + $0x14] sm:$0xf]
        %v2308 = vld [vmem:[%s47 + $0x18] sm:$0xf]
        %v2309 = vld [vmem:[%s47 + $0x1c] sm:$0xf]
        %v2310 = vld [vmem:[%s47 + $0x20] sm:$0xf]
        %v2311 = vld [vmem:[%s47 + $0x24] sm:$0xf]
        %v2312 = vld [vmem:[%s47 + $0x28] sm:$0xf]
        %v2313 = vld [vmem:[%s47 + $0x2c] sm:$0xf]
        %v2314 = vld [vmem:[%s47 + $0x30] sm:$0xf]
        %v2315 = vld [vmem:[%s47 + $0x34] sm:$0xf]
        %v2316 = vld [vmem:[%s47 + $0x38] sm:$0xf]
        %v2317 = vld [vmem:[%s47 + $0x3c] sm:$0xf]
        %v2318 = vld [vmem:[%s49] sm:$0x1]
        %v2319 = vld [vmem:[%s51] sm:$0x1]
        %v2320 = vld [vmem:[%s53] sm:$0x1]
        %v2321 = vpack.c.bf16 %v2301, %v2301
        %v2323 = vlaneseq
        %v2324 = vshrl.u32 %v2323, 7
        %v2325 = vsub.s32 0, %v2324
        %v2326 = vrot.slane %v2318, %v2325
        %v2344 = vunpack.c.l.b16 %v2302
        %v2345 = vunpack.c.l.b16 %v2303
        %v2346 = vunpack.c.l.b16 %v2304
        %v2347 = vunpack.c.l.b16 %v2305
        %v2348 = vunpack.c.l.b16 %v2306
        %v2349 = vunpack.c.l.b16 %v2307
        %v2350 = vunpack.c.l.b16 %v2308
        %v2351 = vunpack.c.l.b16 %v2309
        %v2352 = vunpack.c.l.b16 %v2310
        %v2353 = vunpack.c.l.b16 %v2311
        %v2354 = vunpack.c.l.b16 %v2312
        %v2355 = vunpack.c.l.b16 %v2313
        %v2356 = vunpack.c.l.b16 %v2314
        %v2357 = vunpack.c.l.b16 %v2315
        %v2358 = vunpack.c.l.b16 %v2316
        %v2359 = vunpack.c.l.b16 %v2317
        %v2360 = vpack.c.b16 %v2345, %v2344
        %v2361 = vpack.c.b16 %v2347, %v2346
        %v2362 = vpack.c.b16 %v2349, %v2348
        %v2363 = vpack.c.b16 %v2351, %v2350
        %v2364 = vpack.c.b16 %v2353, %v2352
        %v2365 = vpack.c.b16 %v2355, %v2354
        %v2366 = vpack.c.b16 %v2357, %v2356
        %v2367 = vpack.c.b16 %v2359, %v2358
        %2376 = vmatprep.subr.bf16.mxu0 0
        %2377 = vmatpush1.bf16.msra.mxu0 %v2360
        %2378 = vmatprep.subr.bf16.mxu0 0
        %2379 = vmatpush1.bf16.msra.mxu0 %v2361
        %2380 = vmatprep.subr.bf16.mxu0 0
        %2381 = vmatpush1.bf16.msra.mxu0 %v2362
        %2382 = vmatprep.subr.bf16.mxu0 0
        %2383 = vmatpush1.bf16.msra.mxu0 %v2363
        %2384 = vmatprep.subr.bf16.mxu0 0
        %2385 = vmatpush1.bf16.msra.mxu0 %v2364
        %2386 = vmatprep.subr.bf16.mxu0 0
        %2387 = vmatpush1.bf16.msra.mxu0 %v2365
        %2388 = vmatprep.subr.bf16.mxu0 0
        %2389 = vmatpush1.bf16.msra.mxu0 %v2366
        %2390 = vmatprep.subr.bf16.mxu0 0
        %2391 = vmatpush1.bf16.msra.mxu0 %v2367
        %2392 = vmatprep.subr.bf16.mxu0 0
        %2393 = vmatpush1.bf16.msra.mxu0 0
        %2394 = vmatprep.subr.bf16.mxu0 0
        %2395 = vmatpush1.bf16.msra.mxu0 0
        %2396 = vmatprep.subr.bf16.mxu0 0
        %2397 = vmatpush1.bf16.msra.mxu0 0
        %2398 = vmatprep.subr.bf16.mxu0 0
        %2399 = vmatpush1.bf16.msra.mxu0 0
        %2400 = vmatprep.subr.bf16.mxu0 0
        %2401 = vmatpush1.bf16.msra.mxu0 0
        %2402 = vmatprep.subr.bf16.mxu0 0
        %2403 = vmatpush1.bf16.msra.mxu0 0
        %2404 = vmatprep.subr.bf16.mxu0 0
        %2405 = vmatpush1.bf16.msra.mxu0 0
        %2406 = vmatprep.subr.bf16.mxu0 0
        %2407 = vmatpush1.bf16.msra.mxu0 0
        %2408 = vmatprep.mubr.bf16.mxu0 0
        %2409 = vmatmul.mubr.bf16.gmra.mrb[0].mxu0 %v2321
        %v2410 = vpop.f32.mrb[0].mxu0
        %v2411 = vadd.f32 %v2326, %v2410
        %v2412 = vpop.f32.mrb[0].mxu0
        %v2413 = vpop.f32.mrb[0].mxu0
        %v2414 = vpop.f32.mrb[0].mxu0
        %2415 = vdwg.mxu0
        %v2416 = vadd.f32 %v2062, %v2411
        %v2417 = vsel %vm1087, %v2416, 0.0
        %2418 = vadd.xlane.f32.xlu0 %v2417
        %v2419 = vpop.xlane.xlu0 %2418
        %v2420 = vmul.f32 %v2419, %v1428
        %v2421 = vsub.f32 %v2416, %v2420
        %v2422 = vmul.f32 %v2421, %v2421
        %v2423 = vsel %vm1087, %v2422, 0.0
        %2424 = vadd.xlane.f32.xlu0 %v2423
        %v2425 = vpop.xlane.xlu0 %2424
        %v2426 = vmul.f32 %v2425, %v1428
        %v2427 = vadd.f32 %v2426, 1e-12
        %v2428 = vrsqrt.pop %v2427
        %v2429 = vmul.f32 %v2421, %v2428
        %v2431 = vlaneseq
        %v2432 = vshrl.u32 %v2431, 7
        %v2433 = vsub.s32 0, %v2432
        %v2434 = vrot.slane %v2319, %v2433
        %v2436 = vmul.f32 %v2429, %v2434
        %v2438 = vlaneseq
        %v2439 = vshrl.u32 %v2438, 7
        %v2440 = vsub.s32 0, %v2439
        %v2441 = vrot.slane %v2320, %v2440
        %v2443 = vadd.f32 %v2436, %v2441
        %v2444 = vld [vmem:[%s55] sm:$0xf]
        %v2445 = vld [vmem:[%s55 + $0x4] sm:$0xf]
        %v2446 = vld [vmem:[%s55 + $0x8] sm:$0xf]
        %v2447 = vld [vmem:[%s55 + $0xc] sm:$0xf]
        %v2448 = vld [vmem:[%s57] sm:$0x1]
        %v2449 = vld [vmem:[%s59] sm:$0xf]
        %v2450 = vld [vmem:[%s59 + $0x4] sm:$0xf]
        %v2451 = vld [vmem:[%s59 + $0x8] sm:$0xf]
        %v2452 = vld [vmem:[%s59 + $0xc] sm:$0xf]
        %v2453 = vld [vmem:[%s61] sm:$0x1]
        %v2454 = vpack.c.bf16 %v2443, %v2443
        %v2459 = vunpack.c.l.b16 %v2444
        %v2460 = vunpack.c.l.b16 %v2445
        %v2461 = vunpack.c.l.b16 %v2446
        %v2462 = vunpack.c.l.b16 %v2447
        %v2463 = vpack.c.b16 %v2460, %v2459
        %v2464 = vpack.c.b16 %v2462, %v2461
        %v2468 = vsel %vm1087, %v2454, 0
        %2470 = vmatprep.subr.bf16.mxu0 0
        %2471 = vmatpush1.bf16.msra.mxu0 %v2463
        %2472 = vmatprep.subr.bf16.mxu0 0
        %2473 = vmatpush1.bf16.msra.mxu0 %v2464
        %2474 = vmatprep.subr.bf16.mxu0 0
        %2475 = vmatpush1.bf16.msra.mxu0 0
        %2476 = vmatprep.subr.bf16.mxu0 0
        %2477 = vmatpush1.bf16.msra.mxu0 0
        %2478 = vmatprep.subr.bf16.mxu0 0
        %2479 = vmatpush1.bf16.msra.mxu0 0
        %2480 = vmatprep.subr.bf16.mxu0 0
        %2481 = vmatpush1.bf16.msra.mxu0 0
        %2482 = vmatprep.subr.bf16.mxu0 0
        %2483 = vmatpush1.bf16.msra.mxu0 0
        %2484 = vmatprep.subr.bf16.mxu0 0
        %2485 = vmatpush1.bf16.msra.mxu0 0
        %2486 = vmatprep.subr.bf16.mxu0 0
        %2487 = vmatpush1.bf16.msra.mxu0 0
        %2488 = vmatprep.subr.bf16.mxu0 0
        %2489 = vmatpush1.bf16.msra.mxu0 0
        %2490 = vmatprep.subr.bf16.mxu0 0
        %2491 = vmatpush1.bf16.msra.mxu0 0
        %2492 = vmatprep.subr.bf16.mxu0 0
        %2493 = vmatpush1.bf16.msra.mxu0 0
        %2494 = vmatprep.subr.bf16.mxu0 0
        %2495 = vmatpush1.bf16.msra.mxu0 0
        %2496 = vmatprep.subr.bf16.mxu0 0
        %2497 = vmatpush1.bf16.msra.mxu0 0
        %2498 = vmatprep.subr.bf16.mxu0 0
        %2499 = vmatpush1.bf16.msra.mxu0 0
        %2500 = vmatprep.subr.bf16.mxu0 0
        %2501 = vmatpush1.bf16.msra.mxu0 0
        %2502 = vmatprep.mubr.bf16.mxu0 0
        %2503 = vmatmul.mubr.bf16.gmra.mrb[0].mxu0 %v2468
        %v2504 = vpop.f32.mrb[0].mxu0
        %v2505 = vadd.f32 %v2448, %v2504
        %v2506 = vpop.f32.mrb[0].mxu0
        %v2507 = vpop.f32.mrb[0].mxu0
        %v2508 = vpop.f32.mrb[0].mxu0
        %2509 = vdwg.mxu0
        %v2510 = vtanh.pop %v2505
        %v2511 = vpack.c.bf16 %v2510, %v2510
        %v2516 = vunpack.c.l.b16 %v2449
        %v2517 = vunpack.c.l.b16 %v2450
        %v2518 = vunpack.c.l.b16 %v2451
        %v2519 = vunpack.c.l.b16 %v2452
        %v2520 = vpack.c.b16 %v2517, %v2516
        %v2521 = vpack.c.b16 %v2519, %v2518
        %v2525 = vsel %vm1087, %v2511, 0
        %2527 = vmatprep.subr.bf16.mxu0 0
        %2528 = vmatpush1.bf16.msra.mxu0 %v2520
        %2529 = vmatprep.subr.bf16.mxu0 0
        %2530 = vmatpush1.bf16.msra.mxu0 %v2521
        %2531 = vmatprep.subr.bf16.mxu0 0
        %2532 = vmatpush1.bf16.msra.mxu0 0
        %2533 = vmatprep.subr.bf16.mxu0 0
        %2534 = vmatpush1.bf16.msra.mxu0 0
        %2535 = vmatprep.subr.bf16.mxu0 0
        %2536 = vmatpush1.bf16.msra.mxu0 0
        %2537 = vmatprep.subr.bf16.mxu0 0
        %2538 = vmatpush1.bf16.msra.mxu0 0
        %2539 = vmatprep.subr.bf16.mxu0 0
        %2540 = vmatpush1.bf16.msra.mxu0 0
        %2541 = vmatprep.subr.bf16.mxu0 0
        %2542 = vmatpush1.bf16.msra.mxu0 0
        %2543 = vmatprep.subr.bf16.mxu0 0
        %2544 = vmatpush1.bf16.msra.mxu0 0
        %2545 = vmatprep.subr.bf16.mxu0 0
        %2546 = vmatpush1.bf16.msra.mxu0 0
        %2547 = vmatprep.subr.bf16.mxu0 0
        %2548 = vmatpush1.bf16.msra.mxu0 0
        %2549 = vmatprep.subr.bf16.mxu0 0
        %2550 = vmatpush1.bf16.msra.mxu0 0
        %2551 = vmatprep.subr.bf16.mxu0 0
        %2552 = vmatpush1.bf16.msra.mxu0 0
        %2553 = vmatprep.subr.bf16.mxu0 0
        %2554 = vmatpush1.bf16.msra.mxu0 0
        %2555 = vmatprep.subr.bf16.mxu0 0
        %2556 = vmatpush1.bf16.msra.mxu0 0
        %2557 = vmatprep.subr.bf16.mxu0 0
        %2558 = vmatpush1.bf16.msra.mxu0 0
        %2559 = vmatprep.mubr.bf16.mxu0 0
        %2560 = vmatmul.mubr.bf16.gmra.mrb[0].mxu0 %v2525
        %v2561 = vpop.f32.mrb[0].mxu0
        %v2562 = vadd.f32 %v2453, %v2561
        %v2563 = vpop.f32.mrb[0].mxu0
        %v2564 = vpop.f32.mrb[0].mxu0
        %v2565 = vpop.f32.mrb[0].mxu0
        %2566 = vdwg.mxu0
        %2567 = vst [vmem:[%s1049] sm:$0x1] %v2562
        %s2568 = sand.u32 %s746, 1
        %s2569 = scalar_lea.sflag [#allocation4], %s2568
        %s2570 = sand.u32 %s746, 1
        %s2571 = scalar_lea.vmem [#allocation16], %s2570
        // Predicated region
        $region177: #{moebert_forward.1} parent=143 // pred_check
          %p2572 = pneg %p756
        $region178: #{moebert_forward.1} parent=143 // pred_check_branch
          %2574 = sbr.rel (%p2572) target = $region180
        $region179: #{moebert_forward.1} parent=143 // pred_region
          %s2576 = ssub.s32 16, 16
          %2577 = vsyncadd %s2569, %s2576
          %s2578 = smul.addr %s82, 16
          %s2579 = scalar_lea.hbm %s63, %s2578
          %s2581 = sshll.u32 %s2571, 4
          %s2582 = int_to_ptr.vmem [resolvable:$true] %s2581
          %2584 = dma.vmem_to_hbm [thread:$0]  %s2582, 16, %s2579, %s2569
        $region180: #{moebert_forward.1} parent=143 // pred_fallthru
          _
      $region144: #{moebert_forward.1} parent=5 // pred_fallthru
        _
      %p2585 = scmp.le.s32.totalorder 2, %s77
      // Predicated region
      $region181: #{moebert_forward.1} parent=5 // pred_check
        %p2586 = pneg %p2585
      $region182: #{moebert_forward.1} parent=5 // pred_check_branch
        %2588 = sbr.rel (%p2586) target = $region184
      $region183: #{moebert_forward.1} parent=5 // pred_region
        %s2589 = ssub.s32 %s77, 2
        // Predicated region
        $region185: #{moebert_forward.1} parent=183 // pred_check
          %p2590 = pneg %p762
        $region186: #{moebert_forward.1} parent=183 // pred_check_branch
          %2592 = sbr.rel (%p2590) target = $region188
        $region187: #{moebert_forward.1} parent=183 // pred_region
          %s2593 = sand.u32 %s747, 1
          %s2594 = scalar_lea.sflag [#allocation4], %s2593
          %s2595 = sand.u32 %s747, 1
          %s2596 = scalar_lea.vmem [#allocation16], %s2595
          %2597 = dma.done %s2594, 16
        $region188: #{moebert_forward.1} parent=183 // pred_fallthru
          _
      $region184: #{moebert_forward.1} parent=5 // pred_fallthru
        _
    $region6: #{moebert_forward.1} parent=1 // loop_footer
      %s81 = sadd.s32 1, %s77
    $region7: #{moebert_forward.1} parent=1 // loop_footer_branch
      %76 = sbr.rel target = $region3
    $region8: #{moebert_forward.1} parent=1 // loop_exit
      _
    %2598 = vsyncpa [#allocation3], 1
    %s2599 = scalar_lea.sflag [#allocation3], 1
    %2600 = vsyncpa %s2599, 1
    %2601 = vsyncpa [#allocation6], 1
    %2602 = vsyncpa [#allocation9], 1
    %2603 = vsyncpa [#allocation12], 1
    %2604 = vsyncpa [#allocation15], 1
    %2605 = vsyncpa [#allocation4], 1
    %s2606 = scalar_lea.sflag [#allocation4], 1
    %2607 = vsyncpa %s2606, 1

</llo_original>
